<compile_context>
chip_gen: v7x
topology: tpu7x:2x2x1
jax: 0.10.0
libtpu: 0.0.40
codegen_flags: <defaults>
</compile_context>

<pallas_src>
import numpy as np
import jax
import jax.numpy as jnp
from jax.experimental import pallas as pl
from jax.experimental.pallas import tpu as pltpu

CIN1_PAD = 8     # point-cloud channels padded 3 -> 8 (last dim == full array dim)
CIN2_PAD = 8     # proprio channels padded 6 -> 8
N_ACT = 52       # action dimension (net3 output)
NOUT_PAD = 128   # lane-dense output width (kernel writes 128 lanes, wrapper slices 52)

# packed parameter-vector row indices (head kernel)
(ROW_BA, ROW_GA, ROW_BTA, ROW_BB, ROW_GB, ROW_BTB,
 ROW_B3N, ROW_G3, ROW_BT3, ROW_BO, ROW_GO, ROW_BTO) = range(12)
VEC2_W = 512
VEC1_W = 1024


def _ceil_to(x, m):
    return ((x + m - 1) // m) * m


def _pack_rows(vectors, width):
    rows = [jnp.pad(jnp.asarray(v, jnp.float32), (0, width - v.shape[0]))
            for v in vectors]
    return jnp.stack(rows, axis=0)


# ----------------------------------------------------------------------------- kernels
def tnet_kernel(x1_ref, w1_ref, w2_ref, w3_ref, vec_ref, feat_ref):
    """Per-point MLP 3->64->128->1024 (BN folded) on a TN-point tile + running max."""
    f32, bf16 = jnp.float32, jnp.bfloat16

    pts = x1_ref[0]                                                        # (TN, 8) bf16
    h = jnp.dot(pts, w1_ref[...], preferred_element_type=f32) + vec_ref[0:1, :64]
    h = jnp.maximum(h, 0.0)
    h = jnp.dot(h.astype(bf16), w2_ref[...], preferred_element_type=f32) + vec_ref[1:2, :128]
    h = jnp.maximum(h, 0.0)
    h = jnp.dot(h.astype(bf16), w3_ref[...], preferred_element_type=f32) + vec_ref[2:3, :]
    h = jnp.maximum(h, 0.0)                                                # (TN, 1024) f32
    tile_max = jnp.max(h, axis=0, keepdims=True)                           # (1, 1024)

    # running max over the point tiles (inner, "arbitrary" grid axis);
    # output block is resident across that axis.
    @pl.when(pl.program_id(1) == 0)
    def _init():
        feat_ref[0] = tile_max

    @pl.when(pl.program_id(1) > 0)
    def _update():
        feat_ref[0] = jnp.maximum(feat_ref[0], tile_max)


def _layernorm(x, gamma, beta, eps=1e-5):
    mu = jnp.mean(x, axis=-1, keepdims=True)
    var = jnp.mean((x - mu) ** 2, axis=-1, keepdims=True)
    return (x - mu) * jax.lax.rsqrt(var + eps) * gamma + beta


def head_kernel(feat_ref, x2_ref, wa_ref, wb_ref, w3a_ref, w3b_ref, wo_ref,
                vec_ref, out_ref):
    """Vector branch + fusion head for a TB-row batch tile."""
    f32, bf16 = jnp.float32, jnp.bfloat16
    eps = 1e-5

    # ---- branch 2: Linear(6,128)+ReLU+LN(128)+Linear(128,200)+ReLU+LN(200)+ReLU
    h2 = jnp.dot(x2_ref[...], wa_ref[...], preferred_element_type=f32) \
        + vec_ref[ROW_BA:ROW_BA + 1, :128]
    h2 = jnp.maximum(h2, 0.0)
    h2 = _layernorm(h2, vec_ref[ROW_GA:ROW_GA + 1, :128],
                    vec_ref[ROW_BTA:ROW_BTA + 1, :128])
    h2 = jnp.dot(h2.astype(bf16), wb_ref[...], preferred_element_type=f32) \
        + vec_ref[ROW_BB:ROW_BB + 1, :200]
    h2 = jnp.maximum(h2, 0.0)
    h2 = _layernorm(h2, vec_ref[ROW_GB:ROW_GB + 1, :200],
                    vec_ref[ROW_BTB:ROW_BTB + 1, :200])
    h2 = jnp.maximum(h2, 0.0)                                              # (TB, 200)

    # ---- fusion: concat(1024,200) @ W expressed as split matmul (exact)
    h3 = (jnp.dot(feat_ref[...], w3a_ref[...], preferred_element_type=f32)
          + jnp.dot(h2.astype(bf16), w3b_ref[...], preferred_element_type=f32)
          + vec_ref[ROW_B3N:ROW_B3N + 1, :512])
    h3 = jnp.maximum(h3, 0.0)
    h3 = _layernorm(h3, vec_ref[ROW_G3:ROW_G3 + 1, :512],
                    vec_ref[ROW_BT3:ROW_BT3 + 1, :512])
    h3 = jnp.maximum(h3, 0.0)                                              # (TB, 512)

    # ---- head: lane-dense 128-wide output; LayerNorm statistics masked to the
    # real 52 elements (padded weight columns / biases / gammas are zero, so the
    # padded lanes stay exactly zero through tanh).
    y = jnp.dot(h3.astype(bf16), wo_ref[...], preferred_element_type=f32) \
        + vec_ref[ROW_BO:ROW_BO + 1, :128]                                 # (TB, 128)
    lane = jax.lax.broadcasted_iota(jnp.int32, y.shape, 1)
    mask = lane < N_ACT
    cnt = jnp.float32(N_ACT)
    mu = jnp.sum(jnp.where(mask, y, 0.0), axis=-1, keepdims=True) / cnt
    d = jnp.where(mask, y - mu, 0.0)
    var = jnp.sum(d * d, axis=-1, keepdims=True) / cnt
    yn = (y - mu) * jax.lax.rsqrt(var + eps) * vec_ref[ROW_GO:ROW_GO + 1, :128] \
        + vec_ref[ROW_BTO:ROW_BTO + 1, :128]
    out_ref[...] = jnp.tanh(yn)


# ----------------------------------------------------------------------------- params
def init_params(key):
    ks = iter(jax.random.split(key, 64))

    def dense(fan_in, fan_out):
        bound = 1.0 / np.sqrt(fan_in)
        w = jax.random.uniform(next(ks), (fan_in, fan_out), jnp.float32, -bound, bound)
        b = jax.random.uniform(next(ks), (fan_out,), jnp.float32, -bound, bound)
        return w, b

    def bn(c):
        gamma = 1.0 + 0.05 * jax.random.normal(next(ks), (c,), jnp.float32)
        beta = 0.05 * jax.random.normal(next(ks), (c,), jnp.float32)
        mean = 0.05 * jax.random.normal(next(ks), (c,), jnp.float32)
        var = 1.0 + 0.05 * jnp.abs(jax.random.normal(next(ks), (c,), jnp.float32))
        return gamma, beta, mean, var

    p = {}
    # T_Net: 1x1 Conv1d(3,64), (64,128), (128,1024) == dense over channels
    p["w1"], p["b1"] = dense(3, 64);     p["bn1"] = bn(64)
    p["w2"], p["b2"] = dense(64, 128);   p["bn2"] = bn(128)
    p["w3"], p["b3"] = dense(128, 1024); p["bn3"] = bn(1024)
    # branch_net2
    p["wa"], p["ba"] = dense(6, 128)
    p["ga"], p["bta"] = jnp.ones((128,), jnp.float32), jnp.zeros((128,), jnp.float32)
    p["wb"], p["bb"] = dense(128, 200)
    p["gb"], p["btb"] = jnp.ones((200,), jnp.float32), jnp.zeros((200,), jnp.float32)
    # net3
    p["w3n"], p["b3n"] = dense(1224, 512)
    p["g3"], p["bt3"] = jnp.ones((512,), jnp.float32), jnp.zeros((512,), jnp.float32)
    p["wo"], p["bo"] = dense(512, N_ACT)
    p["go"], p["bto"] = jnp.ones((N_ACT,), jnp.float32), jnp.zeros((N_ACT,), jnp.float32)
    return p


def fold_bn(w, b, bn_params, eps=1e-5):
    gamma, beta, mean, var = bn_params
    scale = gamma / jnp.sqrt(var + eps)
    return w * scale[None, :], (b - mean) * scale + beta


# ----------------------------------------------------------------------------- wrapper
def actor_multimodal_forward(x1, x2, params):
    """x1: (B, N, 3) point cloud, x2: (B, 6) proprio vector -> (B, 52) action."""
    f32, bf16 = jnp.float32, jnp.bfloat16
    B, N, _ = x1.shape
    x1 = x1.astype(f32)
    x2 = x2.astype(f32)

    # ---- fold eval-mode BatchNorm into the 1x1-conv weights, quantize weights to bf16
    wc1, bc1 = fold_bn(params["w1"], params["b1"], params["bn1"])
    wc2, bc2 = fold_bn(params["w2"], params["b2"], params["bn2"])
    wc3, bc3 = fold_bn(params["w3"], params["b3"], params["bn3"])

    w1q = jnp.pad(wc1, ((0, CIN1_PAD - 3), (0, 0))).astype(bf16)           # (8, 64)
    w2q = wc2.astype(bf16)                                                 # (64, 128)
    w3q = wc3.astype(bf16)                                                 # (128, 1024)
    vec1 = _pack_rows([bc1, bc2, bc3], VEC1_W)                             # (3, 1024) f32

    # ---- point-axis tiling (reduction axis of the max)
    TN_MAX = 512
    N8 = _ceil_to(N, 8)
    TN = min(TN_MAX, N8)
    N_pad = _ceil_to(N8, TN)
    num_n = N_pad // TN

    x1p = jnp.pad(x1, ((0, 0), (0, 0), (0, CIN1_PAD - 3)))                 # zeros: exact
    if N_pad > N:
        # replicate the last point: exact for the subsequent max-pool
        x1p = jnp.pad(x1p, ((0, 0), (0, N_pad - N), (0, 0)), mode="edge")
    x1p = x1p.astype(bf16)                                                 # (B, N_pad, 8)

    feat3 = pl.pallas_call(
        tnet_kernel,
        out_shape=jax.ShapeDtypeStruct((B, 1, 1024), f32),
        grid=(B, num_n),
        in_specs=[
            pl.BlockSpec((1, TN, CIN1_PAD), lambda b, n: (b, n, 0)),
            pl.BlockSpec((CIN1_PAD, 64), lambda b, n: (0, 0)),
            pl.BlockSpec((64, 128), lambda b, n: (0, 0)),
            pl.BlockSpec((128, 1024), lambda b, n: (0, 0)),
            pl.BlockSpec((3, VEC1_W), lambda b, n: (0, 0)),
        ],
        out_specs=pl.BlockSpec((1, 1, 1024), lambda b, n: (b, 0, 0)),
        compiler_params=pltpu.CompilerParams(
            dimension_semantics=("parallel", "arbitrary"),
            vmem_limit_bytes=24 * 1024 * 1024,
        ),
    )(x1p, w1q, w2q, w3q, vec1)
    feat = feat3[:, 0, :]                                                  # (B, 1024) f32

    # ---- batch-axis tiling for the head (>=2 parallel tiles when B is large enough)
    TB_MAX = 256
    if B > TB_MAX:
        TB = TB_MAX
    elif B >= 16:
        TB = _ceil_to(B, 16) // 2
    else:
        TB = B
    B_pad = _ceil_to(B, TB)
    num_b = B_pad // TB

    featp = jnp.pad(feat, ((0, B_pad - B), (0, 0))).astype(bf16)           # (B_pad, 1024)
    x2p = jnp.pad(x2, ((0, B_pad - B), (0, CIN2_PAD - 6))).astype(bf16)    # (B_pad, 8)

    waq = jnp.pad(params["wa"], ((0, CIN2_PAD - 6), (0, 0))).astype(bf16)  # (8, 128)
    wbq = params["wb"].astype(bf16)                                        # (128, 200)
    w3aq = params["w3n"][:1024].astype(bf16)                               # (1024, 512)
    w3bq = params["w3n"][1024:].astype(bf16)                               # (200, 512)
    woq = jnp.pad(params["wo"], ((0, 0), (0, NOUT_PAD - N_ACT))).astype(bf16)  # (512, 128)

    vec2 = _pack_rows([
        params["ba"], params["ga"], params["bta"],
        params["bb"], params["gb"], params["btb"],
        params["b3n"], params["g3"], params["bt3"],
        jnp.pad(params["bo"], (0, NOUT_PAD - N_ACT)),
        jnp.pad(params["go"], (0, NOUT_PAD - N_ACT)),
        jnp.pad(params["bto"], (0, NOUT_PAD - N_ACT)),
    ], VEC2_W)                                                             # (12, 512) f32

    out = pl.pallas_call(
        head_kernel,
        out_shape=jax.ShapeDtypeStruct((B_pad, NOUT_PAD), f32),
        grid=(num_b,),
        in_specs=[
            pl.BlockSpec((TB, 1024), lambda i: (i, 0)),
            pl.BlockSpec((TB, CIN2_PAD), lambda i: (i, 0)),
            pl.BlockSpec((CIN2_PAD, 128), lambda i: (0, 0)),
            pl.BlockSpec((128, 200), lambda i: (0, 0)),
            pl.BlockSpec((1024, 512), lambda i: (0, 0)),
            pl.BlockSpec((200, 512), lambda i: (0, 0)),
            pl.BlockSpec((512, NOUT_PAD), lambda i: (0, 0)),
            pl.BlockSpec((12, VEC2_W), lambda i: (0, 0)),
        ],
        out_specs=pl.BlockSpec((TB, NOUT_PAD), lambda i: (i, 0)),
        compiler_params=pltpu.CompilerParams(
            dimension_semantics=("parallel",),
            vmem_limit_bytes=16 * 1024 * 1024,
        ),
    )(featp, x2p, waq, wbq, w3aq, w3bq, woq, vec2)

    return out[:B, :N_ACT]


# ----------------------------------------------------------------------------- reference
def reference_forward(x1, x2, params):
    """Pure-JAX reference with the same bf16 matmul-operand rounding as the kernel."""
    f32, bf16 = jnp.float32, jnp.bfloat16

    def qdot(a, b):
        return jnp.dot(a.astype(bf16), b.astype(bf16), preferred_element_type=f32)

    def ln(x, g, b, eps=1e-5):
        mu = x.mean(-1, keepdims=True)
        var = ((x - mu) ** 2).mean(-1, keepdims=True)
        return (x - mu) * jax.lax.rsqrt(var + eps) * g + b

    w1, b1 = fold_bn(params["w1"], params["b1"], params["bn1"])
    w2, b2 = fold_bn(params["w2"], params["b2"], params["bn2"])
    w3, b3 = fold_bn(params["w3"], params["b3"], params["bn3"])

    h = jnp.maximum(qdot(x1, w1) + b1, 0)
    h = jnp.maximum(qdot(h, w2) + b2, 0)
    h = jnp.maximum(qdot(h, w3) + b3, 0)
    f1 = h.max(axis=1)                                                     # (B, 1024)

    h2 = jnp.maximum(qdot(x2, params["wa"]) + params["ba"], 0)
    h2 = ln(h2, params["ga"], params["bta"])
    h2 = jnp.maximum(qdot(h2, params["wb"]) + params["bb"], 0)
    h2 = ln(h2, params["gb"], params["btb"])
    h2 = jnp.maximum(h2, 0)

    cat = jnp.concatenate([f1, h2], axis=1)                                # (B, 1224)
    h3 = jnp.maximum(qdot(cat, params["w3n"]) + params["b3n"], 0)
    h3 = ln(h3, params["g3"], params["bt3"])
    h3 = jnp.maximum(h3, 0)
    y = qdot(h3, params["wo"]) + params["bo"]
    y = ln(y, params["go"], params["bto"])
    return jnp.tanh(y)


# ----------------------------------------------------------------------------- main
if __name__ == "__main__":
    B, N = 2, 16  # batch, number of points
    key = jax.random.PRNGKey(0)
    k1, k2, kp = jax.random.split(key, 3)
    x1 = jax.random.normal(k1, (B, N, 3), jnp.float32)   # point cloud (B, N, 3)
    x2 = jax.random.normal(k2, (B, 6), jnp.float32)      # proprio vector (B, 6)
    params = init_params(kp)

    out = jax.jit(actor_multimodal_forward)(x1, x2, params)
    out = jax.block_until_ready(out)
    assert out.shape == (B, N_ACT), out.shape

    ref = reference_forward(x1, x2, params)
    np.testing.assert_allclose(np.asarray(out), np.asarray(ref), rtol=2e-3, atol=2e-3)
    print("KERNEL_OK")
</pallas_src>

<mosaic_0001>
module attributes {stable_mosaic.version = 11 : i64} {
  func.func @tnet_kernel(%arg0: i32, %arg1: i32, %arg2: memref<1x16x8xbf16, #tpu.memory_space<vmem>>, %arg3: memref<8x64xbf16, #tpu.memory_space<vmem>>, %arg4: memref<64x128xbf16, #tpu.memory_space<vmem>>, %arg5: memref<128x1024xbf16, #tpu.memory_space<vmem>>, %arg6: memref<3x1024xf32, #tpu.memory_space<vmem>>, %arg7: memref<1x1x1024xf32, #tpu.memory_space<vmem>>) attributes {dimension_semantics = [#tpu.dimension_semantics<parallel>, #tpu.dimension_semantics<arbitrary>], iteration_bounds = array<i64: 2, 1>, scalar_prefetch = 0 : i64, scratch_operands = 0 : i64, tpu.core_type = #tpu.core_type<tc>, window_params = [{transform_indices = @transform_0, window_bounds = array<i64: 1, 16, 8>}, {pipeline_mode = #tpu.pipeline_mode<synchronous>, transform_indices = @transform_1, window_bounds = array<i64: 8, 64>}, {pipeline_mode = #tpu.pipeline_mode<synchronous>, transform_indices = @transform_2, window_bounds = array<i64: 64, 128>}, {pipeline_mode = #tpu.pipeline_mode<synchronous>, transform_indices = @transform_3, window_bounds = array<i64: 128, 1024>}, {pipeline_mode = #tpu.pipeline_mode<synchronous>, transform_indices = @transform_4, window_bounds = array<i64: 3, 1024>}, {transform_indices = @transform_5, window_bounds = array<i64: 1, 1, 1024>}]} {
    %c0 = arith.constant 0 : index
    %c0_0 = arith.constant 0 : index
    %c0_1 = arith.constant 0 : index
    %0 = vector.load %arg2[%c0, %c0_0, %c0_1] : memref<1x16x8xbf16, #tpu.memory_space<vmem>>, vector<1x16x8xbf16>
    %1 = vector.shape_cast %0 : vector<1x16x8xbf16> to vector<16x8xbf16>
    %c0_2 = arith.constant 0 : index
    %c0_3 = arith.constant 0 : index
    %2 = vector.load %arg3[%c0_2, %c0_3] : memref<8x64xbf16, #tpu.memory_space<vmem>>, vector<8x64xbf16>
    %cst = arith.constant dense<0.000000e+00> : vector<16x64xf32>
    %3 = tpu.matmul %1, %2, %cst {dimension_numbers = #tpu.dot_dimension_numbers<[1], [0], [0], [1], [0, 0, 1, 1], [], []>} : vector<16x8xbf16>, vector<8x64xbf16>, vector<16x64xf32> -> vector<16x64xf32>
    %c0_4 = arith.constant 0 : index
    %c0_5 = arith.constant 0 : index
    %4 = vector.load %arg6[%c0_4, %c0_5] : memref<3x1024xf32, #tpu.memory_space<vmem>>, vector<1x64xf32>
    %5 = vector.broadcast %4 : vector<1x64xf32> to vector<16x64xf32>
    %6 = arith.addf %3, %5 : vector<16x64xf32>
    %cst_6 = arith.constant 0.000000e+00 : f32
    %7 = vector.broadcast %cst_6 : f32 to vector<16x64xf32>
    %8 = arith.maximumf %6, %7 : vector<16x64xf32>
    %9 = arith.truncf %8 : vector<16x64xf32> to vector<16x64xbf16>
    %c0_7 = arith.constant 0 : index
    %c0_8 = arith.constant 0 : index
    %10 = vector.load %arg4[%c0_7, %c0_8] : memref<64x128xbf16, #tpu.memory_space<vmem>>, vector<64x128xbf16>
    %cst_9 = arith.constant dense<0.000000e+00> : vector<16x128xf32>
    %11 = tpu.matmul %9, %10, %cst_9 {dimension_numbers = #tpu.dot_dimension_numbers<[1], [0], [0], [1], [0, 0, 1, 1], [], []>} : vector<16x64xbf16>, vector<64x128xbf16>, vector<16x128xf32> -> vector<16x128xf32>
    %c1 = arith.constant 1 : index
    %c0_10 = arith.constant 0 : index
    %12 = vector.load %arg6[%c1, %c0_10] : memref<3x1024xf32, #tpu.memory_space<vmem>>, vector<1x128xf32>
    %13 = vector.broadcast %12 : vector<1x128xf32> to vector<16x128xf32>
    %14 = arith.addf %11, %13 : vector<16x128xf32>
    %cst_11 = arith.constant 0.000000e+00 : f32
    %15 = vector.broadcast %cst_11 : f32 to vector<16x128xf32>
    %16 = arith.maximumf %14, %15 : vector<16x128xf32>
    %17 = arith.truncf %16 : vector<16x128xf32> to vector<16x128xbf16>
    %c0_12 = arith.constant 0 : index
    %c0_13 = arith.constant 0 : index
    %18 = vector.load %arg5[%c0_12, %c0_13] : memref<128x1024xbf16, #tpu.memory_space<vmem>>, vector<128x1024xbf16>
    %cst_14 = arith.constant dense<0.000000e+00> : vector<16x1024xf32>
    %19 = tpu.matmul %17, %18, %cst_14 {dimension_numbers = #tpu.dot_dimension_numbers<[1], [0], [0], [1], [0, 0, 1, 1], [], []>} : vector<16x128xbf16>, vector<128x1024xbf16>, vector<16x1024xf32> -> vector<16x1024xf32>
    %c2 = arith.constant 2 : index
    %c0_15 = arith.constant 0 : index
    %20 = vector.load %arg6[%c2, %c0_15] : memref<3x1024xf32, #tpu.memory_space<vmem>>, vector<1x1024xf32>
    %21 = vector.broadcast %20 : vector<1x1024xf32> to vector<16x1024xf32>
    %22 = arith.addf %19, %21 : vector<16x1024xf32>
    %cst_16 = arith.constant 0.000000e+00 : f32
    %23 = vector.broadcast %cst_16 : f32 to vector<16x1024xf32>
    %24 = arith.maximumf %22, %23 : vector<16x1024xf32>
    %cst_17 = arith.constant dense<0xFF800000> : vector<1024xf32>
    %25 = vector.multi_reduction <maximumf>, %24, %cst_17 [0] : vector<16x1024xf32> to vector<1024xf32>
    %26 = vector.shape_cast %25 : vector<1024xf32> to vector<1x1024xf32>
    %c0_i32 = arith.constant 0 : i32
    %27 = arith.cmpi eq, %arg1, %c0_i32 : i32
    %28 = arith.extui %27 : i1 to i32
    %c0_i32_18 = arith.constant 0 : i32
    %29 = arith.cmpi ne, %28, %c0_i32_18 : i32
    scf.if %29 {
      %c0_21 = arith.constant 0 : index
      %c0_22 = arith.constant 0 : index
      %c0_23 = arith.constant 0 : index
      %33 = vector.load %arg7[%c0_21, %c0_22, %c0_23] : memref<1x1x1024xf32, #tpu.memory_space<vmem>>, vector<1x1x1024xf32>
      %34 = vector.shape_cast %33 : vector<1x1x1024xf32> to vector<1x1024xf32>
      %35 = vector.shape_cast %26 : vector<1x1024xf32> to vector<1x1x1024xf32>
      tpu.vector_store %arg7[%c0_21, %c0_22, %c0_23], %35 {strides = array<i32>} : memref<1x1x1024xf32, #tpu.memory_space<vmem>>, vector<1x1x1024xf32>,
    } else {
    }
    %c0_i32_19 = arith.constant 0 : i32
    %30 = arith.cmpi sgt, %arg1, %c0_i32_19 : i32
    %31 = arith.extui %30 : i1 to i32
    %c0_i32_20 = arith.constant 0 : i32
    %32 = arith.cmpi ne, %31, %c0_i32_20 : i32
    scf.if %32 {
      %c0_21 = arith.constant 0 : index
      %c0_22 = arith.constant 0 : index
      %c0_23 = arith.constant 0 : index
      %33 = vector.load %arg7[%c0_21, %c0_22, %c0_23] : memref<1x1x1024xf32, #tpu.memory_space<vmem>>, vector<1x1x1024xf32>
      %34 = vector.shape_cast %33 : vector<1x1x1024xf32> to vector<1x1024xf32>
      %35 = arith.maximumf %34, %26 : vector<1x1024xf32>
      %c0_24 = arith.constant 0 : index
      %c0_25 = arith.constant 0 : index
      %c0_26 = arith.constant 0 : index
      %36 = vector.load %arg7[%c0_24, %c0_25, %c0_26] : memref<1x1x1024xf32, #tpu.memory_space<vmem>>, vector<1x1x1024xf32>
      %37 = vector.shape_cast %36 : vector<1x1x1024xf32> to vector<1x1024xf32>
      %38 = vector.shape_cast %35 : vector<1x1024xf32> to vector<1x1x1024xf32>
      tpu.vector_store %arg7[%c0_24, %c0_25, %c0_26], %38 {strides = array<i32>} : memref<1x1x1024xf32, #tpu.memory_space<vmem>>, vector<1x1x1024xf32>,
    } else {
    }
    return
  }
  func.func @transform_0(%arg0: i32, %arg1: i32) -> (i32, i32, i32) {
    %c0_i32 = arith.constant 0 : i32
    %c0_i32_0 = arith.constant 0 : i32
    return %arg0, %arg1, %c0_i32 : i32, i32, i32
  }
  func.func @transform_1(%arg0: i32, %arg1: i32) -> (i32, i32) {
    %c0_i32 = arith.constant 0 : i32
    %c0_i32_0 = arith.constant 0 : i32
    %c0_i32_1 = arith.constant 0 : i32
    return %c0_i32, %c0_i32_0 : i32, i32
  }
  func.func @transform_2(%arg0: i32, %arg1: i32) -> (i32, i32) {
    %c0_i32 = arith.constant 0 : i32
    %c0_i32_0 = arith.constant 0 : i32
    %c0_i32_1 = arith.constant 0 : i32
    return %c0_i32, %c0_i32_0 : i32, i32
  }
  func.func @transform_3(%arg0: i32, %arg1: i32) -> (i32, i32) {
    %c0_i32 = arith.constant 0 : i32
    %c0_i32_0 = arith.constant 0 : i32
    %c0_i32_1 = arith.constant 0 : i32
    return %c0_i32, %c0_i32_0 : i32, i32
  }
  func.func @transform_4(%arg0: i32, %arg1: i32) -> (i32, i32) {
    %c0_i32 = arith.constant 0 : i32
    %c0_i32_0 = arith.constant 0 : i32
    %c0_i32_1 = arith.constant 0 : i32
    return %c0_i32, %c0_i32_0 : i32, i32
  }
  func.func @transform_5(%arg0: i32, %arg1: i32) -> (i32, i32, i32) {
    %c0_i32 = arith.constant 0 : i32
    %c0_i32_0 = arith.constant 0 : i32
    %c0_i32_1 = arith.constant 0 : i32
    return %arg0, %c0_i32, %c0_i32_0 : i32, i32, i32
  }
}

module attributes {stable_mosaic.version = 11 : i64} {
  func.func @head_kernel(%arg0: i32, %arg1: memref<2x1024xbf16, #tpu.memory_space<vmem>>, %arg2: memref<2x8xbf16, #tpu.memory_space<vmem>>, %arg3: memref<8x128xbf16, #tpu.memory_space<vmem>>, %arg4: memref<128x200xbf16, #tpu.memory_space<vmem>>, %arg5: memref<1024x512xbf16, #tpu.memory_space<vmem>>, %arg6: memref<200x512xbf16, #tpu.memory_space<vmem>>, %arg7: memref<512x128xbf16, #tpu.memory_space<vmem>>, %arg8: memref<12x512xf32, #tpu.memory_space<vmem>>, %arg9: memref<2x128xf32, #tpu.memory_space<vmem>>) attributes {dimension_semantics = [#tpu.dimension_semantics<parallel>], iteration_bounds = array<i64: 1>, scalar_prefetch = 0 : i64, scratch_operands = 0 : i64, tpu.core_type = #tpu.core_type<tc>, window_params = [{transform_indices = @transform_0, window_bounds = array<i64: 2, 1024>}, {transform_indices = @transform_1, window_bounds = array<i64: 2, 8>}, {pipeline_mode = #tpu.pipeline_mode<synchronous>, transform_indices = @transform_2, window_bounds = array<i64: 8, 128>}, {pipeline_mode = #tpu.pipeline_mode<synchronous>, transform_indices = @transform_3, window_bounds = array<i64: 128, 200>}, {pipeline_mode = #tpu.pipeline_mode<synchronous>, transform_indices = @transform_4, window_bounds = array<i64: 1024, 512>}, {pipeline_mode = #tpu.pipeline_mode<synchronous>, transform_indices = @transform_5, window_bounds = array<i64: 200, 512>}, {pipeline_mode = #tpu.pipeline_mode<synchronous>, transform_indices = @transform_6, window_bounds = array<i64: 512, 128>}, {pipeline_mode = #tpu.pipeline_mode<synchronous>, transform_indices = @transform_7, window_bounds = array<i64: 12, 512>}, {transform_indices = @transform_8, window_bounds = array<i64: 2, 128>}]} {
    %c0 = arith.constant 0 : index
    %c0_0 = arith.constant 0 : index
    %0 = vector.load %arg2[%c0, %c0_0] : memref<2x8xbf16, #tpu.memory_space<vmem>>, vector<2x8xbf16>
    %c0_1 = arith.constant 0 : index
    %c0_2 = arith.constant 0 : index
    %1 = vector.load %arg3[%c0_1, %c0_2] : memref<8x128xbf16, #tpu.memory_space<vmem>>, vector<8x128xbf16>
    %cst = arith.constant dense<0.000000e+00> : vector<2x128xf32>
    %2 = tpu.matmul %0, %1, %cst {dimension_numbers = #tpu.dot_dimension_numbers<[1], [0], [0], [1], [0, 0, 1, 1], [], []>} : vector<2x8xbf16>, vector<8x128xbf16>, vector<2x128xf32> -> vector<2x128xf32>
    %c0_3 = arith.constant 0 : index
    %c0_4 = arith.constant 0 : index
    %3 = vector.load %arg8[%c0_3, %c0_4] : memref<12x512xf32, #tpu.memory_space<vmem>>, vector<1x128xf32>
    %4 = vector.broadcast %3 : vector<1x128xf32> to vector<2x128xf32>
    %5 = arith.addf %2, %4 : vector<2x128xf32>
    %cst_5 = arith.constant 0.000000e+00 : f32
    %6 = vector.broadcast %cst_5 : f32 to vector<2x128xf32>
    %7 = arith.maximumf %5, %6 : vector<2x128xf32>
    %c1 = arith.constant 1 : index
    %c0_6 = arith.constant 0 : index
    %8 = vector.load %arg8[%c1, %c0_6] : memref<12x512xf32, #tpu.memory_space<vmem>>, vector<1x128xf32>
    %c2 = arith.constant 2 : index
    %c0_7 = arith.constant 0 : index
    %9 = vector.load %arg8[%c2, %c0_7] : memref<12x512xf32, #tpu.memory_space<vmem>>, vector<1x128xf32>
    %cst_8 = arith.constant dense<0.000000e+00> : vector<2xf32>
    %10 = vector.multi_reduction <add>, %7, %cst_8 [1] : vector<2x128xf32> to vector<2xf32>
    %11 = vector.shape_cast %10 : vector<2xf32> to vector<2x1xf32>
    %cst_9 = arith.constant 1.280000e+02 : f32
    %12 = vector.broadcast %cst_9 : f32 to vector<2x1xf32>
    %13 = arith.divf %11, %12 : vector<2x1xf32>
    %14 = vector.broadcast %13 : vector<2x1xf32> to vector<2x128xf32>
    %15 = arith.subf %7, %14 : vector<2x128xf32>
    %16 = arith.mulf %15, %15 : vector<2x128xf32>
    %cst_10 = arith.constant dense<0.000000e+00> : vector<2xf32>
    %17 = vector.multi_reduction <add>, %16, %cst_10 [1] : vector<2x128xf32> to vector<2xf32>
    %18 = vector.shape_cast %17 : vector<2xf32> to vector<2x1xf32>
    %cst_11 = arith.constant 1.280000e+02 : f32
    %19 = vector.broadcast %cst_11 : f32 to vector<2x1xf32>
    %20 = arith.divf %18, %19 : vector<2x1xf32>
    %21 = vector.broadcast %13 : vector<2x1xf32> to vector<2x128xf32>
    %22 = arith.subf %7, %21 : vector<2x128xf32>
    %cst_12 = arith.constant 9.99999974E-6 : f32
    %23 = vector.broadcast %cst_12 : f32 to vector<2x1xf32>
    %24 = arith.addf %20, %23 : vector<2x1xf32>
    %25 = math.rsqrt %24 : vector<2x1xf32>
    %26 = vector.broadcast %25 : vector<2x1xf32> to vector<2x128xf32>
    %27 = arith.mulf %22, %26 : vector<2x128xf32>
    %28 = vector.broadcast %8 : vector<1x128xf32> to vector<2x128xf32>
    %29 = arith.mulf %27, %28 : vector<2x128xf32>
    %30 = vector.broadcast %9 : vector<1x128xf32> to vector<2x128xf32>
    %31 = arith.addf %29, %30 : vector<2x128xf32>
    %32 = arith.truncf %31 : vector<2x128xf32> to vector<2x128xbf16>
    %c0_13 = arith.constant 0 : index
    %c0_14 = arith.constant 0 : index
    %33 = vector.load %arg4[%c0_13, %c0_14] : memref<128x200xbf16, #tpu.memory_space<vmem>>, vector<128x200xbf16>
    %cst_15 = arith.constant dense<0.000000e+00> : vector<2x200xf32>
    %34 = tpu.matmul %32, %33, %cst_15 {dimension_numbers = #tpu.dot_dimension_numbers<[1], [0], [0], [1], [0, 0, 1, 1], [], []>} : vector<2x128xbf16>, vector<128x200xbf16>, vector<2x200xf32> -> vector<2x200xf32>
    %c3 = arith.constant 3 : index
    %c0_16 = arith.constant 0 : index
    %35 = vector.load %arg8[%c3, %c0_16] : memref<12x512xf32, #tpu.memory_space<vmem>>, vector<1x200xf32>
    %36 = vector.broadcast %35 : vector<1x200xf32> to vector<2x200xf32>
    %37 = arith.addf %34, %36 : vector<2x200xf32>
    %cst_17 = arith.constant 0.000000e+00 : f32
    %38 = vector.broadcast %cst_17 : f32 to vector<2x200xf32>
    %39 = arith.maximumf %37, %38 : vector<2x200xf32>
    %c4 = arith.constant 4 : index
    %c0_18 = arith.constant 0 : index
    %40 = vector.load %arg8[%c4, %c0_18] : memref<12x512xf32, #tpu.memory_space<vmem>>, vector<1x200xf32>
    %c5 = arith.constant 5 : index
    %c0_19 = arith.constant 0 : index
    %41 = vector.load %arg8[%c5, %c0_19] : memref<12x512xf32, #tpu.memory_space<vmem>>, vector<1x200xf32>
    %cst_20 = arith.constant dense<0.000000e+00> : vector<2xf32>
    %42 = vector.multi_reduction <add>, %39, %cst_20 [1] : vector<2x200xf32> to vector<2xf32>
    %43 = vector.shape_cast %42 : vector<2xf32> to vector<2x1xf32>
    %cst_21 = arith.constant 2.000000e+02 : f32
    %44 = vector.broadcast %cst_21 : f32 to vector<2x1xf32>
    %45 = arith.divf %43, %44 : vector<2x1xf32>
    %46 = vector.broadcast %45 : vector<2x1xf32> to vector<2x200xf32>
    %47 = arith.subf %39, %46 : vector<2x200xf32>
    %48 = arith.mulf %47, %47 : vector<2x200xf32>
    %cst_22 = arith.constant dense<0.000000e+00> : vector<2xf32>
    %49 = vector.multi_reduction <add>, %48, %cst_22 [1] : vector<2x200xf32> to vector<2xf32>
    %50 = vector.shape_cast %49 : vector<2xf32> to vector<2x1xf32>
    %cst_23 = arith.constant 2.000000e+02 : f32
    %51 = vector.broadcast %cst_23 : f32 to vector<2x1xf32>
    %52 = arith.divf %50, %51 : vector<2x1xf32>
    %53 = vector.broadcast %45 : vector<2x1xf32> to vector<2x200xf32>
    %54 = arith.subf %39, %53 : vector<2x200xf32>
    %cst_24 = arith.constant 9.99999974E-6 : f32
    %55 = vector.broadcast %cst_24 : f32 to vector<2x1xf32>
    %56 = arith.addf %52, %55 : vector<2x1xf32>
    %57 = math.rsqrt %56 : vector<2x1xf32>
    %58 = vector.broadcast %57 : vector<2x1xf32> to vector<2x200xf32>
    %59 = arith.mulf %54, %58 : vector<2x200xf32>
    %60 = vector.broadcast %40 : vector<1x200xf32> to vector<2x200xf32>
    %61 = arith.mulf %59, %60 : vector<2x200xf32>
    %62 = vector.broadcast %41 : vector<1x200xf32> to vector<2x200xf32>
    %63 = arith.addf %61, %62 : vector<2x200xf32>
    %cst_25 = arith.constant 0.000000e+00 : f32
    %64 = vector.broadcast %cst_25 : f32 to vector<2x200xf32>
    %65 = arith.maximumf %63, %64 : vector<2x200xf32>
    %c0_26 = arith.constant 0 : index
    %c0_27 = arith.constant 0 : index
    %66 = vector.load %arg1[%c0_26, %c0_27] : memref<2x1024xbf16, #tpu.memory_space<vmem>>, vector<2x1024xbf16>
    %c0_28 = arith.constant 0 : index
    %c0_29 = arith.constant 0 : index
    %67 = vector.load %arg5[%c0_28, %c0_29] : memref<1024x512xbf16, #tpu.memory_space<vmem>>, vector<1024x512xbf16>
    %cst_30 = arith.constant dense<0.000000e+00> : vector<2x512xf32>
    %68 = tpu.matmul %66, %67, %cst_30 {dimension_numbers = #tpu.dot_dimension_numbers<[1], [0], [0], [1], [0, 0, 1, 1], [], []>} : vector<2x1024xbf16>, vector<1024x512xbf16>, vector<2x512xf32> -> vector<2x512xf32>
    %69 = arith.truncf %65 : vector<2x200xf32> to vector<2x200xbf16>
    %c0_31 = arith.constant 0 : index
    %c0_32 = arith.constant 0 : index
    %70 = vector.load %arg6[%c0_31, %c0_32] : memref<200x512xbf16, #tpu.memory_space<vmem>>, vector<200x512xbf16>
    %cst_33 = arith.constant dense<0.000000e+00> : vector<2x512xf32>
    %71 = tpu.matmul %69, %70, %cst_33 {dimension_numbers = #tpu.dot_dimension_numbers<[1], [0], [0], [1], [0, 0, 1, 1], [], []>} : vector<2x200xbf16>, vector<200x512xbf16>, vector<2x512xf32> -> vector<2x512xf32>
    %72 = arith.addf %68, %71 : vector<2x512xf32>
    %c6 = arith.constant 6 : index
    %c0_34 = arith.constant 0 : index
    %73 = vector.load %arg8[%c6, %c0_34] : memref<12x512xf32, #tpu.memory_space<vmem>>, vector<1x512xf32>
    %74 = vector.broadcast %73 : vector<1x512xf32> to vector<2x512xf32>
    %75 = arith.addf %72, %74 : vector<2x512xf32>
    %cst_35 = arith.constant 0.000000e+00 : f32
    %76 = vector.broadcast %cst_35 : f32 to vector<2x512xf32>
    %77 = arith.maximumf %75, %76 : vector<2x512xf32>
    %c7 = arith.constant 7 : index
    %c0_36 = arith.constant 0 : index
    %78 = vector.load %arg8[%c7, %c0_36] : memref<12x512xf32, #tpu.memory_space<vmem>>, vector<1x512xf32>
    %c8 = arith.constant 8 : index
    %c0_37 = arith.constant 0 : index
    %79 = vector.load %arg8[%c8, %c0_37] : memref<12x512xf32, #tpu.memory_space<vmem>>, vector<1x512xf32>
    %cst_38 = arith.constant dense<0.000000e+00> : vector<2xf32>
    %80 = vector.multi_reduction <add>, %77, %cst_38 [1] : vector<2x512xf32> to vector<2xf32>
    %81 = vector.shape_cast %80 : vector<2xf32> to vector<2x1xf32>
    %cst_39 = arith.constant 5.120000e+02 : f32
    %82 = vector.broadcast %cst_39 : f32 to vector<2x1xf32>
    %83 = arith.divf %81, %82 : vector<2x1xf32>
    %84 = vector.broadcast %83 : vector<2x1xf32> to vector<2x512xf32>
    %85 = arith.subf %77, %84 : vector<2x512xf32>
    %86 = arith.mulf %85, %85 : vector<2x512xf32>
    %cst_40 = arith.constant dense<0.000000e+00> : vector<2xf32>
    %87 = vector.multi_reduction <add>, %86, %cst_40 [1] : vector<2x512xf32> to vector<2xf32>
    %88 = vector.shape_cast %87 : vector<2xf32> to vector<2x1xf32>
    %cst_41 = arith.constant 5.120000e+02 : f32
    %89 = vector.broadcast %cst_41 : f32 to vector<2x1xf32>
    %90 = arith.divf %88, %89 : vector<2x1xf32>
    %91 = vector.broadcast %83 : vector<2x1xf32> to vector<2x512xf32>
    %92 = arith.subf %77, %91 : vector<2x512xf32>
    %cst_42 = arith.constant 9.99999974E-6 : f32
    %93 = vector.broadcast %cst_42 : f32 to vector<2x1xf32>
    %94 = arith.addf %90, %93 : vector<2x1xf32>
    %95 = math.rsqrt %94 : vector<2x1xf32>
    %96 = vector.broadcast %95 : vector<2x1xf32> to vector<2x512xf32>
    %97 = arith.mulf %92, %96 : vector<2x512xf32>
    %98 = vector.broadcast %78 : vector<1x512xf32> to vector<2x512xf32>
    %99 = arith.mulf %97, %98 : vector<2x512xf32>
    %100 = vector.broadcast %79 : vector<1x512xf32> to vector<2x512xf32>
    %101 = arith.addf %99, %100 : vector<2x512xf32>
    %cst_43 = arith.constant 0.000000e+00 : f32
    %102 = vector.broadcast %cst_43 : f32 to vector<2x512xf32>
    %103 = arith.maximumf %101, %102 : vector<2x512xf32>
    %104 = arith.truncf %103 : vector<2x512xf32> to vector<2x512xbf16>
    %c0_44 = arith.constant 0 : index
    %c0_45 = arith.constant 0 : index
    %105 = vector.load %arg7[%c0_44, %c0_45] : memref<512x128xbf16, #tpu.memory_space<vmem>>, vector<512x128xbf16>
    %cst_46 = arith.constant dense<0.000000e+00> : vector<2x128xf32>
    %106 = tpu.matmul %104, %105, %cst_46 {dimension_numbers = #tpu.dot_dimension_numbers<[1], [0], [0], [1], [0, 0, 1, 1], [], []>} : vector<2x512xbf16>, vector<512x128xbf16>, vector<2x128xf32> -> vector<2x128xf32>
    %c9 = arith.constant 9 : index
    %c0_47 = arith.constant 0 : index
    %107 = vector.load %arg8[%c9, %c0_47] : memref<12x512xf32, #tpu.memory_space<vmem>>, vector<1x128xf32>
    %108 = vector.broadcast %107 : vector<1x128xf32> to vector<2x128xf32>
    %109 = arith.addf %106, %108 : vector<2x128xf32>
    %110 = tpu.iota {dimensions = array<i32: 1>} : vector<2x128xi32>
    %c52_i32 = arith.constant 52 : i32
    %111 = vector.broadcast %c52_i32 : i32 to vector<2x128xi32>
    %112 = arith.cmpi slt, %110, %111 : vector<2x128xi32>
    %cst_48 = arith.constant 0.000000e+00 : f32
    %113 = vector.broadcast %cst_48 : f32 to vector<2x128xf32>
    %114 = arith.select %112, %109, %113 : vector<2x128xi1>, vector<2x128xf32>
    %cst_49 = arith.constant dense<0.000000e+00> : vector<2xf32>
    %115 = vector.multi_reduction <add>, %114, %cst_49 [1] : vector<2x128xf32> to vector<2xf32>
    %116 = vector.shape_cast %115 : vector<2xf32> to vector<2x1xf32>
    %cst_50 = arith.constant 5.200000e+01 : f32
    %117 = vector.broadcast %cst_50 : f32 to vector<2x1xf32>
    %118 = arith.divf %116, %117 : vector<2x1xf32>
    %119 = vector.broadcast %118 : vector<2x1xf32> to vector<2x128xf32>
    %120 = arith.subf %109, %119 : vector<2x128xf32>
    %cst_51 = arith.constant 0.000000e+00 : f32
    %121 = vector.broadcast %cst_51 : f32 to vector<2x128xf32>
    %122 = arith.select %112, %120, %121 : vector<2x128xi1>, vector<2x128xf32>
    %123 = arith.mulf %122, %122 : vector<2x128xf32>
    %cst_52 = arith.constant dense<0.000000e+00> : vector<2xf32>
    %124 = vector.multi_reduction <add>, %123, %cst_52 [1] : vector<2x128xf32> to vector<2xf32>
    %125 = vector.shape_cast %124 : vector<2xf32> to vector<2x1xf32>
    %cst_53 = arith.constant 5.200000e+01 : f32
    %126 = vector.broadcast %cst_53 : f32 to vector<2x1xf32>
    %127 = arith.divf %125, %126 : vector<2x1xf32>
    %128 = vector.broadcast %118 : vector<2x1xf32> to vector<2x128xf32>
    %129 = arith.subf %109, %128 : vector<2x128xf32>
    %cst_54 = arith.constant 9.99999974E-6 : f32
    %130 = vector.broadcast %cst_54 : f32 to vector<2x1xf32>
    %131 = arith.addf %127, %130 : vector<2x1xf32>
    %132 = math.rsqrt %131 : vector<2x1xf32>
    %133 = vector.broadcast %132 : vector<2x1xf32> to vector<2x128xf32>
    %134 = arith.mulf %129, %133 : vector<2x128xf32>
    %c10 = arith.constant 10 : index
    %c0_55 = arith.constant 0 : index
    %135 = vector.load %arg8[%c10, %c0_55] : memref<12x512xf32, #tpu.memory_space<vmem>>, vector<1x128xf32>
    %136 = vector.broadcast %135 : vector<1x128xf32> to vector<2x128xf32>
    %137 = arith.mulf %134, %136 : vector<2x128xf32>
    %c11 = arith.constant 11 : index
    %c0_56 = arith.constant 0 : index
    %138 = vector.load %arg8[%c11, %c0_56] : memref<12x512xf32, #tpu.memory_space<vmem>>, vector<1x128xf32>
    %139 = vector.broadcast %138 : vector<1x128xf32> to vector<2x128xf32>
    %140 = arith.addf %137, %139 : vector<2x128xf32>
    %141 = math.tanh %140 : vector<2x128xf32>
    %c0_57 = arith.constant 0 : index
    %c0_58 = arith.constant 0 : index
    %142 = vector.load %arg9[%c0_57, %c0_58] : memref<2x128xf32, #tpu.memory_space<vmem>>, vector<2x128xf32>
    tpu.vector_store %arg9[%c0_57, %c0_58], %141 {strides = array<i32>} : memref<2x128xf32, #tpu.memory_space<vmem>>, vector<2x128xf32>,
    return
  }
  func.func @transform_0(%arg0: i32) -> (i32, i32) {
    %c0_i32 = arith.constant 0 : i32
    %c0_i32_0 = arith.constant 0 : i32
    return %arg0, %c0_i32 : i32, i32
  }
  func.func @transform_1(%arg0: i32) -> (i32, i32) {
    %c0_i32 = arith.constant 0 : i32
    %c0_i32_0 = arith.constant 0 : i32
    return %arg0, %c0_i32 : i32, i32
  }
  func.func @transform_2(%arg0: i32) -> (i32, i32) {
    %c0_i32 = arith.constant 0 : i32
    %c0_i32_0 = arith.constant 0 : i32
    %c0_i32_1 = arith.constant 0 : i32
    return %c0_i32, %c0_i32_0 : i32, i32
  }
  func.func @transform_3(%arg0: i32) -> (i32, i32) {
    %c0_i32 = arith.constant 0 : i32
    %c0_i32_0 = arith.constant 0 : i32
    %c0_i32_1 = arith.constant 0 : i32
    return %c0_i32, %c0_i32_0 : i32, i32
  }
  func.func @transform_4(%arg0: i32) -> (i32, i32) {
    %c0_i32 = arith.constant 0 : i32
    %c0_i32_0 = arith.constant 0 : i32
    %c0_i32_1 = arith.constant 0 : i32
    return %c0_i32, %c0_i32_0 : i32, i32
  }
  func.func @transform_5(%arg0: i32) -> (i32, i32) {
    %c0_i32 = arith.constant 0 : i32
    %c0_i32_0 = arith.constant 0 : i32
    %c0_i32_1 = arith.constant 0 : i32
    return %c0_i32, %c0_i32_0 : i32, i32
  }
  func.func @transform_6(%arg0: i32) -> (i32, i32) {
    %c0_i32 = arith.constant 0 : i32
    %c0_i32_0 = arith.constant 0 : i32
    %c0_i32_1 = arith.constant 0 : i32
    return %c0_i32, %c0_i32_0 : i32, i32
  }
  func.func @transform_7(%arg0: i32) -> (i32, i32) {
    %c0_i32 = arith.constant 0 : i32
    %c0_i32_0 = arith.constant 0 : i32
    %c0_i32_1 = arith.constant 0 : i32
    return %c0_i32, %c0_i32_0 : i32, i32
  }
  func.func @transform_8(%arg0: i32) -> (i32, i32) {
    %c0_i32 = arith.constant 0 : i32
    %c0_i32_0 = arith.constant 0 : i32
    return %arg0, %c0_i32 : i32, i32
  }
}

</mosaic_0001>

<llo_original>
// kernel: actor_multimodal_forward.2
$region0: #{actor_multimodal_forward.2}
  #allocation0 [shape = 'u32[]', space=smem, size = 0x4, offset = 0x4, fixed_abs, tag = 'smem constant byte address 0x4 - core index']
  #allocation1 [shape = 'u32[144,128]{1,0:T(1,128)}', space=vmem, size = 0x12000, scoped, tag = 'internal scratch']
  %s0 = inlined_call_operand.vmem [shape: bf16[2,16,8], index: 0, kind: input, shape index: {}]
  %s1 = inlined_call_operand.vmem [shape: bf16[8,64], index: 1, kind: input, shape index: {}]
  %s2 = inlined_call_operand.vmem [shape: bf16[64,128], index: 2, kind: input, shape index: {}]
  %s3 = inlined_call_operand.vmem [shape: bf16[128,1024], index: 3, kind: input, shape index: {}]
  %s4 = inlined_call_operand.vmem [shape: f32[3,1024], index: 4, kind: input, shape index: {}]
  %s5 = inlined_call_operand.vmem [shape: f32[2,1,1024], index: 5, kind: output, shape index: {}]
  %s6 = sld [smem:[#allocation0]]
  $region61: #{actor_multimodal_forward.2} parent=0
    _
  %s8 = ssub.s32 1, %s6
  %s9 = scalar_select 0, %s8, %s6
  loop: start=0, step=1, limit=4
  $region2: #{actor_multimodal_forward.2} parent=0 // loop_pre_header
    _
  $region3: #{actor_multimodal_forward.2} parent=0 // loop_header
    %s11 = sphi 0, %s15
    %p12 = scmp.ge.s32.totalorder %s11, 4
    %s18 = sphi 0, %s30
    %s19 = sphi 0, %s26
    %s20 = sphi 0, %s18
    %s21 = sphi 0, %s19
    %s22 = sphi 0, %s20
    %s23 = sphi 0, %s21
    %s35 = sphi 0, %s37
    %s38 = sphi 0, %s35
    %s39 = sphi 0, %s38
    %s55 = sphi 0, %s39
    %s59 = sphi 0, %s59
    %s61 = sphi 0, %s59
    %s62 = sphi 0, %s61
    %s76 = sphi 0, %s62
    %s80 = sphi 0, %s80
    %s82 = sphi 0, %s80
    %s83 = sphi 0, %s82
    %s97 = sphi 0, %s83
    %s101 = sphi 0, %s101
    %s103 = sphi 0, %s101
    %s104 = sphi 0, %s103
    %s118 = sphi 0, %s104
    %s122 = sphi 0, %s122
    %s124 = sphi 0, %s122
    %s125 = sphi 0, %s124
    %s139 = sphi 0, %s125
    %s145 = sphi 0, %s147
    %s148 = sphi 0, %s145
    %s149 = sphi 0, %s148
    %s165 = sphi 0, %s149
  $region4: #{actor_multimodal_forward.2} parent=0 // loop_header_branch
    %14 = sbr.rel (%p12) target = $region8
  $region5: #{actor_multimodal_forward.2} parent=0 // loop_body
    %s16 = ssub.s32 %s11, 1
    %s17 = ssub.s32 %s11, 2
    %s24 = sadd.s32 1, %s19
    %p25 = scmp.ge.s32.totalorder %s24, 1
    %s26 = scalar_select %p25, 0, %s24
    %s27 = sadd.s32 1, %s18
    %s28 = scalar_select %p25, %s27, %s18
    %p29 = scmp.ge.s32.totalorder %s28, 2
    %s30 = scalar_select %p29, 0, %s28
    %s31 = ssub.s32 %s18, %s30
    %s32 = ssub.s32 %s19, %s26
    %s33 = sor.u32 %s31, %s32
    %p34 = scmp.eq.s32.totalorder %s33, 0
    %s36 = sadd.s32 %s35, 1
    %s37 = scalar_select %p34, %s35, %s36
    %p40 = pneg %p34
    %p41 = scmp.eq.s32.totalorder %s11, 1
    %p42 = por %p40, %p41
    %p43 = scmp.ne.s32.totalorder %s35, %s38
    %p44 = scmp.eq.s32.totalorder %s11, 0
    %p45 = por %p43, %p44
    %p46 = scmp.ne.s32.totalorder %s35, %s38
    %p47 = scmp.eq.s32.totalorder %s16, 1
    %p48 = por %p46, %p47
    %p49 = scmp.ne.s32.totalorder %s38, %s39
    %p50 = scmp.eq.s32.totalorder %s16, 0
    %p51 = por %p49, %p50
    %p52 = scmp.ne.s32.totalorder %s38, %s39
    %p53 = scmp.eq.s32.totalorder %s17, 1
    %p54 = por %p52, %p53
    %p56 = scmp.ne.s32.totalorder %s39, %s55
    %p57 = scmp.eq.s32.totalorder %s17, 0
    %p58 = por %p56, %p57
    %s60 = sadd.s32 %s59, 1
    %p63 = scmp.eq.s32.totalorder %s11, 1
    %p64 = scmp.ne.s32.totalorder %s59, %s61
    %p65 = scmp.eq.s32.totalorder %s11, 0
    %p66 = por %p64, %p65
    %p67 = scmp.ne.s32.totalorder %s59, %s61
    %p68 = scmp.eq.s32.totalorder %s16, 1
    %p69 = por %p67, %p68
    %p70 = scmp.ne.s32.totalorder %s61, %s62
    %p71 = scmp.eq.s32.totalorder %s16, 0
    %p72 = por %p70, %p71
    %p73 = scmp.ne.s32.totalorder %s61, %s62
    %p74 = scmp.eq.s32.totalorder %s17, 1
    %p75 = por %p73, %p74
    %p77 = scmp.ne.s32.totalorder %s62, %s76
    %p78 = scmp.eq.s32.totalorder %s17, 0
    %p79 = por %p77, %p78
    %s81 = sadd.s32 %s80, 1
    %p84 = scmp.eq.s32.totalorder %s11, 1
    %p85 = scmp.ne.s32.totalorder %s80, %s82
    %p86 = scmp.eq.s32.totalorder %s11, 0
    %p87 = por %p85, %p86
    %p88 = scmp.ne.s32.totalorder %s80, %s82
    %p89 = scmp.eq.s32.totalorder %s16, 1
    %p90 = por %p88, %p89
    %p91 = scmp.ne.s32.totalorder %s82, %s83
    %p92 = scmp.eq.s32.totalorder %s16, 0
    %p93 = por %p91, %p92
    %p94 = scmp.ne.s32.totalorder %s82, %s83
    %p95 = scmp.eq.s32.totalorder %s17, 1
    %p96 = por %p94, %p95
    %p98 = scmp.ne.s32.totalorder %s83, %s97
    %p99 = scmp.eq.s32.totalorder %s17, 0
    %p100 = por %p98, %p99
    %s102 = sadd.s32 %s101, 1
    %p105 = scmp.eq.s32.totalorder %s11, 1
    %p106 = scmp.ne.s32.totalorder %s101, %s103
    %p107 = scmp.eq.s32.totalorder %s11, 0
    %p108 = por %p106, %p107
    %p109 = scmp.ne.s32.totalorder %s101, %s103
    %p110 = scmp.eq.s32.totalorder %s16, 1
    %p111 = por %p109, %p110
    %p112 = scmp.ne.s32.totalorder %s103, %s104
    %p113 = scmp.eq.s32.totalorder %s16, 0
    %p114 = por %p112, %p113
    %p115 = scmp.ne.s32.totalorder %s103, %s104
    %p116 = scmp.eq.s32.totalorder %s17, 1
    %p117 = por %p115, %p116
    %p119 = scmp.ne.s32.totalorder %s104, %s118
    %p120 = scmp.eq.s32.totalorder %s17, 0
    %p121 = por %p119, %p120
    %s123 = sadd.s32 %s122, 1
    %p126 = scmp.eq.s32.totalorder %s11, 1
    %p127 = scmp.ne.s32.totalorder %s122, %s124
    %p128 = scmp.eq.s32.totalorder %s11, 0
    %p129 = por %p127, %p128
    %p130 = scmp.ne.s32.totalorder %s122, %s124
    %p131 = scmp.eq.s32.totalorder %s16, 1
    %p132 = por %p130, %p131
    %p133 = scmp.ne.s32.totalorder %s124, %s125
    %p134 = scmp.eq.s32.totalorder %s16, 0
    %p135 = por %p133, %p134
    %p136 = scmp.ne.s32.totalorder %s124, %s125
    %p137 = scmp.eq.s32.totalorder %s17, 1
    %p138 = por %p136, %p137
    %p140 = scmp.ne.s32.totalorder %s125, %s139
    %p141 = scmp.eq.s32.totalorder %s17, 0
    %p142 = por %p140, %p141
    %s143 = ssub.s32 %s18, %s30
    %p144 = scmp.eq.s32.totalorder %s143, 0
    %s146 = sadd.s32 %s145, 1
    %s147 = scalar_select %p144, %s145, %s146
    %p150 = pneg %p144
    %p151 = scmp.eq.s32.totalorder %s11, 1
    %p152 = por %p150, %p151
    %p153 = scmp.ne.s32.totalorder %s145, %s148
    %p154 = scmp.eq.s32.totalorder %s11, 0
    %p155 = por %p153, %p154
    %p156 = scmp.ne.s32.totalorder %s145, %s148
    %p157 = scmp.eq.s32.totalorder %s16, 1
    %p158 = por %p156, %p157
    %p159 = scmp.ne.s32.totalorder %s148, %s149
    %p160 = scmp.eq.s32.totalorder %s16, 0
    %p161 = por %p159, %p160
    %p162 = scmp.ne.s32.totalorder %s148, %s149
    %p163 = scmp.eq.s32.totalorder %s17, 1
    %p164 = por %p162, %p163
    %p166 = scmp.ne.s32.totalorder %s149, %s165
    %p167 = scmp.eq.s32.totalorder %s17, 0
    %p168 = por %p166, %p167
    %p169 = scmp.le.s32.totalorder 1, %s11
    %p170 = scmp.lt.s32.totalorder %s11, 3
    %p171 = pnand %p169, %p170
    %p172 = pneg %p171
    // Predicated region
    $region9: #{actor_multimodal_forward.2} parent=5 // pred_check
      _
    $region10: #{actor_multimodal_forward.2} parent=5 // pred_check_branch
      %174 = sbr.rel (%p171) target = $region12
    $region11: #{actor_multimodal_forward.2} parent=5 // pred_region
      %s175 = ssub.s32 %s11, 1
      // Predicated region
      $region13: #{actor_multimodal_forward.2} parent=11 // pred_check
        %p176 = pneg %p72
      $region14: #{actor_multimodal_forward.2} parent=11 // pred_check_branch
        %178 = sbr.rel (%p176) target = $region16
      $region15: #{actor_multimodal_forward.2} parent=11 // pred_region
        _
      $region16: #{actor_multimodal_forward.2} parent=11 // pred_fallthru
        _
      // Predicated region
      $region17: #{actor_multimodal_forward.2} parent=11 // pred_check
        %p179 = pneg %p93
      $region18: #{actor_multimodal_forward.2} parent=11 // pred_check_branch
        %181 = sbr.rel (%p179) target = $region20
      $region19: #{actor_multimodal_forward.2} parent=11 // pred_region
        _
      $region20: #{actor_multimodal_forward.2} parent=11 // pred_fallthru
        _
      // Predicated region
      $region21: #{actor_multimodal_forward.2} parent=11 // pred_check
        %p182 = pneg %p114
      $region22: #{actor_multimodal_forward.2} parent=11 // pred_check_branch
        %184 = sbr.rel (%p182) target = $region24
      $region23: #{actor_multimodal_forward.2} parent=11 // pred_region
        _
      $region24: #{actor_multimodal_forward.2} parent=11 // pred_fallthru
        _
      // Predicated region
      $region25: #{actor_multimodal_forward.2} parent=11 // pred_check
        %p185 = pneg %p135
      $region26: #{actor_multimodal_forward.2} parent=11 // pred_check_branch
        %187 = sbr.rel (%p185) target = $region28
      $region27: #{actor_multimodal_forward.2} parent=11 // pred_region
        _
      $region28: #{actor_multimodal_forward.2} parent=11 // pred_fallthru
        _
    $region12: #{actor_multimodal_forward.2} parent=5 // pred_fallthru
      _
    %p188 = scmp.lt.s32.totalorder %s11, 2
    // Predicated region
    $region29: #{actor_multimodal_forward.2} parent=5 // pred_check
      %p189 = pneg %p188
    $region30: #{actor_multimodal_forward.2} parent=5 // pred_check_branch
      %191 = sbr.rel (%p189) target = $region32
    $region31: #{actor_multimodal_forward.2} parent=5 // pred_region
      // Predicated region
      $region33: #{actor_multimodal_forward.2} parent=31 // pred_check
        %p192 = pneg %p45
      $region34: #{actor_multimodal_forward.2} parent=31 // pred_check_branch
        %194 = sbr.rel (%p192) target = $region36
      $region35: #{actor_multimodal_forward.2} parent=31 // pred_region
        %s195 = smul.u32 2, %s19
        %p196 = scmp.lt.s32.totalorder %s18, 1
        %s197 = scalar_select %p196, %s18, 1
        %p198 = scmp.lt.s32.totalorder %s195, 1
        %s199 = scalar_select %p198, %s195, 1
        %s200 = smul.addr %s197, 2
        %s201 = sadd.s32 %s199, %s200
        %s202 = smul.addr %s201, 4
        %s203 = scalar_lea.vmem %s0, %s202
        %s204 = smul.u32 2, %s19
      $region36: #{actor_multimodal_forward.2} parent=31 // pred_fallthru
        _
    $region32: #{actor_multimodal_forward.2} parent=5 // pred_fallthru
      _
    %p205 = scmp.le.s32.totalorder 1, %s11
    %p206 = scmp.lt.s32.totalorder %s11, 3
    %p207 = pnand %p205, %p206
    %p208 = pneg %p207
    // Predicated region
    $region37: #{actor_multimodal_forward.2} parent=5 // pred_check
      _
    $region38: #{actor_multimodal_forward.2} parent=5 // pred_check_branch
      %210 = sbr.rel (%p207) target = $region40
    $region39: #{actor_multimodal_forward.2} parent=5 // pred_region
      %s211 = ssub.s32 %s11, 1
      %s212 = smul.u32 2, %s21
      %p213 = scmp.lt.s32.totalorder %s20, 1
      %s214 = scalar_select %p213, %s20, 1
      %p215 = scmp.lt.s32.totalorder %s212, 1
      %s216 = scalar_select %p215, %s212, 1
      %s217 = smul.addr %s214, 2
      %s218 = sadd.s32 %s216, %s217
      %s219 = smul.addr %s218, 4
      %s220 = scalar_lea.vmem %s0, %s219
      %p221 = pneg %p51
      %p222 = pneg %p48
      %p223 = pneg %p72
      %p224 = pneg %p69
      %p225 = pneg %p93
      %p226 = pneg %p90
      %p227 = pneg %p114
      %p228 = pneg %p111
      %p229 = pneg %p135
      %p230 = pneg %p132
      %p231 = pneg %p161
      %p232 = pneg %p158
      %p233 = scmp.lt.s32.totalorder %s20, 1
      %s234 = scalar_select %p233, %s20, 1
      %s235 = smul.addr %s234, 8
      %s236 = scalar_lea.vmem %s5, %s235
      %s237 = smul.u32 2, %s21
      %p238 = scmp.lt.s32.totalorder %s20, 1
      %s239 = scalar_select %p238, %s20, 1
      %p240 = scmp.lt.s32.totalorder %s237, 1
      %s241 = scalar_select %p240, %s237, 1
      %s242 = smul.addr %s239, 2
      %s243 = sadd.s32 %s241, %s242
      %s244 = smul.addr %s243, 4
      %s245 = scalar_lea.vmem %s0, %s244
      %s246 = smul.u32 2, %s21
      %p247 = scmp.lt.s32.totalorder %s20, 1
      %s248 = scalar_select %p247, %s20, 1
      %s249 = smul.addr %s248, 8
      %s250 = scalar_lea.vmem %s5, %s249
      %v252 = vld [vmem:[%s245] sm:$0xf]
      %v253 = vld [vmem:[%s245 + $0x4] sm:$0xf]
      %v254 = vld [vmem:[%s1] sm:$0xf]
      %v255 = vld [vmem:[%s4] sm:$0x1]
      %v256 = vlaneseq
      %v257 = vshrl.u32 %v256, 7
      %v258 = vsub.s32 0, %v257
      %v259 = vrot.slane %v255, %v258
      %v262 = vunpack.c.l.b16 %v252
      %v263 = vunpack.c.l.b16 %v253
      %v264 = vpack.c.b16 %v263, %v262
      %vm265 = vcmask 64512
      %v267 = vsel %vm265, %v264, 0
      %vm269 = vcmask 1043456
      %v271 = vsel %vm269, %v254, 0
      %273 = vmatprep.subr.bf16.mxu0 0
      %274 = vmatpush1.bf16.msra.mxu0 %v271
      %275 = vmatprep.subr.bf16.mxu0 0
      %276 = vmatpush1.bf16.msra.mxu0 0
      %277 = vmatprep.subr.bf16.mxu0 0
      %278 = vmatpush1.bf16.msra.mxu0 0
      %279 = vmatprep.subr.bf16.mxu0 0
      %280 = vmatpush1.bf16.msra.mxu0 0
      %281 = vmatprep.subr.bf16.mxu0 0
      %282 = vmatpush1.bf16.msra.mxu0 0
      %283 = vmatprep.subr.bf16.mxu0 0
      %284 = vmatpush1.bf16.msra.mxu0 0
      %285 = vmatprep.subr.bf16.mxu0 0
      %286 = vmatpush1.bf16.msra.mxu0 0
      %287 = vmatprep.subr.bf16.mxu0 0
      %288 = vmatpush1.bf16.msra.mxu0 0
      %289 = vmatprep.subr.bf16.mxu0 0
      %290 = vmatpush1.bf16.msra.mxu0 0
      %291 = vmatprep.subr.bf16.mxu0 0
      %292 = vmatpush1.bf16.msra.mxu0 0
      %293 = vmatprep.subr.bf16.mxu0 0
      %294 = vmatpush1.bf16.msra.mxu0 0
      %295 = vmatprep.subr.bf16.mxu0 0
      %296 = vmatpush1.bf16.msra.mxu0 0
      %297 = vmatprep.subr.bf16.mxu0 0
      %298 = vmatpush1.bf16.msra.mxu0 0
      %299 = vmatprep.subr.bf16.mxu0 0
      %300 = vmatpush1.bf16.msra.mxu0 0
      %301 = vmatprep.subr.bf16.mxu0 0
      %302 = vmatpush1.bf16.msra.mxu0 0
      %303 = vmatprep.subr.bf16.mxu0 0
      %304 = vmatpush1.bf16.msra.mxu0 0
      %305 = vmatprep.mubr.bf16.mxu0 0
      %306 = vmatmul.mubr.bf16.gmra.mrb[0].mxu0 %v267
      %v307 = vpop.f32.mrb[0].mxu0
      %v308 = vadd.f32 %v259, %v307
      %v309 = vpop.f32.mrb[0].mxu0
      %v310 = vpop.f32.mrb[0].mxu0
      %v311 = vadd.f32 %v259, %v310
      %v312 = vpop.f32.mrb[0].mxu0
      %313 = vdwg.mxu0
      %v314 = vmax.f32 %v308, 0.0
      %v315 = vmax.f32 %v311, 0.0
      %v316 = vpack.c.bf16 %v315, %v314
      %v317 = vld [vmem:[%s2] sm:$0xf]
      %v318 = vld [vmem:[%s2 + $0x4] sm:$0xf]
      %v319 = vld [vmem:[%s2 + $0x8] sm:$0xf]
      %v320 = vld [vmem:[%s2 + $0xc] sm:$0xf]
      %v321 = vld [vmem:[%s2 + $0x10] sm:$0xf]
      %v322 = vld [vmem:[%s2 + $0x14] sm:$0xf]
      %v323 = vld [vmem:[%s2 + $0x18] sm:$0xf]
      %v324 = vld [vmem:[%s2 + $0x1c] sm:$0xf]
      %v325 = vld [vmem:[%s4 + $0x1] sm:$0x1]
      %v326 = vlaneseq
      %v327 = vshrl.u32 %v326, 7
      %v328 = vsub.s32 0, %v327
      %v329 = vrot.slane %v325, %v328
      %v338 = vunpack.c.l.b16 %v317
      %v339 = vunpack.c.l.b16 %v318
      %v340 = vunpack.c.l.b16 %v319
      %v341 = vunpack.c.l.b16 %v320
      %v342 = vunpack.c.l.b16 %v321
      %v343 = vunpack.c.l.b16 %v322
      %v344 = vunpack.c.l.b16 %v323
      %v345 = vunpack.c.l.b16 %v324
      %v346 = vpack.c.b16 %v339, %v338
      %v347 = vpack.c.b16 %v341, %v340
      %v348 = vpack.c.b16 %v343, %v342
      %v349 = vpack.c.b16 %v345, %v344
      %vm354 = vcmask 523264
      %v356 = vsel %vm354, %v316, 0
      %358 = vmatprep.subr.bf16.mxu0 0
      %359 = vmatpush1.bf16.msra.mxu0 %v346
      %360 = vmatprep.subr.bf16.mxu0 0
      %361 = vmatpush1.bf16.msra.mxu0 %v347
      %362 = vmatprep.subr.bf16.mxu0 0
      %363 = vmatpush1.bf16.msra.mxu0 %v348
      %364 = vmatprep.subr.bf16.mxu0 0
      %365 = vmatpush1.bf16.msra.mxu0 %v349
      %366 = vmatprep.subr.bf16.mxu0 0
      %367 = vmatpush1.bf16.msra.mxu0 0
      %368 = vmatprep.subr.bf16.mxu0 0
      %369 = vmatpush1.bf16.msra.mxu0 0
      %370 = vmatprep.subr.bf16.mxu0 0
      %371 = vmatpush1.bf16.msra.mxu0 0
      %372 = vmatprep.subr.bf16.mxu0 0
      %373 = vmatpush1.bf16.msra.mxu0 0
      %374 = vmatprep.subr.bf16.mxu0 0
      %375 = vmatpush1.bf16.msra.mxu0 0
      %376 = vmatprep.subr.bf16.mxu0 0
      %377 = vmatpush1.bf16.msra.mxu0 0
      %378 = vmatprep.subr.bf16.mxu0 0
      %379 = vmatpush1.bf16.msra.mxu0 0
      %380 = vmatprep.subr.bf16.mxu0 0
      %381 = vmatpush1.bf16.msra.mxu0 0
      %382 = vmatprep.subr.bf16.mxu0 0
      %383 = vmatpush1.bf16.msra.mxu0 0
      %384 = vmatprep.subr.bf16.mxu0 0
      %385 = vmatpush1.bf16.msra.mxu0 0
      %386 = vmatprep.subr.bf16.mxu0 0
      %387 = vmatpush1.bf16.msra.mxu0 0
      %388 = vmatprep.subr.bf16.mxu0 0
      %389 = vmatpush1.bf16.msra.mxu0 0
      %390 = vmatprep.mubr.bf16.mxu0 0
      %391 = vmatmul.mubr.bf16.gmra.mrb[0].mxu0 %v356
      %v392 = vpop.f32.mrb[0].mxu0
      %v393 = vadd.f32 %v329, %v392
      %v394 = vpop.f32.mrb[0].mxu0
      %v395 = vpop.f32.mrb[0].mxu0
      %v396 = vadd.f32 %v329, %v395
      %v397 = vpop.f32.mrb[0].mxu0
      %398 = vdwg.mxu0
      %v399 = vmax.f32 %v393, 0.0
      %v400 = vmax.f32 %v396, 0.0
      %v401 = vpack.c.bf16 %v400, %v399
      %v402 = vld [vmem:[%s3] sm:$0xff]
      %v403 = vld [vmem:[%s3 + $0x8] sm:$0xff]
      %v404 = vld [vmem:[%s3 + $0x10] sm:$0xff]
      %v405 = vld [vmem:[%s3 + $0x18] sm:$0xff]
      %v406 = vld [vmem:[%s3 + $0x20] sm:$0xff]
      %v407 = vld [vmem:[%s3 + $0x28] sm:$0xff]
      %v408 = vld [vmem:[%s3 + $0x30] sm:$0xff]
      %v409 = vld [vmem:[%s3 + $0x38] sm:$0xff]
      %v410 = vld [vmem:[%s3 + $0x40] sm:$0xff]
      %v411 = vld [vmem:[%s3 + $0x48] sm:$0xff]
      %v412 = vld [vmem:[%s3 + $0x50] sm:$0xff]
      %v413 = vld [vmem:[%s3 + $0x58] sm:$0xff]
      %v414 = vld [vmem:[%s3 + $0x60] sm:$0xff]
      %v415 = vld [vmem:[%s3 + $0x68] sm:$0xff]
      %v416 = vld [vmem:[%s3 + $0x70] sm:$0xff]
      %v417 = vld [vmem:[%s3 + $0x78] sm:$0xff]
      %v418 = vld [vmem:[%s3 + $0x80] sm:$0xff]
      %v419 = vld [vmem:[%s3 + $0x88] sm:$0xff]
      %v420 = vld [vmem:[%s3 + $0x90] sm:$0xff]
      %v421 = vld [vmem:[%s3 + $0x98] sm:$0xff]
      %v422 = vld [vmem:[%s3 + $0xa0] sm:$0xff]
      %v423 = vld [vmem:[%s3 + $0xa8] sm:$0xff]
      %v424 = vld [vmem:[%s3 + $0xb0] sm:$0xff]
      %v425 = vld [vmem:[%s3 + $0xb8] sm:$0xff]
      %v426 = vld [vmem:[%s3 + $0xc0] sm:$0xff]
      %v427 = vld [vmem:[%s3 + $0xc8] sm:$0xff]
      %v428 = vld [vmem:[%s3 + $0xd0] sm:$0xff]
      %v429 = vld [vmem:[%s3 + $0xd8] sm:$0xff]
      %v430 = vld [vmem:[%s3 + $0xe0] sm:$0xff]
      %v431 = vld [vmem:[%s3 + $0xe8] sm:$0xff]
      %v432 = vld [vmem:[%s3 + $0xf0] sm:$0xff]
      %v433 = vld [vmem:[%s3 + $0xf8] sm:$0xff]
      %v434 = vld [vmem:[%s3 + $0x100] sm:$0xff]
      %v435 = vld [vmem:[%s3 + $0x108] sm:$0xff]
      %v436 = vld [vmem:[%s3 + $0x110] sm:$0xff]
      %v437 = vld [vmem:[%s3 + $0x118] sm:$0xff]
      %v438 = vld [vmem:[%s3 + $0x120] sm:$0xff]
      %v439 = vld [vmem:[%s3 + $0x128] sm:$0xff]
      %v440 = vld [vmem:[%s3 + $0x130] sm:$0xff]
      %v441 = vld [vmem:[%s3 + $0x138] sm:$0xff]
      %v442 = vld [vmem:[%s3 + $0x140] sm:$0xff]
      %v443 = vld [vmem:[%s3 + $0x148] sm:$0xff]
      %v444 = vld [vmem:[%s3 + $0x150] sm:$0xff]
      %v445 = vld [vmem:[%s3 + $0x158] sm:$0xff]
      %v446 = vld [vmem:[%s3 + $0x160] sm:$0xff]
      %v447 = vld [vmem:[%s3 + $0x168] sm:$0xff]
      %v448 = vld [vmem:[%s3 + $0x170] sm:$0xff]
      %v449 = vld [vmem:[%s3 + $0x178] sm:$0xff]
      %v450 = vld [vmem:[%s3 + $0x180] sm:$0xff]
      %v451 = vld [vmem:[%s3 + $0x188] sm:$0xff]
      %v452 = vld [vmem:[%s3 + $0x190] sm:$0xff]
      %v453 = vld [vmem:[%s3 + $0x198] sm:$0xff]
      %v454 = vld [vmem:[%s3 + $0x1a0] sm:$0xff]
      %v455 = vld [vmem:[%s3 + $0x1a8] sm:$0xff]
      %v456 = vld [vmem:[%s3 + $0x1b0] sm:$0xff]
      %v457 = vld [vmem:[%s3 + $0x1b8] sm:$0xff]
      %v458 = vld [vmem:[%s3 + $0x1c0] sm:$0xff]
      %v459 = vld [vmem:[%s3 + $0x1c8] sm:$0xff]
      %v460 = vld [vmem:[%s3 + $0x1d0] sm:$0xff]
      %v461 = vld [vmem:[%s3 + $0x1d8] sm:$0xff]
      %v462 = vld [vmem:[%s3 + $0x1e0] sm:$0xff]
      %v463 = vld [vmem:[%s3 + $0x1e8] sm:$0xff]
      %v464 = vld [vmem:[%s3 + $0x1f0] sm:$0xff]
      %v465 = vld [vmem:[%s3 + $0x1f8] sm:$0xff]
      %s466 = scalar_lea.vmem %s4, 2
      %v467 = vld [vmem:[%s466] ss:$4 sm:$0xff]
      %v469 = vlaneseq
      %v470 = vshrl.u32 %v469, 7
      %v471 = vsub.s32 0, %v470
      %v472 = vrot.slane %v467, %v471
      %v473 = vlaneseq
      %v474 = vshrl.u32 %v473, 7
      %v475 = vsub.s32 1, %v474
      %v476 = vrot.slane %v467, %v475
      %v477 = vlaneseq
      %v478 = vshrl.u32 %v477, 7
      %v479 = vsub.s32 2, %v478
      %v480 = vrot.slane %v467, %v479
      %v481 = vlaneseq
      %v482 = vshrl.u32 %v481, 7
      %v483 = vsub.s32 3, %v482
      %v484 = vrot.slane %v467, %v483
      %v485 = vlaneseq
      %v486 = vshrl.u32 %v485, 7
      %v487 = vsub.s32 4, %v486
      %v488 = vrot.slane %v467, %v487
      %v489 = vlaneseq
      %v490 = vshrl.u32 %v489, 7
      %v491 = vsub.s32 5, %v490
      %v492 = vrot.slane %v467, %v491
      %v493 = vlaneseq
      %v494 = vshrl.u32 %v493, 7
      %v495 = vsub.s32 6, %v494
      %v496 = vrot.slane %v467, %v495
      %v497 = vlaneseq
      %v498 = vshrl.u32 %v497, 7
      %v499 = vsub.s32 7, %v498
      %v500 = vrot.slane %v467, %v499
      %v573 = vunpack.c.l.b16 %v402
      %v574 = vunpack.c.h.b16 %v402
      %v575 = vunpack.c.l.b16 %v403
      %v576 = vunpack.c.h.b16 %v403
      %v577 = vunpack.c.l.b16 %v404
      %v578 = vunpack.c.h.b16 %v404
      %v579 = vunpack.c.l.b16 %v405
      %v580 = vunpack.c.h.b16 %v405
      %v581 = vunpack.c.l.b16 %v406
      %v582 = vunpack.c.h.b16 %v406
      %v583 = vunpack.c.l.b16 %v407
      %v584 = vunpack.c.h.b16 %v407
      %v585 = vunpack.c.l.b16 %v408
      %v586 = vunpack.c.h.b16 %v408
      %v587 = vunpack.c.l.b16 %v409
      %v588 = vunpack.c.h.b16 %v409
      %v589 = vunpack.c.l.b16 %v410
      %v590 = vunpack.c.h.b16 %v410
      %v591 = vunpack.c.l.b16 %v411
      %v592 = vunpack.c.h.b16 %v411
      %v593 = vunpack.c.l.b16 %v412
      %v594 = vunpack.c.h.b16 %v412
      %v595 = vunpack.c.l.b16 %v413
      %v596 = vunpack.c.h.b16 %v413
      %v597 = vunpack.c.l.b16 %v414
      %v598 = vunpack.c.h.b16 %v414
      %v599 = vunpack.c.l.b16 %v415
      %v600 = vunpack.c.h.b16 %v415
      %v601 = vunpack.c.l.b16 %v416
      %v602 = vunpack.c.h.b16 %v416
      %v603 = vunpack.c.l.b16 %v417
      %v604 = vunpack.c.h.b16 %v417
      %v605 = vunpack.c.l.b16 %v418
      %v606 = vunpack.c.h.b16 %v418
      %v607 = vunpack.c.l.b16 %v419
      %v608 = vunpack.c.h.b16 %v419
      %v609 = vunpack.c.l.b16 %v420
      %v610 = vunpack.c.h.b16 %v420
      %v611 = vunpack.c.l.b16 %v421
      %v612 = vunpack.c.h.b16 %v421
      %v613 = vunpack.c.l.b16 %v422
      %v614 = vunpack.c.h.b16 %v422
      %v615 = vunpack.c.l.b16 %v423
      %v616 = vunpack.c.h.b16 %v423
      %v617 = vunpack.c.l.b16 %v424
      %v618 = vunpack.c.h.b16 %v424
      %v619 = vunpack.c.l.b16 %v425
      %v620 = vunpack.c.h.b16 %v425
      %v621 = vunpack.c.l.b16 %v426
      %v622 = vunpack.c.h.b16 %v426
      %v623 = vunpack.c.l.b16 %v427
      %v624 = vunpack.c.h.b16 %v427
      %v625 = vunpack.c.l.b16 %v428
      %v626 = vunpack.c.h.b16 %v428
      %v627 = vunpack.c.l.b16 %v429
      %v628 = vunpack.c.h.b16 %v429
      %v629 = vunpack.c.l.b16 %v430
      %v630 = vunpack.c.h.b16 %v430
      %v631 = vunpack.c.l.b16 %v431
      %v632 = vunpack.c.h.b16 %v431
      %v633 = vunpack.c.l.b16 %v432
      %v634 = vunpack.c.h.b16 %v432
      %v635 = vunpack.c.l.b16 %v433
      %v636 = vunpack.c.h.b16 %v433
      %v637 = vunpack.c.l.b16 %v434
      %v638 = vunpack.c.h.b16 %v434
      %v639 = vunpack.c.l.b16 %v435
      %v640 = vunpack.c.h.b16 %v435
      %v641 = vunpack.c.l.b16 %v436
      %v642 = vunpack.c.h.b16 %v436
      %v643 = vunpack.c.l.b16 %v437
      %v644 = vunpack.c.h.b16 %v437
      %v645 = vunpack.c.l.b16 %v438
      %v646 = vunpack.c.h.b16 %v438
      %v647 = vunpack.c.l.b16 %v439
      %v648 = vunpack.c.h.b16 %v439
      %v649 = vunpack.c.l.b16 %v440
      %v650 = vunpack.c.h.b16 %v440
      %v651 = vunpack.c.l.b16 %v441
      %v652 = vunpack.c.h.b16 %v441
      %v653 = vunpack.c.l.b16 %v442
      %v654 = vunpack.c.h.b16 %v442
      %v655 = vunpack.c.l.b16 %v443
      %v656 = vunpack.c.h.b16 %v443
      %v657 = vunpack.c.l.b16 %v444
      %v658 = vunpack.c.h.b16 %v444
      %v659 = vunpack.c.l.b16 %v445
      %v660 = vunpack.c.h.b16 %v445
      %v661 = vunpack.c.l.b16 %v446
      %v662 = vunpack.c.h.b16 %v446
      %v663 = vunpack.c.l.b16 %v447
      %v664 = vunpack.c.h.b16 %v447
      %v665 = vunpack.c.l.b16 %v448
      %v666 = vunpack.c.h.b16 %v448
      %v667 = vunpack.c.l.b16 %v449
      %v668 = vunpack.c.h.b16 %v449
      %v669 = vunpack.c.l.b16 %v450
      %v670 = vunpack.c.h.b16 %v450
      %v671 = vunpack.c.l.b16 %v451
      %v672 = vunpack.c.h.b16 %v451
      %v673 = vunpack.c.l.b16 %v452
      %v674 = vunpack.c.h.b16 %v452
      %v675 = vunpack.c.l.b16 %v453
      %v676 = vunpack.c.h.b16 %v453
      %v677 = vunpack.c.l.b16 %v454
      %v678 = vunpack.c.h.b16 %v454
      %v679 = vunpack.c.l.b16 %v455
      %v680 = vunpack.c.h.b16 %v455
      %v681 = vunpack.c.l.b16 %v456
      %v682 = vunpack.c.h.b16 %v456
      %v683 = vunpack.c.l.b16 %v457
      %v684 = vunpack.c.h.b16 %v457
      %v685 = vunpack.c.l.b16 %v458
      %v686 = vunpack.c.h.b16 %v458
      %v687 = vunpack.c.l.b16 %v459
      %v688 = vunpack.c.h.b16 %v459
      %v689 = vunpack.c.l.b16 %v460
      %v690 = vunpack.c.h.b16 %v460
      %v691 = vunpack.c.l.b16 %v461
      %v692 = vunpack.c.h.b16 %v461
      %v693 = vunpack.c.l.b16 %v462
      %v694 = vunpack.c.h.b16 %v462
      %v695 = vunpack.c.l.b16 %v463
      %v696 = vunpack.c.h.b16 %v463
      %v697 = vunpack.c.l.b16 %v464
      %v698 = vunpack.c.h.b16 %v464
      %v699 = vunpack.c.l.b16 %v465
      %v700 = vunpack.c.h.b16 %v465
      %v701 = vpack.c.b16 %v581, %v573
      %v702 = vpack.c.b16 %v582, %v574
      %v703 = vpack.c.b16 %v583, %v575
      %v704 = vpack.c.b16 %v584, %v576
      %v705 = vpack.c.b16 %v585, %v577
      %v706 = vpack.c.b16 %v586, %v578
      %v707 = vpack.c.b16 %v587, %v579
      %v708 = vpack.c.b16 %v588, %v580
      %v709 = vpack.c.b16 %v597, %v589
      %v710 = vpack.c.b16 %v598, %v590
      %v711 = vpack.c.b16 %v599, %v591
      %v712 = vpack.c.b16 %v600, %v592
      %v713 = vpack.c.b16 %v601, %v593
      %v714 = vpack.c.b16 %v602, %v594
      %v715 = vpack.c.b16 %v603, %v595
      %v716 = vpack.c.b16 %v604, %v596
      %v717 = vpack.c.b16 %v613, %v605
      %v718 = vpack.c.b16 %v614, %v606
      %v719 = vpack.c.b16 %v615, %v607
      %v720 = vpack.c.b16 %v616, %v608
      %v721 = vpack.c.b16 %v617, %v609
      %v722 = vpack.c.b16 %v618, %v610
      %v723 = vpack.c.b16 %v619, %v611
      %v724 = vpack.c.b16 %v620, %v612
      %v725 = vpack.c.b16 %v629, %v621
      %v726 = vpack.c.b16 %v630, %v622
      %v727 = vpack.c.b16 %v631, %v623
      %v728 = vpack.c.b16 %v632, %v624
      %v729 = vpack.c.b16 %v633, %v625
      %v730 = vpack.c.b16 %v634, %v626
      %v731 = vpack.c.b16 %v635, %v627
      %v732 = vpack.c.b16 %v636, %v628
      %v733 = vpack.c.b16 %v645, %v637
      %v734 = vpack.c.b16 %v646, %v638
      %v735 = vpack.c.b16 %v647, %v639
      %v736 = vpack.c.b16 %v648, %v640
      %v737 = vpack.c.b16 %v649, %v641
      %v738 = vpack.c.b16 %v650, %v642
      %v739 = vpack.c.b16 %v651, %v643
      %v740 = vpack.c.b16 %v652, %v644
      %v741 = vpack.c.b16 %v661, %v653
      %v742 = vpack.c.b16 %v662, %v654
      %v743 = vpack.c.b16 %v663, %v655
      %v744 = vpack.c.b16 %v664, %v656
      %v745 = vpack.c.b16 %v665, %v657
      %v746 = vpack.c.b16 %v666, %v658
      %v747 = vpack.c.b16 %v667, %v659
      %v748 = vpack.c.b16 %v668, %v660
      %v749 = vpack.c.b16 %v677, %v669
      %v750 = vpack.c.b16 %v678, %v670
      %v751 = vpack.c.b16 %v679, %v671
      %v752 = vpack.c.b16 %v680, %v672
      %v753 = vpack.c.b16 %v681, %v673
      %v754 = vpack.c.b16 %v682, %v674
      %v755 = vpack.c.b16 %v683, %v675
      %v756 = vpack.c.b16 %v684, %v676
      %v757 = vpack.c.b16 %v693, %v685
      %v758 = vpack.c.b16 %v694, %v686
      %v759 = vpack.c.b16 %v695, %v687
      %v760 = vpack.c.b16 %v696, %v688
      %v761 = vpack.c.b16 %v697, %v689
      %v762 = vpack.c.b16 %v698, %v690
      %v763 = vpack.c.b16 %v699, %v691
      %v764 = vpack.c.b16 %v700, %v692
      %829 = vmatprep.subr.bf16.mxu0 %v702
      %830 = vmatpush1.bf16.msra.mxu0 %v701
      %831 = vmatprep.subr.bf16.mxu0 %v710
      %832 = vmatpush1.bf16.msra.mxu0 %v709
      %833 = vmatprep.subr.bf16.mxu0 %v718
      %834 = vmatpush1.bf16.msra.mxu0 %v717
      %835 = vmatprep.subr.bf16.mxu0 %v726
      %836 = vmatpush1.bf16.msra.mxu0 %v725
      %837 = vmatprep.subr.bf16.mxu0 %v734
      %838 = vmatpush1.bf16.msra.mxu0 %v733
      %839 = vmatprep.subr.bf16.mxu0 %v742
      %840 = vmatpush1.bf16.msra.mxu0 %v741
      %841 = vmatprep.subr.bf16.mxu0 %v750
      %842 = vmatpush1.bf16.msra.mxu0 %v749
      %843 = vmatprep.subr.bf16.mxu0 %v758
      %844 = vmatpush1.bf16.msra.mxu0 %v757
      %845 = vmatprep.subr.bf16.mxu0 0
      %846 = vmatpush1.bf16.msra.mxu0 0
      %847 = vmatprep.subr.bf16.mxu0 0
      %848 = vmatpush1.bf16.msra.mxu0 0
      %849 = vmatprep.subr.bf16.mxu0 0
      %850 = vmatpush1.bf16.msra.mxu0 0
      %851 = vmatprep.subr.bf16.mxu0 0
      %852 = vmatpush1.bf16.msra.mxu0 0
      %853 = vmatprep.subr.bf16.mxu0 0
      %854 = vmatpush1.bf16.msra.mxu0 0
      %855 = vmatprep.subr.bf16.mxu0 0
      %856 = vmatpush1.bf16.msra.mxu0 0
      %857 = vmatprep.subr.bf16.mxu0 0
      %858 = vmatpush1.bf16.msra.mxu0 0
      %859 = vmatprep.subr.bf16.mxu0 0
      %860 = vmatpush1.bf16.msra.mxu0 0
      %861 = vmatprep.mubr.bf16.mxu0 0
      %862 = vmatmul.mubr.bf16.gmra.mrb[0].mxu0 %v401
      %v863 = vpop.f32.mrb[0].mxu0
      %v864 = vadd.f32 %v472, %v863
      %v865 = vpop.f32.mrb[0].mxu0
      %v866 = vadd.f32 %v476, %v865
      %v867 = vpop.f32.mrb[0].mxu0
      %v868 = vadd.f32 %v472, %v867
      %v869 = vpop.f32.mrb[0].mxu0
      %v870 = vadd.f32 %v476, %v869
      %871 = vdwg.mxu0
      %872 = vmatprep.subr.bf16.mxu0 %v704
      %873 = vmatpush1.bf16.msra.mxu0 %v703
      %874 = vmatprep.subr.bf16.mxu0 %v712
      %875 = vmatpush1.bf16.msra.mxu0 %v711
      %876 = vmatprep.subr.bf16.mxu0 %v720
      %877 = vmatpush1.bf16.msra.mxu0 %v719
      %878 = vmatprep.subr.bf16.mxu0 %v728
      %879 = vmatpush1.bf16.msra.mxu0 %v727
      %880 = vmatprep.subr.bf16.mxu0 %v736
      %881 = vmatpush1.bf16.msra.mxu0 %v735
      %882 = vmatprep.subr.bf16.mxu0 %v744
      %883 = vmatpush1.bf16.msra.mxu0 %v743
      %884 = vmatprep.subr.bf16.mxu0 %v752
      %885 = vmatpush1.bf16.msra.mxu0 %v751
      %886 = vmatprep.subr.bf16.mxu0 %v760
      %887 = vmatpush1.bf16.msra.mxu0 %v759
      %888 = vmatprep.subr.bf16.mxu0 0
      %889 = vmatpush1.bf16.msra.mxu0 0
      %890 = vmatprep.subr.bf16.mxu0 0
      %891 = vmatpush1.bf16.msra.mxu0 0
      %892 = vmatprep.subr.bf16.mxu0 0
      %893 = vmatpush1.bf16.msra.mxu0 0
      %894 = vmatprep.subr.bf16.mxu0 0
      %895 = vmatpush1.bf16.msra.mxu0 0
      %896 = vmatprep.subr.bf16.mxu0 0
      %897 = vmatpush1.bf16.msra.mxu0 0
      %898 = vmatprep.subr.bf16.mxu0 0
      %899 = vmatpush1.bf16.msra.mxu0 0
      %900 = vmatprep.subr.bf16.mxu0 0
      %901 = vmatpush1.bf16.msra.mxu0 0
      %902 = vmatprep.subr.bf16.mxu0 0
      %903 = vmatpush1.bf16.msra.mxu0 0
      %904 = vmatprep.mubr.bf16.mxu0 0
      %905 = vmatmul.mubr.bf16.gmra.mrb[0].mxu0 %v401
      %v906 = vpop.f32.mrb[0].mxu0
      %v907 = vadd.f32 %v480, %v906
      %v908 = vpop.f32.mrb[0].mxu0
      %v909 = vadd.f32 %v484, %v908
      %v910 = vpop.f32.mrb[0].mxu0
      %v911 = vadd.f32 %v480, %v910
      %v912 = vpop.f32.mrb[0].mxu0
      %v913 = vadd.f32 %v484, %v912
      %914 = vdwg.mxu0
      %915 = vmatprep.subr.bf16.mxu0 %v706
      %916 = vmatpush1.bf16.msra.mxu0 %v705
      %917 = vmatprep.subr.bf16.mxu0 %v714
      %918 = vmatpush1.bf16.msra.mxu0 %v713
      %919 = vmatprep.subr.bf16.mxu0 %v722
      %920 = vmatpush1.bf16.msra.mxu0 %v721
      %921 = vmatprep.subr.bf16.mxu0 %v730
      %922 = vmatpush1.bf16.msra.mxu0 %v729
      %923 = vmatprep.subr.bf16.mxu0 %v738
      %924 = vmatpush1.bf16.msra.mxu0 %v737
      %925 = vmatprep.subr.bf16.mxu0 %v746
      %926 = vmatpush1.bf16.msra.mxu0 %v745
      %927 = vmatprep.subr.bf16.mxu0 %v754
      %928 = vmatpush1.bf16.msra.mxu0 %v753
      %929 = vmatprep.subr.bf16.mxu0 %v762
      %930 = vmatpush1.bf16.msra.mxu0 %v761
      %931 = vmatprep.subr.bf16.mxu0 0
      %932 = vmatpush1.bf16.msra.mxu0 0
      %933 = vmatprep.subr.bf16.mxu0 0
      %934 = vmatpush1.bf16.msra.mxu0 0
      %935 = vmatprep.subr.bf16.mxu0 0
      %936 = vmatpush1.bf16.msra.mxu0 0
      %937 = vmatprep.subr.bf16.mxu0 0
      %938 = vmatpush1.bf16.msra.mxu0 0
      %939 = vmatprep.subr.bf16.mxu0 0
      %940 = vmatpush1.bf16.msra.mxu0 0
      %941 = vmatprep.subr.bf16.mxu0 0
      %942 = vmatpush1.bf16.msra.mxu0 0
      %943 = vmatprep.subr.bf16.mxu0 0
      %944 = vmatpush1.bf16.msra.mxu0 0
      %945 = vmatprep.subr.bf16.mxu0 0
      %946 = vmatpush1.bf16.msra.mxu0 0
      %947 = vmatprep.mubr.bf16.mxu0 0
      %948 = vmatmul.mubr.bf16.gmra.mrb[0].mxu0 %v401
      %v949 = vpop.f32.mrb[0].mxu0
      %v950 = vadd.f32 %v488, %v949
      %v951 = vpop.f32.mrb[0].mxu0
      %v952 = vadd.f32 %v492, %v951
      %v953 = vpop.f32.mrb[0].mxu0
      %v954 = vadd.f32 %v488, %v953
      %v955 = vpop.f32.mrb[0].mxu0
      %v956 = vadd.f32 %v492, %v955
      %957 = vdwg.mxu0
      %958 = vmatprep.subr.bf16.mxu0 %v708
      %959 = vmatpush1.bf16.msra.mxu0 %v707
      %960 = vmatprep.subr.bf16.mxu0 %v716
      %961 = vmatpush1.bf16.msra.mxu0 %v715
      %962 = vmatprep.subr.bf16.mxu0 %v724
      %963 = vmatpush1.bf16.msra.mxu0 %v723
      %964 = vmatprep.subr.bf16.mxu0 %v732
      %965 = vmatpush1.bf16.msra.mxu0 %v731
      %966 = vmatprep.subr.bf16.mxu0 %v740
      %967 = vmatpush1.bf16.msra.mxu0 %v739
      %968 = vmatprep.subr.bf16.mxu0 %v748
      %969 = vmatpush1.bf16.msra.mxu0 %v747
      %970 = vmatprep.subr.bf16.mxu0 %v756
      %971 = vmatpush1.bf16.msra.mxu0 %v755
      %972 = vmatprep.subr.bf16.mxu0 %v764
      %973 = vmatpush1.bf16.msra.mxu0 %v763
      %974 = vmatprep.subr.bf16.mxu0 0
      %975 = vmatpush1.bf16.msra.mxu0 0
      %976 = vmatprep.subr.bf16.mxu0 0
      %977 = vmatpush1.bf16.msra.mxu0 0
      %978 = vmatprep.subr.bf16.mxu0 0
      %979 = vmatpush1.bf16.msra.mxu0 0
      %980 = vmatprep.subr.bf16.mxu0 0
      %981 = vmatpush1.bf16.msra.mxu0 0
      %982 = vmatprep.subr.bf16.mxu0 0
      %983 = vmatpush1.bf16.msra.mxu0 0
      %984 = vmatprep.subr.bf16.mxu0 0
      %985 = vmatpush1.bf16.msra.mxu0 0
      %986 = vmatprep.subr.bf16.mxu0 0
      %987 = vmatpush1.bf16.msra.mxu0 0
      %988 = vmatprep.subr.bf16.mxu0 0
      %989 = vmatpush1.bf16.msra.mxu0 0
      %990 = vmatprep.mubr.bf16.mxu0 0
      %991 = vmatmul.mubr.bf16.gmra.mrb[0].mxu0 %v401
      %v992 = vpop.f32.mrb[0].mxu0
      %v993 = vadd.f32 %v496, %v992
      %v994 = vpop.f32.mrb[0].mxu0
      %v995 = vadd.f32 %v500, %v994
      %v996 = vpop.f32.mrb[0].mxu0
      %v997 = vadd.f32 %v496, %v996
      %v998 = vpop.f32.mrb[0].mxu0
      %v999 = vadd.f32 %v500, %v998
      %1000 = vdwg.mxu0
      %v1001 = vmax.f32 %v864, 0.0
      %v1002 = vmax.f32 %v866, 0.0
      %v1003 = vmax.f32 %v907, 0.0
      %v1004 = vmax.f32 %v909, 0.0
      %v1005 = vmax.f32 %v950, 0.0
      %v1006 = vmax.f32 %v952, 0.0
      %v1007 = vmax.f32 %v993, 0.0
      %v1008 = vmax.f32 %v995, 0.0
      %v1009 = vmax.f32 %v868, 0.0
      %v1010 = vmax.f32 %v870, 0.0
      %v1011 = vmax.f32 %v911, 0.0
      %v1012 = vmax.f32 %v913, 0.0
      %v1013 = vmax.f32 %v954, 0.0
      %v1014 = vmax.f32 %v956, 0.0
      %v1015 = vmax.f32 %v997, 0.0
      %v1016 = vmax.f32 %v999, 0.0
      %v1017 = vmax.f32 %v1001, %v1009
      %v1018 = vrot.slane %v1017, 4
      %v1019 = vmax.f32 %v1017, %v1018
      %v1020 = vrot.slane %v1019, 2
      %v1021 = vmax.f32 %v1019, %v1020
      %v1022 = vrot.slane %v1021, 1
      %v1023 = vmax.f32 %v1021, %v1022
      %v1024 = vmax.f32 %v1002, %v1010
      %v1025 = vrot.slane %v1024, 4
      %v1026 = vmax.f32 %v1024, %v1025
      %v1027 = vrot.slane %v1026, 2
      %v1028 = vmax.f32 %v1026, %v1027
      %v1029 = vrot.slane %v1028, 1
      %v1030 = vmax.f32 %v1028, %v1029
      %v1031 = vmax.f32 %v1003, %v1011
      %v1032 = vrot.slane %v1031, 4
      %v1033 = vmax.f32 %v1031, %v1032
      %v1034 = vrot.slane %v1033, 2
      %v1035 = vmax.f32 %v1033, %v1034
      %v1036 = vrot.slane %v1035, 1
      %v1037 = vmax.f32 %v1035, %v1036
      %v1038 = vmax.f32 %v1004, %v1012
      %v1039 = vrot.slane %v1038, 4
      %v1040 = vmax.f32 %v1038, %v1039
      %v1041 = vrot.slane %v1040, 2
      %v1042 = vmax.f32 %v1040, %v1041
      %v1043 = vrot.slane %v1042, 1
      %v1044 = vmax.f32 %v1042, %v1043
      %v1045 = vmax.f32 %v1005, %v1013
      %v1046 = vrot.slane %v1045, 4
      %v1047 = vmax.f32 %v1045, %v1046
      %v1048 = vrot.slane %v1047, 2
      %v1049 = vmax.f32 %v1047, %v1048
      %v1050 = vrot.slane %v1049, 1
      %v1051 = vmax.f32 %v1049, %v1050
      %v1052 = vmax.f32 %v1006, %v1014
      %v1053 = vrot.slane %v1052, 4
      %v1054 = vmax.f32 %v1052, %v1053
      %v1055 = vrot.slane %v1054, 2
      %v1056 = vmax.f32 %v1054, %v1055
      %v1057 = vrot.slane %v1056, 1
      %v1058 = vmax.f32 %v1056, %v1057
      %v1059 = vmax.f32 %v1007, %v1015
      %v1060 = vrot.slane %v1059, 4
      %v1061 = vmax.f32 %v1059, %v1060
      %v1062 = vrot.slane %v1061, 2
      %v1063 = vmax.f32 %v1061, %v1062
      %v1064 = vrot.slane %v1063, 1
      %v1065 = vmax.f32 %v1063, %v1064
      %v1066 = vmax.f32 %v1008, %v1016
      %v1067 = vrot.slane %v1066, 4
      %v1068 = vmax.f32 %v1066, %v1067
      %v1069 = vrot.slane %v1068, 2
      %v1070 = vmax.f32 %v1068, %v1069
      %v1071 = vrot.slane %v1070, 1
      %v1072 = vmax.f32 %v1070, %v1071
      %p1073 = scmp.eq.s32.totalorder %s21, 0
      // Predicated region
      $region41: #{actor_multimodal_forward.2} parent=39 // pred_check
        %p1074 = pneg %p1073
      $region42: #{actor_multimodal_forward.2} parent=39 // pred_check_branch
        %1076 = sbr.rel (%p1074) target = $region44
      $region43: #{actor_multimodal_forward.2} parent=39 // pred_region
        %v1085 = vcombine.low %v1023, %v1030
        %v1086 = vcombine.low %v1037, %v1044
        %v1087 = vcombine.low %v1051, %v1058
        %v1088 = vcombine.low %v1065, %v1072
        %v1090 = vunpack.c.l.s4 1966171168
        %v1091 = vunpack.c.0.s8 %v1090
        %v1092 = vlaneseq
        %v1093 = vshrl.u32 %v1092, 7
        %v1094 = vsub.s32 %v1091, %v1093
        %v1095 = vrot.slane %v1085, %v1094
        %v1097 = vunpack.c.l.s4 1966171168
        %v1098 = vunpack.c.0.s8 %v1097
        %v1099 = vlaneseq
        %v1100 = vshrl.u32 %v1099, 7
        %v1101 = vsub.s32 %v1098, %v1100
        %v1102 = vrot.slane %v1086, %v1101
        %v1104 = vunpack.c.l.s4 1966171168
        %v1105 = vunpack.c.0.s8 %v1104
        %v1106 = vlaneseq
        %v1107 = vshrl.u32 %v1106, 7
        %v1108 = vsub.s32 %v1105, %v1107
        %v1109 = vrot.slane %v1087, %v1108
        %v1111 = vunpack.c.l.s4 1966171168
        %v1112 = vunpack.c.0.s8 %v1111
        %v1113 = vlaneseq
        %v1114 = vshrl.u32 %v1113, 7
        %v1115 = vsub.s32 %v1112, %v1114
        %v1116 = vrot.slane %v1088, %v1115
        %v1117 = vcombine.low %v1095, %v1102
        %v1118 = vcombine.low %v1109, %v1116
        %v1120 = vunpack.c.l.s4 1966171168
        %v1121 = vunpack.c.0.s8 %v1120
        %v1122 = vlaneseq
        %v1123 = vshrl.u32 %v1122, 7
        %v1124 = vsub.s32 %v1121, %v1123
        %v1125 = vrot.slane %v1117, %v1124
        %v1127 = vunpack.c.l.s4 1966171168
        %v1128 = vunpack.c.0.s8 %v1127
        %v1129 = vlaneseq
        %v1130 = vshrl.u32 %v1129, 7
        %v1131 = vsub.s32 %v1128, %v1130
        %v1132 = vrot.slane %v1118, %v1131
        %v1133 = vcombine.low %v1125, %v1132
        %1135 = vst [vmem:[%s250] sm:$0xff] %v1133
      $region44: #{actor_multimodal_forward.2} parent=39 // pred_fallthru
        _
      %p1136 = scmp.gt.s32.totalorder %s21, 0
      // Predicated region
      $region45: #{actor_multimodal_forward.2} parent=39 // pred_check
        %p1137 = pneg %p1136
      $region46: #{actor_multimodal_forward.2} parent=39 // pred_check_branch
        %1139 = sbr.rel (%p1137) target = $region48
      $region47: #{actor_multimodal_forward.2} parent=39 // pred_region
        %v1140 = vld [vmem:[%s250] sm:$0xff]
        %v1149 = vcombine.low %v1023, %v1030
        %v1150 = vcombine.low %v1037, %v1044
        %v1151 = vcombine.low %v1051, %v1058
        %v1152 = vcombine.low %v1065, %v1072
        %v1154 = vunpack.c.l.s4 1966171168
        %v1155 = vunpack.c.0.s8 %v1154
        %v1156 = vlaneseq
        %v1157 = vshrl.u32 %v1156, 7
        %v1158 = vsub.s32 %v1155, %v1157
        %v1159 = vrot.slane %v1149, %v1158
        %v1161 = vunpack.c.l.s4 1966171168
        %v1162 = vunpack.c.0.s8 %v1161
        %v1163 = vlaneseq
        %v1164 = vshrl.u32 %v1163, 7
        %v1165 = vsub.s32 %v1162, %v1164
        %v1166 = vrot.slane %v1150, %v1165
        %v1168 = vunpack.c.l.s4 1966171168
        %v1169 = vunpack.c.0.s8 %v1168
        %v1170 = vlaneseq
        %v1171 = vshrl.u32 %v1170, 7
        %v1172 = vsub.s32 %v1169, %v1171
        %v1173 = vrot.slane %v1151, %v1172
        %v1175 = vunpack.c.l.s4 1966171168
        %v1176 = vunpack.c.0.s8 %v1175
        %v1177 = vlaneseq
        %v1178 = vshrl.u32 %v1177, 7
        %v1179 = vsub.s32 %v1176, %v1178
        %v1180 = vrot.slane %v1152, %v1179
        %v1181 = vcombine.low %v1159, %v1166
        %v1182 = vcombine.low %v1173, %v1180
        %v1184 = vunpack.c.l.s4 1966171168
        %v1185 = vunpack.c.0.s8 %v1184
        %v1186 = vlaneseq
        %v1187 = vshrl.u32 %v1186, 7
        %v1188 = vsub.s32 %v1185, %v1187
        %v1189 = vrot.slane %v1181, %v1188
        %v1191 = vunpack.c.l.s4 1966171168
        %v1192 = vunpack.c.0.s8 %v1191
        %v1193 = vlaneseq
        %v1194 = vshrl.u32 %v1193, 7
        %v1195 = vsub.s32 %v1192, %v1194
        %v1196 = vrot.slane %v1182, %v1195
        %v1197 = vcombine.low %v1189, %v1196
        %v1199 = vmax.f32 %v1140, %v1197
        %1200 = vst [vmem:[%s250] sm:$0xff] %v1199
      $region48: #{actor_multimodal_forward.2} parent=39 // pred_fallthru
        _
      %p1201 = scmp.lt.s32.totalorder %s20, 1
      %s1202 = scalar_select %p1201, %s20, 1
      %s1203 = smul.addr %s1202, 8
      %s1204 = scalar_lea.vmem %s5, %s1203
      // Predicated region
      $region49: #{actor_multimodal_forward.2} parent=39 // pred_check
        %p1205 = pneg %p158
      $region50: #{actor_multimodal_forward.2} parent=39 // pred_check_branch
        %1207 = sbr.rel (%p1205) target = $region52
      $region51: #{actor_multimodal_forward.2} parent=39 // pred_region
        _
      $region52: #{actor_multimodal_forward.2} parent=39 // pred_fallthru
        _
    $region40: #{actor_multimodal_forward.2} parent=5 // pred_fallthru
      _
    %p1208 = scmp.le.s32.totalorder 2, %s11
    // Predicated region
    $region53: #{actor_multimodal_forward.2} parent=5 // pred_check
      %p1209 = pneg %p1208
    $region54: #{actor_multimodal_forward.2} parent=5 // pred_check_branch
      %1211 = sbr.rel (%p1209) target = $region56
    $region55: #{actor_multimodal_forward.2} parent=5 // pred_region
      %s1212 = ssub.s32 %s11, 2
      // Predicated region
      $region57: #{actor_multimodal_forward.2} parent=55 // pred_check
        %p1213 = pneg %p164
      $region58: #{actor_multimodal_forward.2} parent=55 // pred_check_branch
        %1215 = sbr.rel (%p1213) target = $region60
      $region59: #{actor_multimodal_forward.2} parent=55 // pred_region
        %p1216 = scmp.lt.s32.totalorder %s22, 1
        %s1217 = scalar_select %p1216, %s22, 1
        %s1218 = smul.addr %s1217, 8
        %s1219 = scalar_lea.vmem %s5, %s1218
      $region60: #{actor_multimodal_forward.2} parent=55 // pred_fallthru
        _
    $region56: #{actor_multimodal_forward.2} parent=5 // pred_fallthru
      _
  $region6: #{actor_multimodal_forward.2} parent=0 // loop_footer
    %s15 = sadd.s32 1, %s11
  $region7: #{actor_multimodal_forward.2} parent=0 // loop_footer_branch
    %10 = sbr.rel target = $region3
  $region8: #{actor_multimodal_forward.2} parent=0 // loop_exit
    _

// kernel: actor_multimodal_forward.3
$region0: #{actor_multimodal_forward.3}
  #allocation0 [shape = 'u32[]', space=smem, size = 0x4, offset = 0x4, fixed_abs, tag = 'smem constant byte address 0x4 - core index']
  #allocation1 [shape = 'u32[144,128]{1,0:T(1,128)}', space=vmem, size = 0x12000, scoped, tag = 'internal scratch']
  %s0 = inlined_call_operand.vmem [shape: bf16[2,1024], index: 0, kind: input, shape index: {}]
  %s1 = inlined_call_operand.vmem [shape: bf16[2,8], index: 1, kind: input, shape index: {}]
  %s2 = inlined_call_operand.vmem [shape: bf16[8,128], index: 2, kind: input, shape index: {}]
  %s3 = inlined_call_operand.vmem [shape: bf16[128,200], index: 3, kind: input, shape index: {}]
  %s4 = inlined_call_operand.vmem [shape: bf16[1024,512], index: 4, kind: input, shape index: {}]
  %s5 = inlined_call_operand.vmem [shape: bf16[200,512], index: 5, kind: input, shape index: {}]
  %s6 = inlined_call_operand.vmem [shape: bf16[512,128], index: 6, kind: input, shape index: {}]
  %s7 = inlined_call_operand.vmem [shape: f32[12,512], index: 7, kind: input, shape index: {}]
  %s8 = inlined_call_operand.hbm [shape: f32[2,128], index: 8, kind: output, shape index: {}]
  %s9 = sld [smem:[#allocation0]]
  $region42: #{actor_multimodal_forward.3} parent=0
    _
  %s11 = ssub.s32 1, %s9
  %s12 = scalar_select 0, %s11, %s9
  $region1: #{actor_multimodal_forward.3} parent=0
    #allocation2 [shape = 'u8[1024]{0}', space=vmem, size = 0x400, scoped, tag = 'output window, operand 0, single buffered']
    #allocation3 [shape = 's32[1]{0}', space=sflag, size = 0x4, scoped, tag = 'scoped memory for actor_multimodal_forward.3']
    %13 = vsyncpa [#allocation3], 0
    // Predicated region
    $region2: #{actor_multimodal_forward.3} parent=1 // pred_check
      _
    $region3: #{actor_multimodal_forward.3} parent=1 // pred_check_branch
      %15 = sbr.rel (0) target = $region5
    $region4: #{actor_multimodal_forward.3} parent=1 // pred_region
      _
    $region5: #{actor_multimodal_forward.3} parent=1 // pred_fallthru
      _
    // Predicated region
    $region6: #{actor_multimodal_forward.3} parent=1 // pred_check
      _
    $region7: #{actor_multimodal_forward.3} parent=1 // pred_check_branch
      %17 = sbr.rel (0) target = $region9
    $region8: #{actor_multimodal_forward.3} parent=1 // pred_region
      _
    $region9: #{actor_multimodal_forward.3} parent=1 // pred_fallthru
      _
    // Predicated region
    $region10: #{actor_multimodal_forward.3} parent=1 // pred_check
      _
    $region11: #{actor_multimodal_forward.3} parent=1 // pred_check_branch
      %19 = sbr.rel (0) target = $region13
    $region12: #{actor_multimodal_forward.3} parent=1 // pred_region
      _
    $region13: #{actor_multimodal_forward.3} parent=1 // pred_fallthru
      _
    // Predicated region
    $region14: #{actor_multimodal_forward.3} parent=1 // pred_check
      _
    $region15: #{actor_multimodal_forward.3} parent=1 // pred_check_branch
      %21 = sbr.rel (0) target = $region17
    $region16: #{actor_multimodal_forward.3} parent=1 // pred_region
      _
    $region17: #{actor_multimodal_forward.3} parent=1 // pred_fallthru
      _
    // Predicated region
    $region18: #{actor_multimodal_forward.3} parent=1 // pred_check
      _
    $region19: #{actor_multimodal_forward.3} parent=1 // pred_check_branch
      %23 = sbr.rel (0) target = $region21
    $region20: #{actor_multimodal_forward.3} parent=1 // pred_region
      _
    $region21: #{actor_multimodal_forward.3} parent=1 // pred_fallthru
      _
    // Predicated region
    $region22: #{actor_multimodal_forward.3} parent=1 // pred_check
      _
    $region23: #{actor_multimodal_forward.3} parent=1 // pred_check_branch
      %25 = sbr.rel (0) target = $region25
    $region24: #{actor_multimodal_forward.3} parent=1 // pred_region
      _
    $region25: #{actor_multimodal_forward.3} parent=1 // pred_fallthru
      _
    // Predicated region
    $region26: #{actor_multimodal_forward.3} parent=1 // pred_check
      _
    $region27: #{actor_multimodal_forward.3} parent=1 // pred_check_branch
      %27 = sbr.rel (0) target = $region29
    $region28: #{actor_multimodal_forward.3} parent=1 // pred_region
      _
    $region29: #{actor_multimodal_forward.3} parent=1 // pred_fallthru
      _
    // Predicated region
    $region30: #{actor_multimodal_forward.3} parent=1 // pred_check
      _
    $region31: #{actor_multimodal_forward.3} parent=1 // pred_check_branch
      %29 = sbr.rel (0) target = $region33
    $region32: #{actor_multimodal_forward.3} parent=1 // pred_region
      _
    $region33: #{actor_multimodal_forward.3} parent=1 // pred_fallthru
      _
    %v31 = vld [vmem:[%s1] sm:$0x1]
    %v32 = vld [vmem:[%s2] sm:$0xf]
    %v33 = vld [vmem:[%s7] ss:$0 sm:$0xff]
    %vm34 = vcmask 64512
    %v36 = vsel %vm34, %v31, 0
    %vm38 = vcmask 1043456
    %v40 = vsel %vm38, %v32, 0
    %42 = vmatprep.subr.bf16.mxu0 0
    %43 = vmatpush1.bf16.msra.mxu0 %v40
    %44 = vmatprep.subr.bf16.mxu0 0
    %45 = vmatpush1.bf16.msra.mxu0 0
    %46 = vmatprep.subr.bf16.mxu0 0
    %47 = vmatpush1.bf16.msra.mxu0 0
    %48 = vmatprep.subr.bf16.mxu0 0
    %49 = vmatpush1.bf16.msra.mxu0 0
    %50 = vmatprep.subr.bf16.mxu0 0
    %51 = vmatpush1.bf16.msra.mxu0 0
    %52 = vmatprep.subr.bf16.mxu0 0
    %53 = vmatpush1.bf16.msra.mxu0 0
    %54 = vmatprep.subr.bf16.mxu0 0
    %55 = vmatpush1.bf16.msra.mxu0 0
    %56 = vmatprep.subr.bf16.mxu0 0
    %57 = vmatpush1.bf16.msra.mxu0 0
    %58 = vmatprep.subr.bf16.mxu0 0
    %59 = vmatpush1.bf16.msra.mxu0 0
    %60 = vmatprep.subr.bf16.mxu0 0
    %61 = vmatpush1.bf16.msra.mxu0 0
    %62 = vmatprep.subr.bf16.mxu0 0
    %63 = vmatpush1.bf16.msra.mxu0 0
    %64 = vmatprep.subr.bf16.mxu0 0
    %65 = vmatpush1.bf16.msra.mxu0 0
    %66 = vmatprep.subr.bf16.mxu0 0
    %67 = vmatpush1.bf16.msra.mxu0 0
    %68 = vmatprep.subr.bf16.mxu0 0
    %69 = vmatpush1.bf16.msra.mxu0 0
    %70 = vmatprep.subr.bf16.mxu0 0
    %71 = vmatpush1.bf16.msra.mxu0 0
    %72 = vmatprep.subr.bf16.mxu0 0
    %73 = vmatpush1.bf16.msra.mxu0 0
    %74 = vmatprep.mubr.bf16.mxu0 0
    %75 = vmatmul.mubr.bf16.gmra.mrb[0].mxu0 %v36
    %v76 = vpop.f32.mrb[0].mxu0
    %v77 = vadd.f32 %v33, %v76
    %v78 = vpop.f32.mrb[0].mxu0
    %v79 = vpop.f32.mrb[0].mxu0
    %v80 = vpop.f32.mrb[0].mxu0
    %81 = vdwg.mxu0
    %v82 = vmax.f32 %v77, 0.0
    %v83 = vld [vmem:[%s7 + $0x1] ss:$0 sm:$0xff]
    %v84 = vld [vmem:[%s7 + $0x2] ss:$0 sm:$0xff]
    %vm85 = vcmask 1041408
    %v86 = vsel %vm85, %v82, 0.0
    %87 = vadd.xlane.f32.xlu0 %v86
    %v88 = vpop.xlane.xlu0 %87
    %v89 = vrcp.pop 128.0
    %v90 = vmul.f32 %v88, %v89
    %v91 = vsub.f32 %v82, %v90
    %v92 = vmul.f32 %v91, %v91
    %v93 = vsel %vm85, %v92, 0.0
    %94 = vadd.xlane.f32.xlu0 %v93
    %v95 = vpop.xlane.xlu0 %94
    %v96 = vmul.f32 %v95, %v89
    %v97 = vadd.f32 %v96, 1e-05
    %v98 = vrsqrt.pop %v97
    %v99 = vmul.f32 %v91, %v98
    %v100 = vmul.f32 %v99, %v83
    %v101 = vadd.f32 %v100, %v84
    %v102 = vpack.c.bf16 %v101, %v101
    %v103 = vld [vmem:[%s3] sm:$0xff]
    %v104 = vld [vmem:[%s3 + $0x8] sm:$0xff]
    %v105 = vld [vmem:[%s3 + $0x10] sm:$0xff]
    %v106 = vld [vmem:[%s3 + $0x18] sm:$0xff]
    %v107 = vld [vmem:[%s3 + $0x20] sm:$0xff]
    %v108 = vld [vmem:[%s3 + $0x28] sm:$0xff]
    %v109 = vld [vmem:[%s3 + $0x30] sm:$0xff]
    %v110 = vld [vmem:[%s3 + $0x38] sm:$0xff]
    %v111 = vld [vmem:[%s3 + $0x40] sm:$0xff]
    %v112 = vld [vmem:[%s3 + $0x48] sm:$0xff]
    %v113 = vld [vmem:[%s3 + $0x50] sm:$0xff]
    %v114 = vld [vmem:[%s3 + $0x58] sm:$0xff]
    %v115 = vld [vmem:[%s3 + $0x60] sm:$0xff]
    %v116 = vld [vmem:[%s3 + $0x68] sm:$0xff]
    %v117 = vld [vmem:[%s3 + $0x70] sm:$0xff]
    %v118 = vld [vmem:[%s3 + $0x78] sm:$0xff]
    %s119 = scalar_lea.vmem %s7, 3
    %v120 = vld [vmem:[%s119] ss:$8 sm:$0x3]
    %v122 = vlaneseq
    %v123 = vshrl.u32 %v122, 7
    %v124 = vsub.s32 0, %v123
    %v125 = vrot.slane %v120, %v124
    %v126 = vlaneseq
    %v127 = vshrl.u32 %v126, 7
    %v128 = vsub.s32 1, %v127
    %v129 = vrot.slane %v120, %v128
    %v148 = vunpack.c.l.b16 %v103
    %v149 = vunpack.c.h.b16 %v103
    %v150 = vunpack.c.l.b16 %v104
    %v151 = vunpack.c.h.b16 %v104
    %v152 = vunpack.c.l.b16 %v105
    %v153 = vunpack.c.h.b16 %v105
    %v154 = vunpack.c.l.b16 %v106
    %v155 = vunpack.c.h.b16 %v106
    %v156 = vunpack.c.l.b16 %v107
    %v157 = vunpack.c.h.b16 %v107
    %v158 = vunpack.c.l.b16 %v108
    %v159 = vunpack.c.h.b16 %v108
    %v160 = vunpack.c.l.b16 %v109
    %v161 = vunpack.c.h.b16 %v109
    %v162 = vunpack.c.l.b16 %v110
    %v163 = vunpack.c.h.b16 %v110
    %v164 = vunpack.c.l.b16 %v111
    %v165 = vunpack.c.h.b16 %v111
    %v166 = vunpack.c.l.b16 %v112
    %v167 = vunpack.c.h.b16 %v112
    %v168 = vunpack.c.l.b16 %v113
    %v169 = vunpack.c.h.b16 %v113
    %v170 = vunpack.c.l.b16 %v114
    %v171 = vunpack.c.h.b16 %v114
    %v172 = vunpack.c.l.b16 %v115
    %v173 = vunpack.c.h.b16 %v115
    %v174 = vunpack.c.l.b16 %v116
    %v175 = vunpack.c.h.b16 %v116
    %v176 = vunpack.c.l.b16 %v117
    %v177 = vunpack.c.h.b16 %v117
    %v178 = vunpack.c.l.b16 %v118
    %v179 = vunpack.c.h.b16 %v118
    %v180 = vpack.c.b16 %v150, %v148
    %v181 = vpack.c.b16 %v151, %v149
    %v182 = vpack.c.b16 %v154, %v152
    %v183 = vpack.c.b16 %v155, %v153
    %v184 = vpack.c.b16 %v158, %v156
    %v185 = vpack.c.b16 %v159, %v157
    %v186 = vpack.c.b16 %v162, %v160
    %v187 = vpack.c.b16 %v163, %v161
    %v188 = vpack.c.b16 %v166, %v164
    %v189 = vpack.c.b16 %v167, %v165
    %v190 = vpack.c.b16 %v170, %v168
    %v191 = vpack.c.b16 %v171, %v169
    %v192 = vpack.c.b16 %v174, %v172
    %v193 = vpack.c.b16 %v175, %v173
    %v194 = vpack.c.b16 %v178, %v176
    %v195 = vpack.c.b16 %v179, %v177
    %212 = vmatprep.subr.bf16.mxu0 %v181
    %213 = vmatpush1.bf16.msra.mxu0 %v180
    %214 = vmatprep.subr.bf16.mxu0 %v183
    %215 = vmatpush1.bf16.msra.mxu0 %v182
    %216 = vmatprep.subr.bf16.mxu0 %v185
    %217 = vmatpush1.bf16.msra.mxu0 %v184
    %218 = vmatprep.subr.bf16.mxu0 %v187
    %219 = vmatpush1.bf16.msra.mxu0 %v186
    %220 = vmatprep.subr.bf16.mxu0 %v189
    %221 = vmatpush1.bf16.msra.mxu0 %v188
    %222 = vmatprep.subr.bf16.mxu0 %v191
    %223 = vmatpush1.bf16.msra.mxu0 %v190
    %224 = vmatprep.subr.bf16.mxu0 %v193
    %225 = vmatpush1.bf16.msra.mxu0 %v192
    %226 = vmatprep.subr.bf16.mxu0 %v195
    %227 = vmatpush1.bf16.msra.mxu0 %v194
    %228 = vmatprep.subr.bf16.mxu0 0
    %229 = vmatpush1.bf16.msra.mxu0 0
    %230 = vmatprep.subr.bf16.mxu0 0
    %231 = vmatpush1.bf16.msra.mxu0 0
    %232 = vmatprep.subr.bf16.mxu0 0
    %233 = vmatpush1.bf16.msra.mxu0 0
    %234 = vmatprep.subr.bf16.mxu0 0
    %235 = vmatpush1.bf16.msra.mxu0 0
    %236 = vmatprep.subr.bf16.mxu0 0
    %237 = vmatpush1.bf16.msra.mxu0 0
    %238 = vmatprep.subr.bf16.mxu0 0
    %239 = vmatpush1.bf16.msra.mxu0 0
    %240 = vmatprep.subr.bf16.mxu0 0
    %241 = vmatpush1.bf16.msra.mxu0 0
    %242 = vmatprep.subr.bf16.mxu0 0
    %243 = vmatpush1.bf16.msra.mxu0 0
    %244 = vmatprep.mubr.bf16.mxu0 0
    %245 = vmatmul.mubr.bf16.gmra.mrb[0].mxu0 %v102
    %v246 = vpop.f32.mrb[0].mxu0
    %v247 = vadd.f32 %v125, %v246
    %v248 = vpop.f32.mrb[0].mxu0
    %v249 = vadd.f32 %v129, %v248
    %v250 = vpop.f32.mrb[0].mxu0
    %v251 = vpop.f32.mrb[0].mxu0
    %252 = vdwg.mxu0
    %v253 = vmax.f32 %v247, 0.0
    %v254 = vmax.f32 %v249, 0.0
    %s255 = scalar_lea.vmem %s7, 4
    %v256 = vld [vmem:[%s255] ss:$8 sm:$0x3]
    %s257 = scalar_lea.vmem %s7, 5
    %v258 = vld [vmem:[%s257] ss:$8 sm:$0x3]
    %v259 = vsel %vm85, %v253, 0.0
    %vm260 = vcmask 582656
    %v261 = vsel %vm260, %v254, 0.0
    %v262 = vadd.f32 %v259, %v261
    %263 = vadd.xlane.f32.xlu0 %v262
    %v264 = vpop.xlane.xlu0 %263
    %v265 = vrcp.pop 200.0
    %v266 = vmul.f32 %v264, %v265
    %v267 = vsub.f32 %v253, %v266
    %v268 = vsub.f32 %v254, %v266
    %v269 = vmul.f32 %v267, %v267
    %v270 = vmul.f32 %v268, %v268
    %v271 = vsel %vm85, %v269, 0.0
    %v272 = vsel %vm260, %v270, 0.0
    %v273 = vadd.f32 %v271, %v272
    %274 = vadd.xlane.f32.xlu0 %v273
    %v275 = vpop.xlane.xlu0 %274
    %v276 = vmul.f32 %v275, %v265
    %v277 = vadd.f32 %v276, 1e-05
    %v278 = vrsqrt.pop %v277
    %v279 = vmul.f32 %v267, %v278
    %v280 = vmul.f32 %v268, %v278
    %v282 = vlaneseq
    %v283 = vshrl.u32 %v282, 7
    %v284 = vsub.s32 0, %v283
    %v285 = vrot.slane %v256, %v284
    %v286 = vlaneseq
    %v287 = vshrl.u32 %v286, 7
    %v288 = vsub.s32 1, %v287
    %v289 = vrot.slane %v256, %v288
    %v292 = vmul.f32 %v279, %v285
    %v293 = vmul.f32 %v280, %v289
    %v295 = vlaneseq
    %v296 = vshrl.u32 %v295, 7
    %v297 = vsub.s32 0, %v296
    %v298 = vrot.slane %v258, %v297
    %v299 = vlaneseq
    %v300 = vshrl.u32 %v299, 7
    %v301 = vsub.s32 1, %v300
    %v302 = vrot.slane %v258, %v301
    %v305 = vadd.f32 %v292, %v298
    %v306 = vadd.f32 %v293, %v302
    %v307 = vmax.f32 %v305, 0.0
    %v308 = vmax.f32 %v306, 0.0
    %v309 = vld [vmem:[%s0] sm:$0xff]
    %v310 = vld [vmem:[%s4] sm:$0xff]
    %v311 = vld [vmem:[%s4 + $0x8] sm:$0xff]
    %v312 = vld [vmem:[%s4 + $0x10] sm:$0xff]
    %v313 = vld [vmem:[%s4 + $0x18] sm:$0xff]
    %v314 = vld [vmem:[%s4 + $0x20] sm:$0xff]
    %v315 = vld [vmem:[%s4 + $0x28] sm:$0xff]
    %v316 = vld [vmem:[%s4 + $0x30] sm:$0xff]
    %v317 = vld [vmem:[%s4 + $0x38] sm:$0xff]
    %v318 = vld [vmem:[%s4 + $0x40] sm:$0xff]
    %v319 = vld [vmem:[%s4 + $0x48] sm:$0xff]
    %v320 = vld [vmem:[%s4 + $0x50] sm:$0xff]
    %v321 = vld [vmem:[%s4 + $0x58] sm:$0xff]
    %v322 = vld [vmem:[%s4 + $0x60] sm:$0xff]
    %v323 = vld [vmem:[%s4 + $0x68] sm:$0xff]
    %v324 = vld [vmem:[%s4 + $0x70] sm:$0xff]
    %v325 = vld [vmem:[%s4 + $0x78] sm:$0xff]
    %v326 = vld [vmem:[%s4 + $0x80] sm:$0xff]
    %v327 = vld [vmem:[%s4 + $0x88] sm:$0xff]
    %v328 = vld [vmem:[%s4 + $0x90] sm:$0xff]
    %v329 = vld [vmem:[%s4 + $0x98] sm:$0xff]
    %v330 = vld [vmem:[%s4 + $0xa0] sm:$0xff]
    %v331 = vld [vmem:[%s4 + $0xa8] sm:$0xff]
    %v332 = vld [vmem:[%s4 + $0xb0] sm:$0xff]
    %v333 = vld [vmem:[%s4 + $0xb8] sm:$0xff]
    %v334 = vld [vmem:[%s4 + $0xc0] sm:$0xff]
    %v335 = vld [vmem:[%s4 + $0xc8] sm:$0xff]
    %v336 = vld [vmem:[%s4 + $0xd0] sm:$0xff]
    %v337 = vld [vmem:[%s4 + $0xd8] sm:$0xff]
    %v338 = vld [vmem:[%s4 + $0xe0] sm:$0xff]
    %v339 = vld [vmem:[%s4 + $0xe8] sm:$0xff]
    %v340 = vld [vmem:[%s4 + $0xf0] sm:$0xff]
    %v341 = vld [vmem:[%s4 + $0xf8] sm:$0xff]
    %v342 = vld [vmem:[%s4 + $0x100] sm:$0xff]
    %v343 = vld [vmem:[%s4 + $0x108] sm:$0xff]
    %v344 = vld [vmem:[%s4 + $0x110] sm:$0xff]
    %v345 = vld [vmem:[%s4 + $0x118] sm:$0xff]
    %v346 = vld [vmem:[%s4 + $0x120] sm:$0xff]
    %v347 = vld [vmem:[%s4 + $0x128] sm:$0xff]
    %v348 = vld [vmem:[%s4 + $0x130] sm:$0xff]
    %v349 = vld [vmem:[%s4 + $0x138] sm:$0xff]
    %v350 = vld [vmem:[%s4 + $0x140] sm:$0xff]
    %v351 = vld [vmem:[%s4 + $0x148] sm:$0xff]
    %v352 = vld [vmem:[%s4 + $0x150] sm:$0xff]
    %v353 = vld [vmem:[%s4 + $0x158] sm:$0xff]
    %v354 = vld [vmem:[%s4 + $0x160] sm:$0xff]
    %v355 = vld [vmem:[%s4 + $0x168] sm:$0xff]
    %v356 = vld [vmem:[%s4 + $0x170] sm:$0xff]
    %v357 = vld [vmem:[%s4 + $0x178] sm:$0xff]
    %v358 = vld [vmem:[%s4 + $0x180] sm:$0xff]
    %v359 = vld [vmem:[%s4 + $0x188] sm:$0xff]
    %v360 = vld [vmem:[%s4 + $0x190] sm:$0xff]
    %v361 = vld [vmem:[%s4 + $0x198] sm:$0xff]
    %v362 = vld [vmem:[%s4 + $0x1a0] sm:$0xff]
    %v363 = vld [vmem:[%s4 + $0x1a8] sm:$0xff]
    %v364 = vld [vmem:[%s4 + $0x1b0] sm:$0xff]
    %v365 = vld [vmem:[%s4 + $0x1b8] sm:$0xff]
    %v366 = vld [vmem:[%s4 + $0x1c0] sm:$0xff]
    %v367 = vld [vmem:[%s4 + $0x1c8] sm:$0xff]
    %v368 = vld [vmem:[%s4 + $0x1d0] sm:$0xff]
    %v369 = vld [vmem:[%s4 + $0x1d8] sm:$0xff]
    %v370 = vld [vmem:[%s4 + $0x1e0] sm:$0xff]
    %v371 = vld [vmem:[%s4 + $0x1e8] sm:$0xff]
    %v372 = vld [vmem:[%s4 + $0x1f0] sm:$0xff]
    %v373 = vld [vmem:[%s4 + $0x1f8] sm:$0xff]
    %v374 = vld [vmem:[%s4 + $0x200] sm:$0xff]
    %v375 = vld [vmem:[%s4 + $0x208] sm:$0xff]
    %v376 = vld [vmem:[%s4 + $0x210] sm:$0xff]
    %v377 = vld [vmem:[%s4 + $0x218] sm:$0xff]
    %v378 = vld [vmem:[%s4 + $0x220] sm:$0xff]
    %v379 = vld [vmem:[%s4 + $0x228] sm:$0xff]
    %v380 = vld [vmem:[%s4 + $0x230] sm:$0xff]
    %v381 = vld [vmem:[%s4 + $0x238] sm:$0xff]
    %v382 = vld [vmem:[%s4 + $0x240] sm:$0xff]
    %v383 = vld [vmem:[%s4 + $0x248] sm:$0xff]
    %v384 = vld [vmem:[%s4 + $0x250] sm:$0xff]
    %v385 = vld [vmem:[%s4 + $0x258] sm:$0xff]
    %v386 = vld [vmem:[%s4 + $0x260] sm:$0xff]
    %v387 = vld [vmem:[%s4 + $0x268] sm:$0xff]
    %v388 = vld [vmem:[%s4 + $0x270] sm:$0xff]
    %v389 = vld [vmem:[%s4 + $0x278] sm:$0xff]
    %v390 = vld [vmem:[%s4 + $0x280] sm:$0xff]
    %v391 = vld [vmem:[%s4 + $0x288] sm:$0xff]
    %v392 = vld [vmem:[%s4 + $0x290] sm:$0xff]
    %v393 = vld [vmem:[%s4 + $0x298] sm:$0xff]
    %v394 = vld [vmem:[%s4 + $0x2a0] sm:$0xff]
    %v395 = vld [vmem:[%s4 + $0x2a8] sm:$0xff]
    %v396 = vld [vmem:[%s4 + $0x2b0] sm:$0xff]
    %v397 = vld [vmem:[%s4 + $0x2b8] sm:$0xff]
    %v398 = vld [vmem:[%s4 + $0x2c0] sm:$0xff]
    %v399 = vld [vmem:[%s4 + $0x2c8] sm:$0xff]
    %v400 = vld [vmem:[%s4 + $0x2d0] sm:$0xff]
    %v401 = vld [vmem:[%s4 + $0x2d8] sm:$0xff]
    %v402 = vld [vmem:[%s4 + $0x2e0] sm:$0xff]
    %v403 = vld [vmem:[%s4 + $0x2e8] sm:$0xff]
    %v404 = vld [vmem:[%s4 + $0x2f0] sm:$0xff]
    %v405 = vld [vmem:[%s4 + $0x2f8] sm:$0xff]
    %v406 = vld [vmem:[%s4 + $0x300] sm:$0xff]
    %v407 = vld [vmem:[%s4 + $0x308] sm:$0xff]
    %v408 = vld [vmem:[%s4 + $0x310] sm:$0xff]
    %v409 = vld [vmem:[%s4 + $0x318] sm:$0xff]
    %v410 = vld [vmem:[%s4 + $0x320] sm:$0xff]
    %v411 = vld [vmem:[%s4 + $0x328] sm:$0xff]
    %v412 = vld [vmem:[%s4 + $0x330] sm:$0xff]
    %v413 = vld [vmem:[%s4 + $0x338] sm:$0xff]
    %v414 = vld [vmem:[%s4 + $0x340] sm:$0xff]
    %v415 = vld [vmem:[%s4 + $0x348] sm:$0xff]
    %v416 = vld [vmem:[%s4 + $0x350] sm:$0xff]
    %v417 = vld [vmem:[%s4 + $0x358] sm:$0xff]
    %v418 = vld [vmem:[%s4 + $0x360] sm:$0xff]
    %v419 = vld [vmem:[%s4 + $0x368] sm:$0xff]
    %v420 = vld [vmem:[%s4 + $0x370] sm:$0xff]
    %v421 = vld [vmem:[%s4 + $0x378] sm:$0xff]
    %v422 = vld [vmem:[%s4 + $0x380] sm:$0xff]
    %v423 = vld [vmem:[%s4 + $0x388] sm:$0xff]
    %v424 = vld [vmem:[%s4 + $0x390] sm:$0xff]
    %v425 = vld [vmem:[%s4 + $0x398] sm:$0xff]
    %v426 = vld [vmem:[%s4 + $0x3a0] sm:$0xff]
    %v427 = vld [vmem:[%s4 + $0x3a8] sm:$0xff]
    %v428 = vld [vmem:[%s4 + $0x3b0] sm:$0xff]
    %v429 = vld [vmem:[%s4 + $0x3b8] sm:$0xff]
    %v430 = vld [vmem:[%s4 + $0x3c0] sm:$0xff]
    %v431 = vld [vmem:[%s4 + $0x3c8] sm:$0xff]
    %v432 = vld [vmem:[%s4 + $0x3d0] sm:$0xff]
    %v433 = vld [vmem:[%s4 + $0x3d8] sm:$0xff]
    %v434 = vld [vmem:[%s4 + $0x3e0] sm:$0xff]
    %v435 = vld [vmem:[%s4 + $0x3e8] sm:$0xff]
    %v436 = vld [vmem:[%s4 + $0x3f0] sm:$0xff]
    %v437 = vld [vmem:[%s4 + $0x3f8] sm:$0xff]
    %v438 = vld [vmem:[%s4 + $0x400] sm:$0xff]
    %v439 = vld [vmem:[%s4 + $0x408] sm:$0xff]
    %v440 = vld [vmem:[%s4 + $0x410] sm:$0xff]
    %v441 = vld [vmem:[%s4 + $0x418] sm:$0xff]
    %v442 = vld [vmem:[%s4 + $0x420] sm:$0xff]
    %v443 = vld [vmem:[%s4 + $0x428] sm:$0xff]
    %v444 = vld [vmem:[%s4 + $0x430] sm:$0xff]
    %v445 = vld [vmem:[%s4 + $0x438] sm:$0xff]
    %v446 = vld [vmem:[%s4 + $0x440] sm:$0xff]
    %v447 = vld [vmem:[%s4 + $0x448] sm:$0xff]
    %v448 = vld [vmem:[%s4 + $0x450] sm:$0xff]
    %v449 = vld [vmem:[%s4 + $0x458] sm:$0xff]
    %v450 = vld [vmem:[%s4 + $0x460] sm:$0xff]
    %v451 = vld [vmem:[%s4 + $0x468] sm:$0xff]
    %v452 = vld [vmem:[%s4 + $0x470] sm:$0xff]
    %v453 = vld [vmem:[%s4 + $0x478] sm:$0xff]
    %v454 = vld [vmem:[%s4 + $0x480] sm:$0xff]
    %v455 = vld [vmem:[%s4 + $0x488] sm:$0xff]
    %v456 = vld [vmem:[%s4 + $0x490] sm:$0xff]
    %v457 = vld [vmem:[%s4 + $0x498] sm:$0xff]
    %v458 = vld [vmem:[%s4 + $0x4a0] sm:$0xff]
    %v459 = vld [vmem:[%s4 + $0x4a8] sm:$0xff]
    %v460 = vld [vmem:[%s4 + $0x4b0] sm:$0xff]
    %v461 = vld [vmem:[%s4 + $0x4b8] sm:$0xff]
    %v462 = vld [vmem:[%s4 + $0x4c0] sm:$0xff]
    %v463 = vld [vmem:[%s4 + $0x4c8] sm:$0xff]
    %v464 = vld [vmem:[%s4 + $0x4d0] sm:$0xff]
    %v465 = vld [vmem:[%s4 + $0x4d8] sm:$0xff]
    %v466 = vld [vmem:[%s4 + $0x4e0] sm:$0xff]
    %v467 = vld [vmem:[%s4 + $0x4e8] sm:$0xff]
    %v468 = vld [vmem:[%s4 + $0x4f0] sm:$0xff]
    %v469 = vld [vmem:[%s4 + $0x4f8] sm:$0xff]
    %v470 = vld [vmem:[%s4 + $0x500] sm:$0xff]
    %v471 = vld [vmem:[%s4 + $0x508] sm:$0xff]
    %v472 = vld [vmem:[%s4 + $0x510] sm:$0xff]
    %v473 = vld [vmem:[%s4 + $0x518] sm:$0xff]
    %v474 = vld [vmem:[%s4 + $0x520] sm:$0xff]
    %v475 = vld [vmem:[%s4 + $0x528] sm:$0xff]
    %v476 = vld [vmem:[%s4 + $0x530] sm:$0xff]
    %v477 = vld [vmem:[%s4 + $0x538] sm:$0xff]
    %v478 = vld [vmem:[%s4 + $0x540] sm:$0xff]
    %v479 = vld [vmem:[%s4 + $0x548] sm:$0xff]
    %v480 = vld [vmem:[%s4 + $0x550] sm:$0xff]
    %v481 = vld [vmem:[%s4 + $0x558] sm:$0xff]
    %v482 = vld [vmem:[%s4 + $0x560] sm:$0xff]
    %v483 = vld [vmem:[%s4 + $0x568] sm:$0xff]
    %v484 = vld [vmem:[%s4 + $0x570] sm:$0xff]
    %v485 = vld [vmem:[%s4 + $0x578] sm:$0xff]
    %v486 = vld [vmem:[%s4 + $0x580] sm:$0xff]
    %v487 = vld [vmem:[%s4 + $0x588] sm:$0xff]
    %v488 = vld [vmem:[%s4 + $0x590] sm:$0xff]
    %v489 = vld [vmem:[%s4 + $0x598] sm:$0xff]
    %v490 = vld [vmem:[%s4 + $0x5a0] sm:$0xff]
    %v491 = vld [vmem:[%s4 + $0x5a8] sm:$0xff]
    %v492 = vld [vmem:[%s4 + $0x5b0] sm:$0xff]
    %v493 = vld [vmem:[%s4 + $0x5b8] sm:$0xff]
    %v494 = vld [vmem:[%s4 + $0x5c0] sm:$0xff]
    %v495 = vld [vmem:[%s4 + $0x5c8] sm:$0xff]
    %v496 = vld [vmem:[%s4 + $0x5d0] sm:$0xff]
    %v497 = vld [vmem:[%s4 + $0x5d8] sm:$0xff]
    %v498 = vld [vmem:[%s4 + $0x5e0] sm:$0xff]
    %v499 = vld [vmem:[%s4 + $0x5e8] sm:$0xff]
    %v500 = vld [vmem:[%s4 + $0x5f0] sm:$0xff]
    %v501 = vld [vmem:[%s4 + $0x5f8] sm:$0xff]
    %v502 = vld [vmem:[%s4 + $0x600] sm:$0xff]
    %v503 = vld [vmem:[%s4 + $0x608] sm:$0xff]
    %v504 = vld [vmem:[%s4 + $0x610] sm:$0xff]
    %v505 = vld [vmem:[%s4 + $0x618] sm:$0xff]
    %v506 = vld [vmem:[%s4 + $0x620] sm:$0xff]
    %v507 = vld [vmem:[%s4 + $0x628] sm:$0xff]
    %v508 = vld [vmem:[%s4 + $0x630] sm:$0xff]
    %v509 = vld [vmem:[%s4 + $0x638] sm:$0xff]
    %v510 = vld [vmem:[%s4 + $0x640] sm:$0xff]
    %v511 = vld [vmem:[%s4 + $0x648] sm:$0xff]
    %v512 = vld [vmem:[%s4 + $0x650] sm:$0xff]
    %v513 = vld [vmem:[%s4 + $0x658] sm:$0xff]
    %v514 = vld [vmem:[%s4 + $0x660] sm:$0xff]
    %v515 = vld [vmem:[%s4 + $0x668] sm:$0xff]
    %v516 = vld [vmem:[%s4 + $0x670] sm:$0xff]
    %v517 = vld [vmem:[%s4 + $0x678] sm:$0xff]
    %v518 = vld [vmem:[%s4 + $0x680] sm:$0xff]
    %v519 = vld [vmem:[%s4 + $0x688] sm:$0xff]
    %v520 = vld [vmem:[%s4 + $0x690] sm:$0xff]
    %v521 = vld [vmem:[%s4 + $0x698] sm:$0xff]
    %v522 = vld [vmem:[%s4 + $0x6a0] sm:$0xff]
    %v523 = vld [vmem:[%s4 + $0x6a8] sm:$0xff]
    %v524 = vld [vmem:[%s4 + $0x6b0] sm:$0xff]
    %v525 = vld [vmem:[%s4 + $0x6b8] sm:$0xff]
    %v526 = vld [vmem:[%s4 + $0x6c0] sm:$0xff]
    %v527 = vld [vmem:[%s4 + $0x6c8] sm:$0xff]
    %v528 = vld [vmem:[%s4 + $0x6d0] sm:$0xff]
    %v529 = vld [vmem:[%s4 + $0x6d8] sm:$0xff]
    %v530 = vld [vmem:[%s4 + $0x6e0] sm:$0xff]
    %v531 = vld [vmem:[%s4 + $0x6e8] sm:$0xff]
    %v532 = vld [vmem:[%s4 + $0x6f0] sm:$0xff]
    %v533 = vld [vmem:[%s4 + $0x6f8] sm:$0xff]
    %v534 = vld [vmem:[%s4 + $0x700] sm:$0xff]
    %v535 = vld [vmem:[%s4 + $0x708] sm:$0xff]
    %v536 = vld [vmem:[%s4 + $0x710] sm:$0xff]
    %v537 = vld [vmem:[%s4 + $0x718] sm:$0xff]
    %v538 = vld [vmem:[%s4 + $0x720] sm:$0xff]
    %v539 = vld [vmem:[%s4 + $0x728] sm:$0xff]
    %v540 = vld [vmem:[%s4 + $0x730] sm:$0xff]
    %v541 = vld [vmem:[%s4 + $0x738] sm:$0xff]
    %v542 = vld [vmem:[%s4 + $0x740] sm:$0xff]
    %v543 = vld [vmem:[%s4 + $0x748] sm:$0xff]
    %v544 = vld [vmem:[%s4 + $0x750] sm:$0xff]
    %v545 = vld [vmem:[%s4 + $0x758] sm:$0xff]
    %v546 = vld [vmem:[%s4 + $0x760] sm:$0xff]
    %v547 = vld [vmem:[%s4 + $0x768] sm:$0xff]
    %v548 = vld [vmem:[%s4 + $0x770] sm:$0xff]
    %v549 = vld [vmem:[%s4 + $0x778] sm:$0xff]
    %v550 = vld [vmem:[%s4 + $0x780] sm:$0xff]
    %v551 = vld [vmem:[%s4 + $0x788] sm:$0xff]
    %v552 = vld [vmem:[%s4 + $0x790] sm:$0xff]
    %v553 = vld [vmem:[%s4 + $0x798] sm:$0xff]
    %v554 = vld [vmem:[%s4 + $0x7a0] sm:$0xff]
    %v555 = vld [vmem:[%s4 + $0x7a8] sm:$0xff]
    %v556 = vld [vmem:[%s4 + $0x7b0] sm:$0xff]
    %v557 = vld [vmem:[%s4 + $0x7b8] sm:$0xff]
    %v558 = vld [vmem:[%s4 + $0x7c0] sm:$0xff]
    %v559 = vld [vmem:[%s4 + $0x7c8] sm:$0xff]
    %v560 = vld [vmem:[%s4 + $0x7d0] sm:$0xff]
    %v561 = vld [vmem:[%s4 + $0x7d8] sm:$0xff]
    %v562 = vld [vmem:[%s4 + $0x7e0] sm:$0xff]
    %v563 = vld [vmem:[%s4 + $0x7e8] sm:$0xff]
    %v564 = vld [vmem:[%s4 + $0x7f0] sm:$0xff]
    %v565 = vld [vmem:[%s4 + $0x7f8] sm:$0xff]
    %v566 = vpack.c.bf16 %v307, %v307
    %v567 = vpack.c.bf16 %v308, %v308
    %v568 = vld [vmem:[%s5] sm:$0xff]
    %v569 = vld [vmem:[%s5 + $0x8] sm:$0xff]
    %v570 = vld [vmem:[%s5 + $0x10] sm:$0xff]
    %v571 = vld [vmem:[%s5 + $0x18] sm:$0xff]
    %v572 = vld [vmem:[%s5 + $0x20] sm:$0xff]
    %v573 = vld [vmem:[%s5 + $0x28] sm:$0xff]
    %v574 = vld [vmem:[%s5 + $0x30] sm:$0xff]
    %v575 = vld [vmem:[%s5 + $0x38] sm:$0xff]
    %v576 = vld [vmem:[%s5 + $0x40] sm:$0xff]
    %v577 = vld [vmem:[%s5 + $0x48] sm:$0xff]
    %v578 = vld [vmem:[%s5 + $0x50] sm:$0xff]
    %v579 = vld [vmem:[%s5 + $0x58] sm:$0xff]
    %v580 = vld [vmem:[%s5 + $0x60] sm:$0xff]
    %v581 = vld [vmem:[%s5 + $0x68] sm:$0xff]
    %v582 = vld [vmem:[%s5 + $0x70] sm:$0xff]
    %v583 = vld [vmem:[%s5 + $0x78] sm:$0xff]
    %v584 = vld [vmem:[%s5 + $0x80] sm:$0xff]
    %v585 = vld [vmem:[%s5 + $0x88] sm:$0xff]
    %v586 = vld [vmem:[%s5 + $0x90] sm:$0xff]
    %v587 = vld [vmem:[%s5 + $0x98] sm:$0xff]
    %v588 = vld [vmem:[%s5 + $0xa0] sm:$0xff]
    %v589 = vld [vmem:[%s5 + $0xa8] sm:$0xff]
    %v590 = vld [vmem:[%s5 + $0xb0] sm:$0xff]
    %v591 = vld [vmem:[%s5 + $0xb8] sm:$0xff]
    %v592 = vld [vmem:[%s5 + $0xc0] sm:$0xff]
    %v593 = vld [vmem:[%s5 + $0xc8] sm:$0xff]
    %v594 = vld [vmem:[%s5 + $0xd0] sm:$0xff]
    %v595 = vld [vmem:[%s5 + $0xd8] sm:$0xff]
    %v596 = vld [vmem:[%s5 + $0xe0] sm:$0xff]
    %v597 = vld [vmem:[%s5 + $0xe8] sm:$0xff]
    %v598 = vld [vmem:[%s5 + $0xf0] sm:$0xff]
    %v599 = vld [vmem:[%s5 + $0xf8] sm:$0xff]
    %v600 = vld [vmem:[%s5 + $0x100] sm:$0xff]
    %v601 = vld [vmem:[%s5 + $0x108] sm:$0xff]
    %v602 = vld [vmem:[%s5 + $0x110] sm:$0xff]
    %v603 = vld [vmem:[%s5 + $0x118] sm:$0xff]
    %v604 = vld [vmem:[%s5 + $0x120] sm:$0xff]
    %v605 = vld [vmem:[%s5 + $0x128] sm:$0xff]
    %v606 = vld [vmem:[%s5 + $0x130] sm:$0xff]
    %v607 = vld [vmem:[%s5 + $0x138] sm:$0xff]
    %v608 = vld [vmem:[%s5 + $0x140] sm:$0xff]
    %v609 = vld [vmem:[%s5 + $0x148] sm:$0xff]
    %v610 = vld [vmem:[%s5 + $0x150] sm:$0xff]
    %v611 = vld [vmem:[%s5 + $0x158] sm:$0xff]
    %v612 = vld [vmem:[%s5 + $0x160] sm:$0xff]
    %v613 = vld [vmem:[%s5 + $0x168] sm:$0xff]
    %v614 = vld [vmem:[%s5 + $0x170] sm:$0xff]
    %v615 = vld [vmem:[%s5 + $0x178] sm:$0xff]
    %v616 = vld [vmem:[%s5 + $0x180] sm:$0xff]
    %v617 = vld [vmem:[%s5 + $0x188] sm:$0xff]
    %v668 = vunpack.c.l.b16 %v568
    %v669 = vunpack.c.h.b16 %v568
    %v670 = vunpack.c.l.b16 %v569
    %v671 = vunpack.c.h.b16 %v569
    %v672 = vunpack.c.l.b16 %v570
    %v673 = vunpack.c.h.b16 %v570
    %v674 = vunpack.c.l.b16 %v571
    %v675 = vunpack.c.h.b16 %v571
    %v676 = vunpack.c.l.b16 %v572
    %v677 = vunpack.c.h.b16 %v572
    %v678 = vunpack.c.l.b16 %v573
    %v679 = vunpack.c.h.b16 %v573
    %v680 = vunpack.c.l.b16 %v574
    %v681 = vunpack.c.h.b16 %v574
    %v682 = vunpack.c.l.b16 %v575
    %v683 = vunpack.c.h.b16 %v575
    %v684 = vunpack.c.l.b16 %v576
    %v685 = vunpack.c.h.b16 %v576
    %v686 = vunpack.c.l.b16 %v577
    %v687 = vunpack.c.h.b16 %v577
    %v688 = vunpack.c.l.b16 %v578
    %v689 = vunpack.c.h.b16 %v578
    %v690 = vunpack.c.l.b16 %v579
    %v691 = vunpack.c.h.b16 %v579
    %v692 = vunpack.c.l.b16 %v580
    %v693 = vunpack.c.h.b16 %v580
    %v694 = vunpack.c.l.b16 %v581
    %v695 = vunpack.c.h.b16 %v581
    %v696 = vunpack.c.l.b16 %v582
    %v697 = vunpack.c.h.b16 %v582
    %v698 = vunpack.c.l.b16 %v583
    %v699 = vunpack.c.h.b16 %v583
    %v700 = vunpack.c.l.b16 %v584
    %v701 = vunpack.c.h.b16 %v584
    %v702 = vunpack.c.l.b16 %v585
    %v703 = vunpack.c.h.b16 %v585
    %v704 = vunpack.c.l.b16 %v586
    %v705 = vunpack.c.h.b16 %v586
    %v706 = vunpack.c.l.b16 %v587
    %v707 = vunpack.c.h.b16 %v587
    %v708 = vunpack.c.l.b16 %v588
    %v709 = vunpack.c.h.b16 %v588
    %v710 = vunpack.c.l.b16 %v589
    %v711 = vunpack.c.h.b16 %v589
    %v712 = vunpack.c.l.b16 %v590
    %v713 = vunpack.c.h.b16 %v590
    %v714 = vunpack.c.l.b16 %v591
    %v715 = vunpack.c.h.b16 %v591
    %v716 = vunpack.c.l.b16 %v592
    %v717 = vunpack.c.h.b16 %v592
    %v718 = vunpack.c.l.b16 %v593
    %v719 = vunpack.c.h.b16 %v593
    %v720 = vunpack.c.l.b16 %v594
    %v721 = vunpack.c.h.b16 %v594
    %v722 = vunpack.c.l.b16 %v595
    %v723 = vunpack.c.h.b16 %v595
    %v724 = vunpack.c.l.b16 %v596
    %v725 = vunpack.c.h.b16 %v596
    %v726 = vunpack.c.l.b16 %v597
    %v727 = vunpack.c.h.b16 %v597
    %v728 = vunpack.c.l.b16 %v598
    %v729 = vunpack.c.h.b16 %v598
    %v730 = vunpack.c.l.b16 %v599
    %v731 = vunpack.c.h.b16 %v599
    %v732 = vunpack.c.l.b16 %v600
    %v733 = vunpack.c.h.b16 %v600
    %v734 = vunpack.c.l.b16 %v601
    %v735 = vunpack.c.h.b16 %v601
    %v736 = vunpack.c.l.b16 %v602
    %v737 = vunpack.c.h.b16 %v602
    %v738 = vunpack.c.l.b16 %v603
    %v739 = vunpack.c.h.b16 %v603
    %v740 = vunpack.c.l.b16 %v604
    %v741 = vunpack.c.h.b16 %v604
    %v742 = vunpack.c.l.b16 %v605
    %v743 = vunpack.c.h.b16 %v605
    %v744 = vunpack.c.l.b16 %v606
    %v745 = vunpack.c.h.b16 %v606
    %v746 = vunpack.c.l.b16 %v607
    %v747 = vunpack.c.h.b16 %v607
    %v748 = vunpack.c.l.b16 %v608
    %v749 = vunpack.c.h.b16 %v608
    %v750 = vunpack.c.l.b16 %v609
    %v751 = vunpack.c.h.b16 %v609
    %v752 = vunpack.c.l.b16 %v610
    %v753 = vunpack.c.h.b16 %v610
    %v754 = vunpack.c.l.b16 %v611
    %v755 = vunpack.c.h.b16 %v611
    %v756 = vunpack.c.l.b16 %v612
    %v757 = vunpack.c.h.b16 %v612
    %v758 = vunpack.c.l.b16 %v613
    %v759 = vunpack.c.h.b16 %v613
    %v760 = vunpack.c.l.b16 %v614
    %v761 = vunpack.c.h.b16 %v614
    %v762 = vunpack.c.l.b16 %v615
    %v763 = vunpack.c.h.b16 %v615
    %v764 = vunpack.c.l.b16 %v616
    %v765 = vunpack.c.h.b16 %v616
    %v766 = vunpack.c.l.b16 %v617
    %v767 = vunpack.c.h.b16 %v617
    %v768 = vpack.c.b16 %v672, %v668
    %v769 = vpack.c.b16 %v673, %v669
    %v770 = vpack.c.b16 %v674, %v670
    %v771 = vpack.c.b16 %v675, %v671
    %v772 = vpack.c.b16 %v680, %v676
    %v773 = vpack.c.b16 %v681, %v677
    %v774 = vpack.c.b16 %v682, %v678
    %v775 = vpack.c.b16 %v683, %v679
    %v776 = vpack.c.b16 %v688, %v684
    %v777 = vpack.c.b16 %v689, %v685
    %v778 = vpack.c.b16 %v690, %v686
    %v779 = vpack.c.b16 %v691, %v687
    %v780 = vpack.c.b16 %v696, %v692
    %v781 = vpack.c.b16 %v697, %v693
    %v782 = vpack.c.b16 %v698, %v694
    %v783 = vpack.c.b16 %v699, %v695
    %v784 = vpack.c.b16 %v704, %v700
    %v785 = vpack.c.b16 %v705, %v701
    %v786 = vpack.c.b16 %v706, %v702
    %v787 = vpack.c.b16 %v707, %v703
    %v788 = vpack.c.b16 %v712, %v708
    %v789 = vpack.c.b16 %v713, %v709
    %v790 = vpack.c.b16 %v714, %v710
    %v791 = vpack.c.b16 %v715, %v711
    %v792 = vpack.c.b16 %v720, %v716
    %v793 = vpack.c.b16 %v721, %v717
    %v794 = vpack.c.b16 %v722, %v718
    %v795 = vpack.c.b16 %v723, %v719
    %v796 = vpack.c.b16 %v728, %v724
    %v797 = vpack.c.b16 %v729, %v725
    %v798 = vpack.c.b16 %v730, %v726
    %v799 = vpack.c.b16 %v731, %v727
    %v800 = vpack.c.b16 %v736, %v732
    %v801 = vpack.c.b16 %v737, %v733
    %v802 = vpack.c.b16 %v738, %v734
    %v803 = vpack.c.b16 %v739, %v735
    %v804 = vpack.c.b16 %v744, %v740
    %v805 = vpack.c.b16 %v745, %v741
    %v806 = vpack.c.b16 %v746, %v742
    %v807 = vpack.c.b16 %v747, %v743
    %v808 = vpack.c.b16 %v752, %v748
    %v809 = vpack.c.b16 %v753, %v749
    %v810 = vpack.c.b16 %v754, %v750
    %v811 = vpack.c.b16 %v755, %v751
    %v812 = vpack.c.b16 %v760, %v756
    %v813 = vpack.c.b16 %v761, %v757
    %v814 = vpack.c.b16 %v762, %v758
    %v815 = vpack.c.b16 %v763, %v759
    %v816 = vpack.c.b16 %v764, %v764
    %v817 = vpack.c.b16 %v765, %v765
    %v818 = vpack.c.b16 %v766, %v766
    %v819 = vpack.c.b16 %v767, %v767
    %vm868 = vcmask 588800
    %v870 = vsel %vm868, %v567, 0
    %v873 = vsel %vm38, %v816, 0
    %v876 = vsel %vm38, %v817, 0
    %v879 = vsel %vm38, %v818, 0
    %v882 = vsel %vm38, %v819, 0
    %884 = vmatprep.subr.bf16.mxu0 %v769
    %885 = vmatpush1.bf16.msra.mxu0 %v768
    %886 = vmatprep.subr.bf16.mxu0 %v773
    %887 = vmatpush1.bf16.msra.mxu0 %v772
    %888 = vmatprep.subr.bf16.mxu0 %v777
    %889 = vmatpush1.bf16.msra.mxu0 %v776
    %890 = vmatprep.subr.bf16.mxu0 %v781
    %891 = vmatpush1.bf16.msra.mxu0 %v780
    %892 = vmatprep.subr.bf16.mxu0 %v785
    %893 = vmatpush1.bf16.msra.mxu0 %v784
    %894 = vmatprep.subr.bf16.mxu0 %v789
    %895 = vmatpush1.bf16.msra.mxu0 %v788
    %896 = vmatprep.subr.bf16.mxu0 %v793
    %897 = vmatpush1.bf16.msra.mxu0 %v792
    %898 = vmatprep.subr.bf16.mxu0 %v797
    %899 = vmatpush1.bf16.msra.mxu0 %v796
    %900 = vmatprep.subr.bf16.mxu0 %v801
    %901 = vmatpush1.bf16.msra.mxu0 %v800
    %902 = vmatprep.subr.bf16.mxu0 %v805
    %903 = vmatpush1.bf16.msra.mxu0 %v804
    %904 = vmatprep.subr.bf16.mxu0 %v809
    %905 = vmatpush1.bf16.msra.mxu0 %v808
    %906 = vmatprep.subr.bf16.mxu0 %v813
    %907 = vmatpush1.bf16.msra.mxu0 %v812
    %908 = vmatprep.subr.bf16.mxu0 %v876
    %909 = vmatpush1.bf16.msra.mxu0 %v873
    %910 = vmatprep.subr.bf16.mxu0 0
    %911 = vmatpush1.bf16.msra.mxu0 0
    %912 = vmatprep.subr.bf16.mxu0 0
    %913 = vmatpush1.bf16.msra.mxu0 0
    %914 = vmatprep.subr.bf16.mxu0 0
    %915 = vmatpush1.bf16.msra.mxu0 0
    %916 = vmatprep.mubr.bf16.mxu0 %v870
    %917 = vmatmul.mubr.bf16.gmra.mrb[0].mxu0 %v566
    %v918 = vpop.f32.mrb[0].mxu0
    %v919 = vadd.f32 0.0, %v918
    %v920 = vpop.f32.mrb[0].mxu0
    %v921 = vadd.f32 0.0, %v920
    %v922 = vpop.f32.mrb[0].mxu0
    %v923 = vpop.f32.mrb[0].mxu0
    %924 = vdwg.mxu0
    %925 = vmatprep.subr.bf16.mxu0 %v771
    %926 = vmatpush1.bf16.msra.mxu0 %v770
    %927 = vmatprep.subr.bf16.mxu0 %v775
    %928 = vmatpush1.bf16.msra.mxu0 %v774
    %929 = vmatprep.subr.bf16.mxu0 %v779
    %930 = vmatpush1.bf16.msra.mxu0 %v778
    %931 = vmatprep.subr.bf16.mxu0 %v783
    %932 = vmatpush1.bf16.msra.mxu0 %v782
    %933 = vmatprep.subr.bf16.mxu0 %v787
    %934 = vmatpush1.bf16.msra.mxu0 %v786
    %935 = vmatprep.subr.bf16.mxu0 %v791
    %936 = vmatpush1.bf16.msra.mxu0 %v790
    %937 = vmatprep.subr.bf16.mxu0 %v795
    %938 = vmatpush1.bf16.msra.mxu0 %v794
    %939 = vmatprep.subr.bf16.mxu0 %v799
    %940 = vmatpush1.bf16.msra.mxu0 %v798
    %941 = vmatprep.subr.bf16.mxu0 %v803
    %942 = vmatpush1.bf16.msra.mxu0 %v802
    %943 = vmatprep.subr.bf16.mxu0 %v807
    %944 = vmatpush1.bf16.msra.mxu0 %v806
    %945 = vmatprep.subr.bf16.mxu0 %v811
    %946 = vmatpush1.bf16.msra.mxu0 %v810
    %947 = vmatprep.subr.bf16.mxu0 %v815
    %948 = vmatpush1.bf16.msra.mxu0 %v814
    %949 = vmatprep.subr.bf16.mxu0 %v882
    %950 = vmatpush1.bf16.msra.mxu0 %v879
    %951 = vmatprep.subr.bf16.mxu0 0
    %952 = vmatpush1.bf16.msra.mxu0 0
    %953 = vmatprep.subr.bf16.mxu0 0
    %954 = vmatpush1.bf16.msra.mxu0 0
    %955 = vmatprep.subr.bf16.mxu0 0
    %956 = vmatpush1.bf16.msra.mxu0 0
    %957 = vmatprep.mubr.bf16.mxu0 %v870
    %958 = vmatmul.mubr.bf16.gmra.mrb[0].mxu0 %v566
    %v959 = vpop.f32.mrb[0].mxu0
    %v960 = vadd.f32 0.0, %v959
    %v961 = vpop.f32.mrb[0].mxu0
    %v962 = vadd.f32 0.0, %v961
    %v963 = vpop.f32.mrb[0].mxu0
    %v964 = vpop.f32.mrb[0].mxu0
    %965 = vdwg.mxu0
    %v967 = vcombine.high %v309, %v309
    %v969 = vunpack.c.l.s4 1966171168
    %v970 = vunpack.c.0.s8 %v969
    %v971 = vlaneseq
    %v972 = vshrl.u32 %v971, 7
    %v973 = vsub.s32 %v970, %v972
    %v974 = vrot.slane %v309, %v973
    %v976 = vunpack.c.l.s4 1966171168
    %v977 = vunpack.c.0.s8 %v976
    %v978 = vlaneseq
    %v979 = vshrl.u32 %v978, 7
    %v980 = vsub.s32 %v977, %v979
    %v981 = vrot.slane %v967, %v980
    %v982 = vcombine.high %v974, %v974
    %v983 = vcombine.high %v981, %v981
    %v985 = vunpack.c.l.s4 1966171168
    %v986 = vunpack.c.0.s8 %v985
    %v987 = vlaneseq
    %v988 = vshrl.u32 %v987, 7
    %v989 = vsub.s32 %v986, %v988
    %v990 = vrot.slane %v974, %v989
    %v992 = vunpack.c.l.s4 1966171168
    %v993 = vunpack.c.0.s8 %v992
    %v994 = vlaneseq
    %v995 = vshrl.u32 %v994, 7
    %v996 = vsub.s32 %v993, %v995
    %v997 = vrot.slane %v981, %v996
    %v999 = vunpack.c.l.s4 1966171168
    %v1000 = vunpack.c.0.s8 %v999
    %v1001 = vlaneseq
    %v1002 = vshrl.u32 %v1001, 7
    %v1003 = vsub.s32 %v1000, %v1002
    %v1004 = vrot.slane %v982, %v1003
    %v1006 = vunpack.c.l.s4 1966171168
    %v1007 = vunpack.c.0.s8 %v1006
    %v1008 = vlaneseq
    %v1009 = vshrl.u32 %v1008, 7
    %v1010 = vsub.s32 %v1007, %v1009
    %v1011 = vrot.slane %v983, %v1010
    %v1012 = vcombine.high %v990, %v990
    %v1013 = vcombine.high %v997, %v997
    %v1014 = vcombine.high %v1004, %v1004
    %v1015 = vcombine.high %v1011, %v1011
    %v1280 = vunpack.c.l.b16 %v310
    %v1281 = vunpack.c.h.b16 %v310
    %v1282 = vunpack.c.l.b16 %v311
    %v1283 = vunpack.c.h.b16 %v311
    %v1284 = vunpack.c.l.b16 %v312
    %v1285 = vunpack.c.h.b16 %v312
    %v1286 = vunpack.c.l.b16 %v313
    %v1287 = vunpack.c.h.b16 %v313
    %v1288 = vunpack.c.l.b16 %v314
    %v1289 = vunpack.c.h.b16 %v314
    %v1290 = vunpack.c.l.b16 %v315
    %v1291 = vunpack.c.h.b16 %v315
    %v1292 = vunpack.c.l.b16 %v316
    %v1293 = vunpack.c.h.b16 %v316
    %v1294 = vunpack.c.l.b16 %v317
    %v1295 = vunpack.c.h.b16 %v317
    %v1296 = vunpack.c.l.b16 %v318
    %v1297 = vunpack.c.h.b16 %v318
    %v1298 = vunpack.c.l.b16 %v319
    %v1299 = vunpack.c.h.b16 %v319
    %v1300 = vunpack.c.l.b16 %v320
    %v1301 = vunpack.c.h.b16 %v320
    %v1302 = vunpack.c.l.b16 %v321
    %v1303 = vunpack.c.h.b16 %v321
    %v1304 = vunpack.c.l.b16 %v322
    %v1305 = vunpack.c.h.b16 %v322
    %v1306 = vunpack.c.l.b16 %v323
    %v1307 = vunpack.c.h.b16 %v323
    %v1308 = vunpack.c.l.b16 %v324
    %v1309 = vunpack.c.h.b16 %v324
    %v1310 = vunpack.c.l.b16 %v325
    %v1311 = vunpack.c.h.b16 %v325
    %v1312 = vunpack.c.l.b16 %v326
    %v1313 = vunpack.c.h.b16 %v326
    %v1314 = vunpack.c.l.b16 %v327
    %v1315 = vunpack.c.h.b16 %v327
    %v1316 = vunpack.c.l.b16 %v328
    %v1317 = vunpack.c.h.b16 %v328
    %v1318 = vunpack.c.l.b16 %v329
    %v1319 = vunpack.c.h.b16 %v329
    %v1320 = vunpack.c.l.b16 %v330
    %v1321 = vunpack.c.h.b16 %v330
    %v1322 = vunpack.c.l.b16 %v331
    %v1323 = vunpack.c.h.b16 %v331
    %v1324 = vunpack.c.l.b16 %v332
    %v1325 = vunpack.c.h.b16 %v332
    %v1326 = vunpack.c.l.b16 %v333
    %v1327 = vunpack.c.h.b16 %v333
    %v1328 = vunpack.c.l.b16 %v334
    %v1329 = vunpack.c.h.b16 %v334
    %v1330 = vunpack.c.l.b16 %v335
    %v1331 = vunpack.c.h.b16 %v335
    %v1332 = vunpack.c.l.b16 %v336
    %v1333 = vunpack.c.h.b16 %v336
    %v1334 = vunpack.c.l.b16 %v337
    %v1335 = vunpack.c.h.b16 %v337
    %v1336 = vunpack.c.l.b16 %v338
    %v1337 = vunpack.c.h.b16 %v338
    %v1338 = vunpack.c.l.b16 %v339
    %v1339 = vunpack.c.h.b16 %v339
    %v1340 = vunpack.c.l.b16 %v340
    %v1341 = vunpack.c.h.b16 %v340
    %v1342 = vunpack.c.l.b16 %v341
    %v1343 = vunpack.c.h.b16 %v341
    %v1344 = vunpack.c.l.b16 %v342
    %v1345 = vunpack.c.h.b16 %v342
    %v1346 = vunpack.c.l.b16 %v343
    %v1347 = vunpack.c.h.b16 %v343
    %v1348 = vunpack.c.l.b16 %v344
    %v1349 = vunpack.c.h.b16 %v344
    %v1350 = vunpack.c.l.b16 %v345
    %v1351 = vunpack.c.h.b16 %v345
    %v1352 = vunpack.c.l.b16 %v346
    %v1353 = vunpack.c.h.b16 %v346
    %v1354 = vunpack.c.l.b16 %v347
    %v1355 = vunpack.c.h.b16 %v347
    %v1356 = vunpack.c.l.b16 %v348
    %v1357 = vunpack.c.h.b16 %v348
    %v1358 = vunpack.c.l.b16 %v349
    %v1359 = vunpack.c.h.b16 %v349
    %v1360 = vunpack.c.l.b16 %v350
    %v1361 = vunpack.c.h.b16 %v350
    %v1362 = vunpack.c.l.b16 %v351
    %v1363 = vunpack.c.h.b16 %v351
    %v1364 = vunpack.c.l.b16 %v352
    %v1365 = vunpack.c.h.b16 %v352
    %v1366 = vunpack.c.l.b16 %v353
    %v1367 = vunpack.c.h.b16 %v353
    %v1368 = vunpack.c.l.b16 %v354
    %v1369 = vunpack.c.h.b16 %v354
    %v1370 = vunpack.c.l.b16 %v355
    %v1371 = vunpack.c.h.b16 %v355
    %v1372 = vunpack.c.l.b16 %v356
    %v1373 = vunpack.c.h.b16 %v356
    %v1374 = vunpack.c.l.b16 %v357
    %v1375 = vunpack.c.h.b16 %v357
    %v1376 = vunpack.c.l.b16 %v358
    %v1377 = vunpack.c.h.b16 %v358
    %v1378 = vunpack.c.l.b16 %v359
    %v1379 = vunpack.c.h.b16 %v359
    %v1380 = vunpack.c.l.b16 %v360
    %v1381 = vunpack.c.h.b16 %v360
    %v1382 = vunpack.c.l.b16 %v361
    %v1383 = vunpack.c.h.b16 %v361
    %v1384 = vunpack.c.l.b16 %v362
    %v1385 = vunpack.c.h.b16 %v362
    %v1386 = vunpack.c.l.b16 %v363
    %v1387 = vunpack.c.h.b16 %v363
    %v1388 = vunpack.c.l.b16 %v364
    %v1389 = vunpack.c.h.b16 %v364
    %v1390 = vunpack.c.l.b16 %v365
    %v1391 = vunpack.c.h.b16 %v365
    %v1392 = vunpack.c.l.b16 %v366
    %v1393 = vunpack.c.h.b16 %v366
    %v1394 = vunpack.c.l.b16 %v367
    %v1395 = vunpack.c.h.b16 %v367
    %v1396 = vunpack.c.l.b16 %v368
    %v1397 = vunpack.c.h.b16 %v368
    %v1398 = vunpack.c.l.b16 %v369
    %v1399 = vunpack.c.h.b16 %v369
    %v1400 = vunpack.c.l.b16 %v370
    %v1401 = vunpack.c.h.b16 %v370
    %v1402 = vunpack.c.l.b16 %v371
    %v1403 = vunpack.c.h.b16 %v371
    %v1404 = vunpack.c.l.b16 %v372
    %v1405 = vunpack.c.h.b16 %v372
    %v1406 = vunpack.c.l.b16 %v373
    %v1407 = vunpack.c.h.b16 %v373
    %v1408 = vunpack.c.l.b16 %v374
    %v1409 = vunpack.c.h.b16 %v374
    %v1410 = vunpack.c.l.b16 %v375
    %v1411 = vunpack.c.h.b16 %v375
    %v1412 = vunpack.c.l.b16 %v376
    %v1413 = vunpack.c.h.b16 %v376
    %v1414 = vunpack.c.l.b16 %v377
    %v1415 = vunpack.c.h.b16 %v377
    %v1416 = vunpack.c.l.b16 %v378
    %v1417 = vunpack.c.h.b16 %v378
    %v1418 = vunpack.c.l.b16 %v379
    %v1419 = vunpack.c.h.b16 %v379
    %v1420 = vunpack.c.l.b16 %v380
    %v1421 = vunpack.c.h.b16 %v380
    %v1422 = vunpack.c.l.b16 %v381
    %v1423 = vunpack.c.h.b16 %v381
    %v1424 = vunpack.c.l.b16 %v382
    %v1425 = vunpack.c.h.b16 %v382
    %v1426 = vunpack.c.l.b16 %v383
    %v1427 = vunpack.c.h.b16 %v383
    %v1428 = vunpack.c.l.b16 %v384
    %v1429 = vunpack.c.h.b16 %v384
    %v1430 = vunpack.c.l.b16 %v385
    %v1431 = vunpack.c.h.b16 %v385
    %v1432 = vunpack.c.l.b16 %v386
    %v1433 = vunpack.c.h.b16 %v386
    %v1434 = vunpack.c.l.b16 %v387
    %v1435 = vunpack.c.h.b16 %v387
    %v1436 = vunpack.c.l.b16 %v388
    %v1437 = vunpack.c.h.b16 %v388
    %v1438 = vunpack.c.l.b16 %v389
    %v1439 = vunpack.c.h.b16 %v389
    %v1440 = vunpack.c.l.b16 %v390
    %v1441 = vunpack.c.h.b16 %v390
    %v1442 = vunpack.c.l.b16 %v391
    %v1443 = vunpack.c.h.b16 %v391
    %v1444 = vunpack.c.l.b16 %v392
    %v1445 = vunpack.c.h.b16 %v392
    %v1446 = vunpack.c.l.b16 %v393
    %v1447 = vunpack.c.h.b16 %v393
    %v1448 = vunpack.c.l.b16 %v394
    %v1449 = vunpack.c.h.b16 %v394
    %v1450 = vunpack.c.l.b16 %v395
    %v1451 = vunpack.c.h.b16 %v395
    %v1452 = vunpack.c.l.b16 %v396
    %v1453 = vunpack.c.h.b16 %v396
    %v1454 = vunpack.c.l.b16 %v397
    %v1455 = vunpack.c.h.b16 %v397
    %v1456 = vunpack.c.l.b16 %v398
    %v1457 = vunpack.c.h.b16 %v398
    %v1458 = vunpack.c.l.b16 %v399
    %v1459 = vunpack.c.h.b16 %v399
    %v1460 = vunpack.c.l.b16 %v400
    %v1461 = vunpack.c.h.b16 %v400
    %v1462 = vunpack.c.l.b16 %v401
    %v1463 = vunpack.c.h.b16 %v401
    %v1464 = vunpack.c.l.b16 %v402
    %v1465 = vunpack.c.h.b16 %v402
    %v1466 = vunpack.c.l.b16 %v403
    %v1467 = vunpack.c.h.b16 %v403
    %v1468 = vunpack.c.l.b16 %v404
    %v1469 = vunpack.c.h.b16 %v404
    %v1470 = vunpack.c.l.b16 %v405
    %v1471 = vunpack.c.h.b16 %v405
    %v1472 = vunpack.c.l.b16 %v406
    %v1473 = vunpack.c.h.b16 %v406
    %v1474 = vunpack.c.l.b16 %v407
    %v1475 = vunpack.c.h.b16 %v407
    %v1476 = vunpack.c.l.b16 %v408
    %v1477 = vunpack.c.h.b16 %v408
    %v1478 = vunpack.c.l.b16 %v409
    %v1479 = vunpack.c.h.b16 %v409
    %v1480 = vunpack.c.l.b16 %v410
    %v1481 = vunpack.c.h.b16 %v410
    %v1482 = vunpack.c.l.b16 %v411
    %v1483 = vunpack.c.h.b16 %v411
    %v1484 = vunpack.c.l.b16 %v412
    %v1485 = vunpack.c.h.b16 %v412
    %v1486 = vunpack.c.l.b16 %v413
    %v1487 = vunpack.c.h.b16 %v413
    %v1488 = vunpack.c.l.b16 %v414
    %v1489 = vunpack.c.h.b16 %v414
    %v1490 = vunpack.c.l.b16 %v415
    %v1491 = vunpack.c.h.b16 %v415
    %v1492 = vunpack.c.l.b16 %v416
    %v1493 = vunpack.c.h.b16 %v416
    %v1494 = vunpack.c.l.b16 %v417
    %v1495 = vunpack.c.h.b16 %v417
    %v1496 = vunpack.c.l.b16 %v418
    %v1497 = vunpack.c.h.b16 %v418
    %v1498 = vunpack.c.l.b16 %v419
    %v1499 = vunpack.c.h.b16 %v419
    %v1500 = vunpack.c.l.b16 %v420
    %v1501 = vunpack.c.h.b16 %v420
    %v1502 = vunpack.c.l.b16 %v421
    %v1503 = vunpack.c.h.b16 %v421
    %v1504 = vunpack.c.l.b16 %v422
    %v1505 = vunpack.c.h.b16 %v422
    %v1506 = vunpack.c.l.b16 %v423
    %v1507 = vunpack.c.h.b16 %v423
    %v1508 = vunpack.c.l.b16 %v424
    %v1509 = vunpack.c.h.b16 %v424
    %v1510 = vunpack.c.l.b16 %v425
    %v1511 = vunpack.c.h.b16 %v425
    %v1512 = vunpack.c.l.b16 %v426
    %v1513 = vunpack.c.h.b16 %v426
    %v1514 = vunpack.c.l.b16 %v427
    %v1515 = vunpack.c.h.b16 %v427
    %v1516 = vunpack.c.l.b16 %v428
    %v1517 = vunpack.c.h.b16 %v428
    %v1518 = vunpack.c.l.b16 %v429
    %v1519 = vunpack.c.h.b16 %v429
    %v1520 = vunpack.c.l.b16 %v430
    %v1521 = vunpack.c.h.b16 %v430
    %v1522 = vunpack.c.l.b16 %v431
    %v1523 = vunpack.c.h.b16 %v431
    %v1524 = vunpack.c.l.b16 %v432
    %v1525 = vunpack.c.h.b16 %v432
    %v1526 = vunpack.c.l.b16 %v433
    %v1527 = vunpack.c.h.b16 %v433
    %v1528 = vunpack.c.l.b16 %v434
    %v1529 = vunpack.c.h.b16 %v434
    %v1530 = vunpack.c.l.b16 %v435
    %v1531 = vunpack.c.h.b16 %v435
    %v1532 = vunpack.c.l.b16 %v436
    %v1533 = vunpack.c.h.b16 %v436
    %v1534 = vunpack.c.l.b16 %v437
    %v1535 = vunpack.c.h.b16 %v437
    %v1536 = vunpack.c.l.b16 %v438
    %v1537 = vunpack.c.h.b16 %v438
    %v1538 = vunpack.c.l.b16 %v439
    %v1539 = vunpack.c.h.b16 %v439
    %v1540 = vunpack.c.l.b16 %v440
    %v1541 = vunpack.c.h.b16 %v440
    %v1542 = vunpack.c.l.b16 %v441
    %v1543 = vunpack.c.h.b16 %v441
    %v1544 = vunpack.c.l.b16 %v442
    %v1545 = vunpack.c.h.b16 %v442
    %v1546 = vunpack.c.l.b16 %v443
    %v1547 = vunpack.c.h.b16 %v443
    %v1548 = vunpack.c.l.b16 %v444
    %v1549 = vunpack.c.h.b16 %v444
    %v1550 = vunpack.c.l.b16 %v445
    %v1551 = vunpack.c.h.b16 %v445
    %v1552 = vunpack.c.l.b16 %v446
    %v1553 = vunpack.c.h.b16 %v446
    %v1554 = vunpack.c.l.b16 %v447
    %v1555 = vunpack.c.h.b16 %v447
    %v1556 = vunpack.c.l.b16 %v448
    %v1557 = vunpack.c.h.b16 %v448
    %v1558 = vunpack.c.l.b16 %v449
    %v1559 = vunpack.c.h.b16 %v449
    %v1560 = vunpack.c.l.b16 %v450
    %v1561 = vunpack.c.h.b16 %v450
    %v1562 = vunpack.c.l.b16 %v451
    %v1563 = vunpack.c.h.b16 %v451
    %v1564 = vunpack.c.l.b16 %v452
    %v1565 = vunpack.c.h.b16 %v452
    %v1566 = vunpack.c.l.b16 %v453
    %v1567 = vunpack.c.h.b16 %v453
    %v1568 = vunpack.c.l.b16 %v454
    %v1569 = vunpack.c.h.b16 %v454
    %v1570 = vunpack.c.l.b16 %v455
    %v1571 = vunpack.c.h.b16 %v455
    %v1572 = vunpack.c.l.b16 %v456
    %v1573 = vunpack.c.h.b16 %v456
    %v1574 = vunpack.c.l.b16 %v457
    %v1575 = vunpack.c.h.b16 %v457
    %v1576 = vunpack.c.l.b16 %v458
    %v1577 = vunpack.c.h.b16 %v458
    %v1578 = vunpack.c.l.b16 %v459
    %v1579 = vunpack.c.h.b16 %v459
    %v1580 = vunpack.c.l.b16 %v460
    %v1581 = vunpack.c.h.b16 %v460
    %v1582 = vunpack.c.l.b16 %v461
    %v1583 = vunpack.c.h.b16 %v461
    %v1584 = vunpack.c.l.b16 %v462
    %v1585 = vunpack.c.h.b16 %v462
    %v1586 = vunpack.c.l.b16 %v463
    %v1587 = vunpack.c.h.b16 %v463
    %v1588 = vunpack.c.l.b16 %v464
    %v1589 = vunpack.c.h.b16 %v464
    %v1590 = vunpack.c.l.b16 %v465
    %v1591 = vunpack.c.h.b16 %v465
    %v1592 = vunpack.c.l.b16 %v466
    %v1593 = vunpack.c.h.b16 %v466
    %v1594 = vunpack.c.l.b16 %v467
    %v1595 = vunpack.c.h.b16 %v467
    %v1596 = vunpack.c.l.b16 %v468
    %v1597 = vunpack.c.h.b16 %v468
    %v1598 = vunpack.c.l.b16 %v469
    %v1599 = vunpack.c.h.b16 %v469
    %v1600 = vunpack.c.l.b16 %v470
    %v1601 = vunpack.c.h.b16 %v470
    %v1602 = vunpack.c.l.b16 %v471
    %v1603 = vunpack.c.h.b16 %v471
    %v1604 = vunpack.c.l.b16 %v472
    %v1605 = vunpack.c.h.b16 %v472
    %v1606 = vunpack.c.l.b16 %v473
    %v1607 = vunpack.c.h.b16 %v473
    %v1608 = vunpack.c.l.b16 %v474
    %v1609 = vunpack.c.h.b16 %v474
    %v1610 = vunpack.c.l.b16 %v475
    %v1611 = vunpack.c.h.b16 %v475
    %v1612 = vunpack.c.l.b16 %v476
    %v1613 = vunpack.c.h.b16 %v476
    %v1614 = vunpack.c.l.b16 %v477
    %v1615 = vunpack.c.h.b16 %v477
    %v1616 = vunpack.c.l.b16 %v478
    %v1617 = vunpack.c.h.b16 %v478
    %v1618 = vunpack.c.l.b16 %v479
    %v1619 = vunpack.c.h.b16 %v479
    %v1620 = vunpack.c.l.b16 %v480
    %v1621 = vunpack.c.h.b16 %v480
    %v1622 = vunpack.c.l.b16 %v481
    %v1623 = vunpack.c.h.b16 %v481
    %v1624 = vunpack.c.l.b16 %v482
    %v1625 = vunpack.c.h.b16 %v482
    %v1626 = vunpack.c.l.b16 %v483
    %v1627 = vunpack.c.h.b16 %v483
    %v1628 = vunpack.c.l.b16 %v484
    %v1629 = vunpack.c.h.b16 %v484
    %v1630 = vunpack.c.l.b16 %v485
    %v1631 = vunpack.c.h.b16 %v485
    %v1632 = vunpack.c.l.b16 %v486
    %v1633 = vunpack.c.h.b16 %v486
    %v1634 = vunpack.c.l.b16 %v487
    %v1635 = vunpack.c.h.b16 %v487
    %v1636 = vunpack.c.l.b16 %v488
    %v1637 = vunpack.c.h.b16 %v488
    %v1638 = vunpack.c.l.b16 %v489
    %v1639 = vunpack.c.h.b16 %v489
    %v1640 = vunpack.c.l.b16 %v490
    %v1641 = vunpack.c.h.b16 %v490
    %v1642 = vunpack.c.l.b16 %v491
    %v1643 = vunpack.c.h.b16 %v491
    %v1644 = vunpack.c.l.b16 %v492
    %v1645 = vunpack.c.h.b16 %v492
    %v1646 = vunpack.c.l.b16 %v493
    %v1647 = vunpack.c.h.b16 %v493
    %v1648 = vunpack.c.l.b16 %v494
    %v1649 = vunpack.c.h.b16 %v494
    %v1650 = vunpack.c.l.b16 %v495
    %v1651 = vunpack.c.h.b16 %v495
    %v1652 = vunpack.c.l.b16 %v496
    %v1653 = vunpack.c.h.b16 %v496
    %v1654 = vunpack.c.l.b16 %v497
    %v1655 = vunpack.c.h.b16 %v497
    %v1656 = vunpack.c.l.b16 %v498
    %v1657 = vunpack.c.h.b16 %v498
    %v1658 = vunpack.c.l.b16 %v499
    %v1659 = vunpack.c.h.b16 %v499
    %v1660 = vunpack.c.l.b16 %v500
    %v1661 = vunpack.c.h.b16 %v500
    %v1662 = vunpack.c.l.b16 %v501
    %v1663 = vunpack.c.h.b16 %v501
    %v1664 = vunpack.c.l.b16 %v502
    %v1665 = vunpack.c.h.b16 %v502
    %v1666 = vunpack.c.l.b16 %v503
    %v1667 = vunpack.c.h.b16 %v503
    %v1668 = vunpack.c.l.b16 %v504
    %v1669 = vunpack.c.h.b16 %v504
    %v1670 = vunpack.c.l.b16 %v505
    %v1671 = vunpack.c.h.b16 %v505
    %v1672 = vunpack.c.l.b16 %v506
    %v1673 = vunpack.c.h.b16 %v506
    %v1674 = vunpack.c.l.b16 %v507
    %v1675 = vunpack.c.h.b16 %v507
    %v1676 = vunpack.c.l.b16 %v508
    %v1677 = vunpack.c.h.b16 %v508
    %v1678 = vunpack.c.l.b16 %v509
    %v1679 = vunpack.c.h.b16 %v509
    %v1680 = vunpack.c.l.b16 %v510
    %v1681 = vunpack.c.h.b16 %v510
    %v1682 = vunpack.c.l.b16 %v511
    %v1683 = vunpack.c.h.b16 %v511
    %v1684 = vunpack.c.l.b16 %v512
    %v1685 = vunpack.c.h.b16 %v512
    %v1686 = vunpack.c.l.b16 %v513
    %v1687 = vunpack.c.h.b16 %v513
    %v1688 = vunpack.c.l.b16 %v514
    %v1689 = vunpack.c.h.b16 %v514
    %v1690 = vunpack.c.l.b16 %v515
    %v1691 = vunpack.c.h.b16 %v515
    %v1692 = vunpack.c.l.b16 %v516
    %v1693 = vunpack.c.h.b16 %v516
    %v1694 = vunpack.c.l.b16 %v517
    %v1695 = vunpack.c.h.b16 %v517
    %v1696 = vunpack.c.l.b16 %v518
    %v1697 = vunpack.c.h.b16 %v518
    %v1698 = vunpack.c.l.b16 %v519
    %v1699 = vunpack.c.h.b16 %v519
    %v1700 = vunpack.c.l.b16 %v520
    %v1701 = vunpack.c.h.b16 %v520
    %v1702 = vunpack.c.l.b16 %v521
    %v1703 = vunpack.c.h.b16 %v521
    %v1704 = vunpack.c.l.b16 %v522
    %v1705 = vunpack.c.h.b16 %v522
    %v1706 = vunpack.c.l.b16 %v523
    %v1707 = vunpack.c.h.b16 %v523
    %v1708 = vunpack.c.l.b16 %v524
    %v1709 = vunpack.c.h.b16 %v524
    %v1710 = vunpack.c.l.b16 %v525
    %v1711 = vunpack.c.h.b16 %v525
    %v1712 = vunpack.c.l.b16 %v526
    %v1713 = vunpack.c.h.b16 %v526
    %v1714 = vunpack.c.l.b16 %v527
    %v1715 = vunpack.c.h.b16 %v527
    %v1716 = vunpack.c.l.b16 %v528
    %v1717 = vunpack.c.h.b16 %v528
    %v1718 = vunpack.c.l.b16 %v529
    %v1719 = vunpack.c.h.b16 %v529
    %v1720 = vunpack.c.l.b16 %v530
    %v1721 = vunpack.c.h.b16 %v530
    %v1722 = vunpack.c.l.b16 %v531
    %v1723 = vunpack.c.h.b16 %v531
    %v1724 = vunpack.c.l.b16 %v532
    %v1725 = vunpack.c.h.b16 %v532
    %v1726 = vunpack.c.l.b16 %v533
    %v1727 = vunpack.c.h.b16 %v533
    %v1728 = vunpack.c.l.b16 %v534
    %v1729 = vunpack.c.h.b16 %v534
    %v1730 = vunpack.c.l.b16 %v535
    %v1731 = vunpack.c.h.b16 %v535
    %v1732 = vunpack.c.l.b16 %v536
    %v1733 = vunpack.c.h.b16 %v536
    %v1734 = vunpack.c.l.b16 %v537
    %v1735 = vunpack.c.h.b16 %v537
    %v1736 = vunpack.c.l.b16 %v538
    %v1737 = vunpack.c.h.b16 %v538
    %v1738 = vunpack.c.l.b16 %v539
    %v1739 = vunpack.c.h.b16 %v539
    %v1740 = vunpack.c.l.b16 %v540
    %v1741 = vunpack.c.h.b16 %v540
    %v1742 = vunpack.c.l.b16 %v541
    %v1743 = vunpack.c.h.b16 %v541
    %v1744 = vunpack.c.l.b16 %v542
    %v1745 = vunpack.c.h.b16 %v542
    %v1746 = vunpack.c.l.b16 %v543
    %v1747 = vunpack.c.h.b16 %v543
    %v1748 = vunpack.c.l.b16 %v544
    %v1749 = vunpack.c.h.b16 %v544
    %v1750 = vunpack.c.l.b16 %v545
    %v1751 = vunpack.c.h.b16 %v545
    %v1752 = vunpack.c.l.b16 %v546
    %v1753 = vunpack.c.h.b16 %v546
    %v1754 = vunpack.c.l.b16 %v547
    %v1755 = vunpack.c.h.b16 %v547
    %v1756 = vunpack.c.l.b16 %v548
    %v1757 = vunpack.c.h.b16 %v548
    %v1758 = vunpack.c.l.b16 %v549
    %v1759 = vunpack.c.h.b16 %v549
    %v1760 = vunpack.c.l.b16 %v550
    %v1761 = vunpack.c.h.b16 %v550
    %v1762 = vunpack.c.l.b16 %v551
    %v1763 = vunpack.c.h.b16 %v551
    %v1764 = vunpack.c.l.b16 %v552
    %v1765 = vunpack.c.h.b16 %v552
    %v1766 = vunpack.c.l.b16 %v553
    %v1767 = vunpack.c.h.b16 %v553
    %v1768 = vunpack.c.l.b16 %v554
    %v1769 = vunpack.c.h.b16 %v554
    %v1770 = vunpack.c.l.b16 %v555
    %v1771 = vunpack.c.h.b16 %v555
    %v1772 = vunpack.c.l.b16 %v556
    %v1773 = vunpack.c.h.b16 %v556
    %v1774 = vunpack.c.l.b16 %v557
    %v1775 = vunpack.c.h.b16 %v557
    %v1776 = vunpack.c.l.b16 %v558
    %v1777 = vunpack.c.h.b16 %v558
    %v1778 = vunpack.c.l.b16 %v559
    %v1779 = vunpack.c.h.b16 %v559
    %v1780 = vunpack.c.l.b16 %v560
    %v1781 = vunpack.c.h.b16 %v560
    %v1782 = vunpack.c.l.b16 %v561
    %v1783 = vunpack.c.h.b16 %v561
    %v1784 = vunpack.c.l.b16 %v562
    %v1785 = vunpack.c.h.b16 %v562
    %v1786 = vunpack.c.l.b16 %v563
    %v1787 = vunpack.c.h.b16 %v563
    %v1788 = vunpack.c.l.b16 %v564
    %v1789 = vunpack.c.h.b16 %v564
    %v1790 = vunpack.c.l.b16 %v565
    %v1791 = vunpack.c.h.b16 %v565
    %v1792 = vpack.c.b16 %v1284, %v1280
    %v1793 = vpack.c.b16 %v1285, %v1281
    %v1794 = vpack.c.b16 %v1286, %v1282
    %v1795 = vpack.c.b16 %v1287, %v1283
    %v1796 = vpack.c.b16 %v1292, %v1288
    %v1797 = vpack.c.b16 %v1293, %v1289
    %v1798 = vpack.c.b16 %v1294, %v1290
    %v1799 = vpack.c.b16 %v1295, %v1291
    %v1800 = vpack.c.b16 %v1300, %v1296
    %v1801 = vpack.c.b16 %v1301, %v1297
    %v1802 = vpack.c.b16 %v1302, %v1298
    %v1803 = vpack.c.b16 %v1303, %v1299
    %v1804 = vpack.c.b16 %v1308, %v1304
    %v1805 = vpack.c.b16 %v1309, %v1305
    %v1806 = vpack.c.b16 %v1310, %v1306
    %v1807 = vpack.c.b16 %v1311, %v1307
    %v1808 = vpack.c.b16 %v1316, %v1312
    %v1809 = vpack.c.b16 %v1317, %v1313
    %v1810 = vpack.c.b16 %v1318, %v1314
    %v1811 = vpack.c.b16 %v1319, %v1315
    %v1812 = vpack.c.b16 %v1324, %v1320
    %v1813 = vpack.c.b16 %v1325, %v1321
    %v1814 = vpack.c.b16 %v1326, %v1322
    %v1815 = vpack.c.b16 %v1327, %v1323
    %v1816 = vpack.c.b16 %v1332, %v1328
    %v1817 = vpack.c.b16 %v1333, %v1329
    %v1818 = vpack.c.b16 %v1334, %v1330
    %v1819 = vpack.c.b16 %v1335, %v1331
    %v1820 = vpack.c.b16 %v1340, %v1336
    %v1821 = vpack.c.b16 %v1341, %v1337
    %v1822 = vpack.c.b16 %v1342, %v1338
    %v1823 = vpack.c.b16 %v1343, %v1339
    %v1824 = vpack.c.b16 %v1348, %v1344
    %v1825 = vpack.c.b16 %v1349, %v1345
    %v1826 = vpack.c.b16 %v1350, %v1346
    %v1827 = vpack.c.b16 %v1351, %v1347
    %v1828 = vpack.c.b16 %v1356, %v1352
    %v1829 = vpack.c.b16 %v1357, %v1353
    %v1830 = vpack.c.b16 %v1358, %v1354
    %v1831 = vpack.c.b16 %v1359, %v1355
    %v1832 = vpack.c.b16 %v1364, %v1360
    %v1833 = vpack.c.b16 %v1365, %v1361
    %v1834 = vpack.c.b16 %v1366, %v1362
    %v1835 = vpack.c.b16 %v1367, %v1363
    %v1836 = vpack.c.b16 %v1372, %v1368
    %v1837 = vpack.c.b16 %v1373, %v1369
    %v1838 = vpack.c.b16 %v1374, %v1370
    %v1839 = vpack.c.b16 %v1375, %v1371
    %v1840 = vpack.c.b16 %v1380, %v1376
    %v1841 = vpack.c.b16 %v1381, %v1377
    %v1842 = vpack.c.b16 %v1382, %v1378
    %v1843 = vpack.c.b16 %v1383, %v1379
    %v1844 = vpack.c.b16 %v1388, %v1384
    %v1845 = vpack.c.b16 %v1389, %v1385
    %v1846 = vpack.c.b16 %v1390, %v1386
    %v1847 = vpack.c.b16 %v1391, %v1387
    %v1848 = vpack.c.b16 %v1396, %v1392
    %v1849 = vpack.c.b16 %v1397, %v1393
    %v1850 = vpack.c.b16 %v1398, %v1394
    %v1851 = vpack.c.b16 %v1399, %v1395
    %v1852 = vpack.c.b16 %v1404, %v1400
    %v1853 = vpack.c.b16 %v1405, %v1401
    %v1854 = vpack.c.b16 %v1406, %v1402
    %v1855 = vpack.c.b16 %v1407, %v1403
    %v1856 = vpack.c.b16 %v1412, %v1408
    %v1857 = vpack.c.b16 %v1413, %v1409
    %v1858 = vpack.c.b16 %v1414, %v1410
    %v1859 = vpack.c.b16 %v1415, %v1411
    %v1860 = vpack.c.b16 %v1420, %v1416
    %v1861 = vpack.c.b16 %v1421, %v1417
    %v1862 = vpack.c.b16 %v1422, %v1418
    %v1863 = vpack.c.b16 %v1423, %v1419
    %v1864 = vpack.c.b16 %v1428, %v1424
    %v1865 = vpack.c.b16 %v1429, %v1425
    %v1866 = vpack.c.b16 %v1430, %v1426
    %v1867 = vpack.c.b16 %v1431, %v1427
    %v1868 = vpack.c.b16 %v1436, %v1432
    %v1869 = vpack.c.b16 %v1437, %v1433
    %v1870 = vpack.c.b16 %v1438, %v1434
    %v1871 = vpack.c.b16 %v1439, %v1435
    %v1872 = vpack.c.b16 %v1444, %v1440
    %v1873 = vpack.c.b16 %v1445, %v1441
    %v1874 = vpack.c.b16 %v1446, %v1442
    %v1875 = vpack.c.b16 %v1447, %v1443
    %v1876 = vpack.c.b16 %v1452, %v1448
    %v1877 = vpack.c.b16 %v1453, %v1449
    %v1878 = vpack.c.b16 %v1454, %v1450
    %v1879 = vpack.c.b16 %v1455, %v1451
    %v1880 = vpack.c.b16 %v1460, %v1456
    %v1881 = vpack.c.b16 %v1461, %v1457
    %v1882 = vpack.c.b16 %v1462, %v1458
    %v1883 = vpack.c.b16 %v1463, %v1459
    %v1884 = vpack.c.b16 %v1468, %v1464
    %v1885 = vpack.c.b16 %v1469, %v1465
    %v1886 = vpack.c.b16 %v1470, %v1466
    %v1887 = vpack.c.b16 %v1471, %v1467
    %v1888 = vpack.c.b16 %v1476, %v1472
    %v1889 = vpack.c.b16 %v1477, %v1473
    %v1890 = vpack.c.b16 %v1478, %v1474
    %v1891 = vpack.c.b16 %v1479, %v1475
    %v1892 = vpack.c.b16 %v1484, %v1480
    %v1893 = vpack.c.b16 %v1485, %v1481
    %v1894 = vpack.c.b16 %v1486, %v1482
    %v1895 = vpack.c.b16 %v1487, %v1483
    %v1896 = vpack.c.b16 %v1492, %v1488
    %v1897 = vpack.c.b16 %v1493, %v1489
    %v1898 = vpack.c.b16 %v1494, %v1490
    %v1899 = vpack.c.b16 %v1495, %v1491
    %v1900 = vpack.c.b16 %v1500, %v1496
    %v1901 = vpack.c.b16 %v1501, %v1497
    %v1902 = vpack.c.b16 %v1502, %v1498
    %v1903 = vpack.c.b16 %v1503, %v1499
    %v1904 = vpack.c.b16 %v1508, %v1504
    %v1905 = vpack.c.b16 %v1509, %v1505
    %v1906 = vpack.c.b16 %v1510, %v1506
    %v1907 = vpack.c.b16 %v1511, %v1507
    %v1908 = vpack.c.b16 %v1516, %v1512
    %v1909 = vpack.c.b16 %v1517, %v1513
    %v1910 = vpack.c.b16 %v1518, %v1514
    %v1911 = vpack.c.b16 %v1519, %v1515
    %v1912 = vpack.c.b16 %v1524, %v1520
    %v1913 = vpack.c.b16 %v1525, %v1521
    %v1914 = vpack.c.b16 %v1526, %v1522
    %v1915 = vpack.c.b16 %v1527, %v1523
    %v1916 = vpack.c.b16 %v1532, %v1528
    %v1917 = vpack.c.b16 %v1533, %v1529
    %v1918 = vpack.c.b16 %v1534, %v1530
    %v1919 = vpack.c.b16 %v1535, %v1531
    %v1920 = vpack.c.b16 %v1540, %v1536
    %v1921 = vpack.c.b16 %v1541, %v1537
    %v1922 = vpack.c.b16 %v1542, %v1538
    %v1923 = vpack.c.b16 %v1543, %v1539
    %v1924 = vpack.c.b16 %v1548, %v1544
    %v1925 = vpack.c.b16 %v1549, %v1545
    %v1926 = vpack.c.b16 %v1550, %v1546
    %v1927 = vpack.c.b16 %v1551, %v1547
    %v1928 = vpack.c.b16 %v1556, %v1552
    %v1929 = vpack.c.b16 %v1557, %v1553
    %v1930 = vpack.c.b16 %v1558, %v1554
    %v1931 = vpack.c.b16 %v1559, %v1555
    %v1932 = vpack.c.b16 %v1564, %v1560
    %v1933 = vpack.c.b16 %v1565, %v1561
    %v1934 = vpack.c.b16 %v1566, %v1562
    %v1935 = vpack.c.b16 %v1567, %v1563
    %v1936 = vpack.c.b16 %v1572, %v1568
    %v1937 = vpack.c.b16 %v1573, %v1569
    %v1938 = vpack.c.b16 %v1574, %v1570
    %v1939 = vpack.c.b16 %v1575, %v1571
    %v1940 = vpack.c.b16 %v1580, %v1576
    %v1941 = vpack.c.b16 %v1581, %v1577
    %v1942 = vpack.c.b16 %v1582, %v1578
    %v1943 = vpack.c.b16 %v1583, %v1579
    %v1944 = vpack.c.b16 %v1588, %v1584
    %v1945 = vpack.c.b16 %v1589, %v1585
    %v1946 = vpack.c.b16 %v1590, %v1586
    %v1947 = vpack.c.b16 %v1591, %v1587
    %v1948 = vpack.c.b16 %v1596, %v1592
    %v1949 = vpack.c.b16 %v1597, %v1593
    %v1950 = vpack.c.b16 %v1598, %v1594
    %v1951 = vpack.c.b16 %v1599, %v1595
    %v1952 = vpack.c.b16 %v1604, %v1600
    %v1953 = vpack.c.b16 %v1605, %v1601
    %v1954 = vpack.c.b16 %v1606, %v1602
    %v1955 = vpack.c.b16 %v1607, %v1603
    %v1956 = vpack.c.b16 %v1612, %v1608
    %v1957 = vpack.c.b16 %v1613, %v1609
    %v1958 = vpack.c.b16 %v1614, %v1610
    %v1959 = vpack.c.b16 %v1615, %v1611
    %v1960 = vpack.c.b16 %v1620, %v1616
    %v1961 = vpack.c.b16 %v1621, %v1617
    %v1962 = vpack.c.b16 %v1622, %v1618
    %v1963 = vpack.c.b16 %v1623, %v1619
    %v1964 = vpack.c.b16 %v1628, %v1624
    %v1965 = vpack.c.b16 %v1629, %v1625
    %v1966 = vpack.c.b16 %v1630, %v1626
    %v1967 = vpack.c.b16 %v1631, %v1627
    %v1968 = vpack.c.b16 %v1636, %v1632
    %v1969 = vpack.c.b16 %v1637, %v1633
    %v1970 = vpack.c.b16 %v1638, %v1634
    %v1971 = vpack.c.b16 %v1639, %v1635
    %v1972 = vpack.c.b16 %v1644, %v1640
    %v1973 = vpack.c.b16 %v1645, %v1641
    %v1974 = vpack.c.b16 %v1646, %v1642
    %v1975 = vpack.c.b16 %v1647, %v1643
    %v1976 = vpack.c.b16 %v1652, %v1648
    %v1977 = vpack.c.b16 %v1653, %v1649
    %v1978 = vpack.c.b16 %v1654, %v1650
    %v1979 = vpack.c.b16 %v1655, %v1651
    %v1980 = vpack.c.b16 %v1660, %v1656
    %v1981 = vpack.c.b16 %v1661, %v1657
    %v1982 = vpack.c.b16 %v1662, %v1658
    %v1983 = vpack.c.b16 %v1663, %v1659
    %v1984 = vpack.c.b16 %v1668, %v1664
    %v1985 = vpack.c.b16 %v1669, %v1665
    %v1986 = vpack.c.b16 %v1670, %v1666
    %v1987 = vpack.c.b16 %v1671, %v1667
    %v1988 = vpack.c.b16 %v1676, %v1672
    %v1989 = vpack.c.b16 %v1677, %v1673
    %v1990 = vpack.c.b16 %v1678, %v1674
    %v1991 = vpack.c.b16 %v1679, %v1675
    %v1992 = vpack.c.b16 %v1684, %v1680
    %v1993 = vpack.c.b16 %v1685, %v1681
    %v1994 = vpack.c.b16 %v1686, %v1682
    %v1995 = vpack.c.b16 %v1687, %v1683
    %v1996 = vpack.c.b16 %v1692, %v1688
    %v1997 = vpack.c.b16 %v1693, %v1689
    %v1998 = vpack.c.b16 %v1694, %v1690
    %v1999 = vpack.c.b16 %v1695, %v1691
    %v2000 = vpack.c.b16 %v1700, %v1696
    %v2001 = vpack.c.b16 %v1701, %v1697
    %v2002 = vpack.c.b16 %v1702, %v1698
    %v2003 = vpack.c.b16 %v1703, %v1699
    %v2004 = vpack.c.b16 %v1708, %v1704
    %v2005 = vpack.c.b16 %v1709, %v1705
    %v2006 = vpack.c.b16 %v1710, %v1706
    %v2007 = vpack.c.b16 %v1711, %v1707
    %v2008 = vpack.c.b16 %v1716, %v1712
    %v2009 = vpack.c.b16 %v1717, %v1713
    %v2010 = vpack.c.b16 %v1718, %v1714
    %v2011 = vpack.c.b16 %v1719, %v1715
    %v2012 = vpack.c.b16 %v1724, %v1720
    %v2013 = vpack.c.b16 %v1725, %v1721
    %v2014 = vpack.c.b16 %v1726, %v1722
    %v2015 = vpack.c.b16 %v1727, %v1723
    %v2016 = vpack.c.b16 %v1732, %v1728
    %v2017 = vpack.c.b16 %v1733, %v1729
    %v2018 = vpack.c.b16 %v1734, %v1730
    %v2019 = vpack.c.b16 %v1735, %v1731
    %v2020 = vpack.c.b16 %v1740, %v1736
    %v2021 = vpack.c.b16 %v1741, %v1737
    %v2022 = vpack.c.b16 %v1742, %v1738
    %v2023 = vpack.c.b16 %v1743, %v1739
    %v2024 = vpack.c.b16 %v1748, %v1744
    %v2025 = vpack.c.b16 %v1749, %v1745
    %v2026 = vpack.c.b16 %v1750, %v1746
    %v2027 = vpack.c.b16 %v1751, %v1747
    %v2028 = vpack.c.b16 %v1756, %v1752
    %v2029 = vpack.c.b16 %v1757, %v1753
    %v2030 = vpack.c.b16 %v1758, %v1754
    %v2031 = vpack.c.b16 %v1759, %v1755
    %v2032 = vpack.c.b16 %v1764, %v1760
    %v2033 = vpack.c.b16 %v1765, %v1761
    %v2034 = vpack.c.b16 %v1766, %v1762
    %v2035 = vpack.c.b16 %v1767, %v1763
    %v2036 = vpack.c.b16 %v1772, %v1768
    %v2037 = vpack.c.b16 %v1773, %v1769
    %v2038 = vpack.c.b16 %v1774, %v1770
    %v2039 = vpack.c.b16 %v1775, %v1771
    %v2040 = vpack.c.b16 %v1780, %v1776
    %v2041 = vpack.c.b16 %v1781, %v1777
    %v2042 = vpack.c.b16 %v1782, %v1778
    %v2043 = vpack.c.b16 %v1783, %v1779
    %v2044 = vpack.c.b16 %v1788, %v1784
    %v2045 = vpack.c.b16 %v1789, %v1785
    %v2046 = vpack.c.b16 %v1790, %v1786
    %v2047 = vpack.c.b16 %v1791, %v1787
    %2304 = vmatprep.subr.bf16.mxu0 %v1793
    %2305 = vmatpush1.bf16.msra.mxu0 %v1792
    %2306 = vmatprep.subr.bf16.mxu0 %v1797
    %2307 = vmatpush1.bf16.msra.mxu0 %v1796
    %2308 = vmatprep.subr.bf16.mxu0 %v1801
    %2309 = vmatpush1.bf16.msra.mxu0 %v1800
    %2310 = vmatprep.subr.bf16.mxu0 %v1805
    %2311 = vmatpush1.bf16.msra.mxu0 %v1804
    %2312 = vmatprep.subr.bf16.mxu0 %v1809
    %2313 = vmatpush1.bf16.msra.mxu0 %v1808
    %2314 = vmatprep.subr.bf16.mxu0 %v1813
    %2315 = vmatpush1.bf16.msra.mxu0 %v1812
    %2316 = vmatprep.subr.bf16.mxu0 %v1817
    %2317 = vmatpush1.bf16.msra.mxu0 %v1816
    %2318 = vmatprep.subr.bf16.mxu0 %v1821
    %2319 = vmatpush1.bf16.msra.mxu0 %v1820
    %2320 = vmatprep.subr.bf16.mxu0 %v1825
    %2321 = vmatpush1.bf16.msra.mxu0 %v1824
    %2322 = vmatprep.subr.bf16.mxu0 %v1829
    %2323 = vmatpush1.bf16.msra.mxu0 %v1828
    %2324 = vmatprep.subr.bf16.mxu0 %v1833
    %2325 = vmatpush1.bf16.msra.mxu0 %v1832
    %2326 = vmatprep.subr.bf16.mxu0 %v1837
    %2327 = vmatpush1.bf16.msra.mxu0 %v1836
    %2328 = vmatprep.subr.bf16.mxu0 %v1841
    %2329 = vmatpush1.bf16.msra.mxu0 %v1840
    %2330 = vmatprep.subr.bf16.mxu0 %v1845
    %2331 = vmatpush1.bf16.msra.mxu0 %v1844
    %2332 = vmatprep.subr.bf16.mxu0 %v1849
    %2333 = vmatpush1.bf16.msra.mxu0 %v1848
    %2334 = vmatprep.subr.bf16.mxu0 %v1853
    %2335 = vmatpush1.bf16.msra.mxu0 %v1852
    %2336 = vmatprep.mubr.bf16.mxu0 %v1004
    %2337 = vmatmul.mubr.bf16.gmra.mrb[0].mxu0 %v990
    %v2338 = vpop.f32.mrb[0].mxu0
    %v2339 = vadd.f32 %v919, %v2338
    %v2340 = vpop.f32.mrb[0].mxu0
    %v2341 = vadd.f32 %v921, %v2340
    %v2342 = vpop.f32.mrb[0].mxu0
    %v2343 = vpop.f32.mrb[0].mxu0
    %2344 = vdwg.mxu0
    %2345 = vmatprep.subr.bf16.mxu0 %v1857
    %2346 = vmatpush1.bf16.msra.mxu0 %v1856
    %2347 = vmatprep.subr.bf16.mxu0 %v1861
    %2348 = vmatpush1.bf16.msra.mxu0 %v1860
    %2349 = vmatprep.subr.bf16.mxu0 %v1865
    %2350 = vmatpush1.bf16.msra.mxu0 %v1864
    %2351 = vmatprep.subr.bf16.mxu0 %v1869
    %2352 = vmatpush1.bf16.msra.mxu0 %v1868
    %2353 = vmatprep.subr.bf16.mxu0 %v1873
    %2354 = vmatpush1.bf16.msra.mxu0 %v1872
    %2355 = vmatprep.subr.bf16.mxu0 %v1877
    %2356 = vmatpush1.bf16.msra.mxu0 %v1876
    %2357 = vmatprep.subr.bf16.mxu0 %v1881
    %2358 = vmatpush1.bf16.msra.mxu0 %v1880
    %2359 = vmatprep.subr.bf16.mxu0 %v1885
    %2360 = vmatpush1.bf16.msra.mxu0 %v1884
    %2361 = vmatprep.subr.bf16.mxu0 %v1889
    %2362 = vmatpush1.bf16.msra.mxu0 %v1888
    %2363 = vmatprep.subr.bf16.mxu0 %v1893
    %2364 = vmatpush1.bf16.msra.mxu0 %v1892
    %2365 = vmatprep.subr.bf16.mxu0 %v1897
    %2366 = vmatpush1.bf16.msra.mxu0 %v1896
    %2367 = vmatprep.subr.bf16.mxu0 %v1901
    %2368 = vmatpush1.bf16.msra.mxu0 %v1900
    %2369 = vmatprep.subr.bf16.mxu0 %v1905
    %2370 = vmatpush1.bf16.msra.mxu0 %v1904
    %2371 = vmatprep.subr.bf16.mxu0 %v1909
    %2372 = vmatpush1.bf16.msra.mxu0 %v1908
    %2373 = vmatprep.subr.bf16.mxu0 %v1913
    %2374 = vmatpush1.bf16.msra.mxu0 %v1912
    %2375 = vmatprep.subr.bf16.mxu0 %v1917
    %2376 = vmatpush1.bf16.msra.mxu0 %v1916
    %2377 = vmatprep.mubr.bf16.mxu0 %v1014
    %2378 = vmatmul.mubr.bf16.gmra.mrb[0].mxu0 %v1012
    %v2379 = vpop.f32.mrb[0].mxu0
    %v2380 = vadd.f32 %v2339, %v2379
    %v2381 = vpop.f32.mrb[0].mxu0
    %v2382 = vadd.f32 %v2341, %v2381
    %v2383 = vpop.f32.mrb[0].mxu0
    %v2384 = vpop.f32.mrb[0].mxu0
    %2385 = vdwg.mxu0
    %2386 = vmatprep.subr.bf16.mxu0 %v1921
    %2387 = vmatpush1.bf16.msra.mxu0 %v1920
    %2388 = vmatprep.subr.bf16.mxu0 %v1925
    %2389 = vmatpush1.bf16.msra.mxu0 %v1924
    %2390 = vmatprep.subr.bf16.mxu0 %v1929
    %2391 = vmatpush1.bf16.msra.mxu0 %v1928
    %2392 = vmatprep.subr.bf16.mxu0 %v1933
    %2393 = vmatpush1.bf16.msra.mxu0 %v1932
    %2394 = vmatprep.subr.bf16.mxu0 %v1937
    %2395 = vmatpush1.bf16.msra.mxu0 %v1936
    %2396 = vmatprep.subr.bf16.mxu0 %v1941
    %2397 = vmatpush1.bf16.msra.mxu0 %v1940
    %2398 = vmatprep.subr.bf16.mxu0 %v1945
    %2399 = vmatpush1.bf16.msra.mxu0 %v1944
    %2400 = vmatprep.subr.bf16.mxu0 %v1949
    %2401 = vmatpush1.bf16.msra.mxu0 %v1948
    %2402 = vmatprep.subr.bf16.mxu0 %v1953
    %2403 = vmatpush1.bf16.msra.mxu0 %v1952
    %2404 = vmatprep.subr.bf16.mxu0 %v1957
    %2405 = vmatpush1.bf16.msra.mxu0 %v1956
    %2406 = vmatprep.subr.bf16.mxu0 %v1961
    %2407 = vmatpush1.bf16.msra.mxu0 %v1960
    %2408 = vmatprep.subr.bf16.mxu0 %v1965
    %2409 = vmatpush1.bf16.msra.mxu0 %v1964
    %2410 = vmatprep.subr.bf16.mxu0 %v1969
    %2411 = vmatpush1.bf16.msra.mxu0 %v1968
    %2412 = vmatprep.subr.bf16.mxu0 %v1973
    %2413 = vmatpush1.bf16.msra.mxu0 %v1972
    %2414 = vmatprep.subr.bf16.mxu0 %v1977
    %2415 = vmatpush1.bf16.msra.mxu0 %v1976
    %2416 = vmatprep.subr.bf16.mxu0 %v1981
    %2417 = vmatpush1.bf16.msra.mxu0 %v1980
    %2418 = vmatprep.mubr.bf16.mxu0 %v1011
    %2419 = vmatmul.mubr.bf16.gmra.mrb[0].mxu0 %v997
    %v2420 = vpop.f32.mrb[0].mxu0
    %v2421 = vadd.f32 %v2380, %v2420
    %v2422 = vpop.f32.mrb[0].mxu0
    %v2423 = vadd.f32 %v2382, %v2422
    %v2424 = vpop.f32.mrb[0].mxu0
    %v2425 = vpop.f32.mrb[0].mxu0
    %2426 = vdwg.mxu0
    %2427 = vmatprep.subr.bf16.mxu0 %v1985
    %2428 = vmatpush1.bf16.msra.mxu0 %v1984
    %2429 = vmatprep.subr.bf16.mxu0 %v1989
    %2430 = vmatpush1.bf16.msra.mxu0 %v1988
    %2431 = vmatprep.subr.bf16.mxu0 %v1993
    %2432 = vmatpush1.bf16.msra.mxu0 %v1992
    %2433 = vmatprep.subr.bf16.mxu0 %v1997
    %2434 = vmatpush1.bf16.msra.mxu0 %v1996
    %2435 = vmatprep.subr.bf16.mxu0 %v2001
    %2436 = vmatpush1.bf16.msra.mxu0 %v2000
    %2437 = vmatprep.subr.bf16.mxu0 %v2005
    %2438 = vmatpush1.bf16.msra.mxu0 %v2004
    %2439 = vmatprep.subr.bf16.mxu0 %v2009
    %2440 = vmatpush1.bf16.msra.mxu0 %v2008
    %2441 = vmatprep.subr.bf16.mxu0 %v2013
    %2442 = vmatpush1.bf16.msra.mxu0 %v2012
    %2443 = vmatprep.subr.bf16.mxu0 %v2017
    %2444 = vmatpush1.bf16.msra.mxu0 %v2016
    %2445 = vmatprep.subr.bf16.mxu0 %v2021
    %2446 = vmatpush1.bf16.msra.mxu0 %v2020
    %2447 = vmatprep.subr.bf16.mxu0 %v2025
    %2448 = vmatpush1.bf16.msra.mxu0 %v2024
    %2449 = vmatprep.subr.bf16.mxu0 %v2029
    %2450 = vmatpush1.bf16.msra.mxu0 %v2028
    %2451 = vmatprep.subr.bf16.mxu0 %v2033
    %2452 = vmatpush1.bf16.msra.mxu0 %v2032
    %2453 = vmatprep.subr.bf16.mxu0 %v2037
    %2454 = vmatpush1.bf16.msra.mxu0 %v2036
    %2455 = vmatprep.subr.bf16.mxu0 %v2041
    %2456 = vmatpush1.bf16.msra.mxu0 %v2040
    %2457 = vmatprep.subr.bf16.mxu0 %v2045
    %2458 = vmatpush1.bf16.msra.mxu0 %v2044
    %2459 = vmatprep.mubr.bf16.mxu0 %v1015
    %2460 = vmatmul.mubr.bf16.gmra.mrb[0].mxu0 %v1013
    %v2461 = vpop.f32.mrb[0].mxu0
    %v2462 = vadd.f32 %v2421, %v2461
    %v2463 = vpop.f32.mrb[0].mxu0
    %v2464 = vadd.f32 %v2423, %v2463
    %v2465 = vpop.f32.mrb[0].mxu0
    %v2466 = vpop.f32.mrb[0].mxu0
    %2467 = vdwg.mxu0
    %2468 = vmatprep.subr.bf16.mxu0 %v1795
    %2469 = vmatpush1.bf16.msra.mxu0 %v1794
    %2470 = vmatprep.subr.bf16.mxu0 %v1799
    %2471 = vmatpush1.bf16.msra.mxu0 %v1798
    %2472 = vmatprep.subr.bf16.mxu0 %v1803
    %2473 = vmatpush1.bf16.msra.mxu0 %v1802
    %2474 = vmatprep.subr.bf16.mxu0 %v1807
    %2475 = vmatpush1.bf16.msra.mxu0 %v1806
    %2476 = vmatprep.subr.bf16.mxu0 %v1811
    %2477 = vmatpush1.bf16.msra.mxu0 %v1810
    %2478 = vmatprep.subr.bf16.mxu0 %v1815
    %2479 = vmatpush1.bf16.msra.mxu0 %v1814
    %2480 = vmatprep.subr.bf16.mxu0 %v1819
    %2481 = vmatpush1.bf16.msra.mxu0 %v1818
    %2482 = vmatprep.subr.bf16.mxu0 %v1823
    %2483 = vmatpush1.bf16.msra.mxu0 %v1822
    %2484 = vmatprep.subr.bf16.mxu0 %v1827
    %2485 = vmatpush1.bf16.msra.mxu0 %v1826
    %2486 = vmatprep.subr.bf16.mxu0 %v1831
    %2487 = vmatpush1.bf16.msra.mxu0 %v1830
    %2488 = vmatprep.subr.bf16.mxu0 %v1835
    %2489 = vmatpush1.bf16.msra.mxu0 %v1834
    %2490 = vmatprep.subr.bf16.mxu0 %v1839
    %2491 = vmatpush1.bf16.msra.mxu0 %v1838
    %2492 = vmatprep.subr.bf16.mxu0 %v1843
    %2493 = vmatpush1.bf16.msra.mxu0 %v1842
    %2494 = vmatprep.subr.bf16.mxu0 %v1847
    %2495 = vmatpush1.bf16.msra.mxu0 %v1846
    %2496 = vmatprep.subr.bf16.mxu0 %v1851
    %2497 = vmatpush1.bf16.msra.mxu0 %v1850
    %2498 = vmatprep.subr.bf16.mxu0 %v1855
    %2499 = vmatpush1.bf16.msra.mxu0 %v1854
    %2500 = vmatprep.mubr.bf16.mxu0 %v1004
    %2501 = vmatmul.mubr.bf16.gmra.mrb[0].mxu0 %v990
    %v2502 = vpop.f32.mrb[0].mxu0
    %v2503 = vadd.f32 %v960, %v2502
    %v2504 = vpop.f32.mrb[0].mxu0
    %v2505 = vadd.f32 %v962, %v2504
    %v2506 = vpop.f32.mrb[0].mxu0
    %v2507 = vpop.f32.mrb[0].mxu0
    %2508 = vdwg.mxu0
    %2509 = vmatprep.subr.bf16.mxu0 %v1859
    %2510 = vmatpush1.bf16.msra.mxu0 %v1858
    %2511 = vmatprep.subr.bf16.mxu0 %v1863
    %2512 = vmatpush1.bf16.msra.mxu0 %v1862
    %2513 = vmatprep.subr.bf16.mxu0 %v1867
    %2514 = vmatpush1.bf16.msra.mxu0 %v1866
    %2515 = vmatprep.subr.bf16.mxu0 %v1871
    %2516 = vmatpush1.bf16.msra.mxu0 %v1870
    %2517 = vmatprep.subr.bf16.mxu0 %v1875
    %2518 = vmatpush1.bf16.msra.mxu0 %v1874
    %2519 = vmatprep.subr.bf16.mxu0 %v1879
    %2520 = vmatpush1.bf16.msra.mxu0 %v1878
    %2521 = vmatprep.subr.bf16.mxu0 %v1883
    %2522 = vmatpush1.bf16.msra.mxu0 %v1882
    %2523 = vmatprep.subr.bf16.mxu0 %v1887
    %2524 = vmatpush1.bf16.msra.mxu0 %v1886
    %2525 = vmatprep.subr.bf16.mxu0 %v1891
    %2526 = vmatpush1.bf16.msra.mxu0 %v1890
    %2527 = vmatprep.subr.bf16.mxu0 %v1895
    %2528 = vmatpush1.bf16.msra.mxu0 %v1894
    %2529 = vmatprep.subr.bf16.mxu0 %v1899
    %2530 = vmatpush1.bf16.msra.mxu0 %v1898
    %2531 = vmatprep.subr.bf16.mxu0 %v1903
    %2532 = vmatpush1.bf16.msra.mxu0 %v1902
    %2533 = vmatprep.subr.bf16.mxu0 %v1907
    %2534 = vmatpush1.bf16.msra.mxu0 %v1906
    %2535 = vmatprep.subr.bf16.mxu0 %v1911
    %2536 = vmatpush1.bf16.msra.mxu0 %v1910
    %2537 = vmatprep.subr.bf16.mxu0 %v1915
    %2538 = vmatpush1.bf16.msra.mxu0 %v1914
    %2539 = vmatprep.subr.bf16.mxu0 %v1919
    %2540 = vmatpush1.bf16.msra.mxu0 %v1918
    %2541 = vmatprep.mubr.bf16.mxu0 %v1014
    %2542 = vmatmul.mubr.bf16.gmra.mrb[0].mxu0 %v1012
    %v2543 = vpop.f32.mrb[0].mxu0
    %v2544 = vadd.f32 %v2503, %v2543
    %v2545 = vpop.f32.mrb[0].mxu0
    %v2546 = vadd.f32 %v2505, %v2545
    %v2547 = vpop.f32.mrb[0].mxu0
    %v2548 = vpop.f32.mrb[0].mxu0
    %2549 = vdwg.mxu0
    %2550 = vmatprep.subr.bf16.mxu0 %v1923
    %2551 = vmatpush1.bf16.msra.mxu0 %v1922
    %2552 = vmatprep.subr.bf16.mxu0 %v1927
    %2553 = vmatpush1.bf16.msra.mxu0 %v1926
    %2554 = vmatprep.subr.bf16.mxu0 %v1931
    %2555 = vmatpush1.bf16.msra.mxu0 %v1930
    %2556 = vmatprep.subr.bf16.mxu0 %v1935
    %2557 = vmatpush1.bf16.msra.mxu0 %v1934
    %2558 = vmatprep.subr.bf16.mxu0 %v1939
    %2559 = vmatpush1.bf16.msra.mxu0 %v1938
    %2560 = vmatprep.subr.bf16.mxu0 %v1943
    %2561 = vmatpush1.bf16.msra.mxu0 %v1942
    %2562 = vmatprep.subr.bf16.mxu0 %v1947
    %2563 = vmatpush1.bf16.msra.mxu0 %v1946
    %2564 = vmatprep.subr.bf16.mxu0 %v1951
    %2565 = vmatpush1.bf16.msra.mxu0 %v1950
    %2566 = vmatprep.subr.bf16.mxu0 %v1955
    %2567 = vmatpush1.bf16.msra.mxu0 %v1954
    %2568 = vmatprep.subr.bf16.mxu0 %v1959
    %2569 = vmatpush1.bf16.msra.mxu0 %v1958
    %2570 = vmatprep.subr.bf16.mxu0 %v1963
    %2571 = vmatpush1.bf16.msra.mxu0 %v1962
    %2572 = vmatprep.subr.bf16.mxu0 %v1967
    %2573 = vmatpush1.bf16.msra.mxu0 %v1966
    %2574 = vmatprep.subr.bf16.mxu0 %v1971
    %2575 = vmatpush1.bf16.msra.mxu0 %v1970
    %2576 = vmatprep.subr.bf16.mxu0 %v1975
    %2577 = vmatpush1.bf16.msra.mxu0 %v1974
    %2578 = vmatprep.subr.bf16.mxu0 %v1979
    %2579 = vmatpush1.bf16.msra.mxu0 %v1978
    %2580 = vmatprep.subr.bf16.mxu0 %v1983
    %2581 = vmatpush1.bf16.msra.mxu0 %v1982
    %2582 = vmatprep.mubr.bf16.mxu0 %v1011
    %2583 = vmatmul.mubr.bf16.gmra.mrb[0].mxu0 %v997
    %v2584 = vpop.f32.mrb[0].mxu0
    %v2585 = vadd.f32 %v2544, %v2584
    %v2586 = vpop.f32.mrb[0].mxu0
    %v2587 = vadd.f32 %v2546, %v2586
    %v2588 = vpop.f32.mrb[0].mxu0
    %v2589 = vpop.f32.mrb[0].mxu0
    %2590 = vdwg.mxu0
    %2591 = vmatprep.subr.bf16.mxu0 %v1987
    %2592 = vmatpush1.bf16.msra.mxu0 %v1986
    %2593 = vmatprep.subr.bf16.mxu0 %v1991
    %2594 = vmatpush1.bf16.msra.mxu0 %v1990
    %2595 = vmatprep.subr.bf16.mxu0 %v1995
    %2596 = vmatpush1.bf16.msra.mxu0 %v1994
    %2597 = vmatprep.subr.bf16.mxu0 %v1999
    %2598 = vmatpush1.bf16.msra.mxu0 %v1998
    %2599 = vmatprep.subr.bf16.mxu0 %v2003
    %2600 = vmatpush1.bf16.msra.mxu0 %v2002
    %2601 = vmatprep.subr.bf16.mxu0 %v2007
    %2602 = vmatpush1.bf16.msra.mxu0 %v2006
    %2603 = vmatprep.subr.bf16.mxu0 %v2011
    %2604 = vmatpush1.bf16.msra.mxu0 %v2010
    %2605 = vmatprep.subr.bf16.mxu0 %v2015
    %2606 = vmatpush1.bf16.msra.mxu0 %v2014
    %2607 = vmatprep.subr.bf16.mxu0 %v2019
    %2608 = vmatpush1.bf16.msra.mxu0 %v2018
    %2609 = vmatprep.subr.bf16.mxu0 %v2023
    %2610 = vmatpush1.bf16.msra.mxu0 %v2022
    %2611 = vmatprep.subr.bf16.mxu0 %v2027
    %2612 = vmatpush1.bf16.msra.mxu0 %v2026
    %2613 = vmatprep.subr.bf16.mxu0 %v2031
    %2614 = vmatpush1.bf16.msra.mxu0 %v2030
    %2615 = vmatprep.subr.bf16.mxu0 %v2035
    %2616 = vmatpush1.bf16.msra.mxu0 %v2034
    %2617 = vmatprep.subr.bf16.mxu0 %v2039
    %2618 = vmatpush1.bf16.msra.mxu0 %v2038
    %2619 = vmatprep.subr.bf16.mxu0 %v2043
    %2620 = vmatpush1.bf16.msra.mxu0 %v2042
    %2621 = vmatprep.subr.bf16.mxu0 %v2047
    %2622 = vmatpush1.bf16.msra.mxu0 %v2046
    %2623 = vmatprep.mubr.bf16.mxu0 %v1015
    %2624 = vmatmul.mubr.bf16.gmra.mrb[0].mxu0 %v1013
    %v2625 = vpop.f32.mrb[0].mxu0
    %v2626 = vadd.f32 %v2585, %v2625
    %v2627 = vpop.f32.mrb[0].mxu0
    %v2628 = vadd.f32 %v2587, %v2627
    %v2629 = vpop.f32.mrb[0].mxu0
    %v2630 = vpop.f32.mrb[0].mxu0
    %2631 = vdwg.mxu0
    %s2632 = scalar_lea.vmem %s7, 6
    %v2633 = vld [vmem:[%s2632] ss:$8 sm:$0xf]
    %v2635 = vlaneseq
    %v2636 = vshrl.u32 %v2635, 7
    %v2637 = vsub.s32 0, %v2636
    %v2638 = vrot.slane %v2633, %v2637
    %v2639 = vlaneseq
    %v2640 = vshrl.u32 %v2639, 7
    %v2641 = vsub.s32 1, %v2640
    %v2642 = vrot.slane %v2633, %v2641
    %v2643 = vlaneseq
    %v2644 = vshrl.u32 %v2643, 7
    %v2645 = vsub.s32 2, %v2644
    %v2646 = vrot.slane %v2633, %v2645
    %v2647 = vlaneseq
    %v2648 = vshrl.u32 %v2647, 7
    %v2649 = vsub.s32 3, %v2648
    %v2650 = vrot.slane %v2633, %v2649
    %v2655 = vadd.f32 %v2462, %v2638
    %v2656 = vadd.f32 %v2464, %v2642
    %v2657 = vadd.f32 %v2626, %v2646
    %v2658 = vadd.f32 %v2628, %v2650
    %v2659 = vmax.f32 %v2655, 0.0
    %v2660 = vmax.f32 %v2656, 0.0
    %v2661 = vmax.f32 %v2657, 0.0
    %v2662 = vmax.f32 %v2658, 0.0
    %s2663 = scalar_lea.vmem %s7, 7
    %v2664 = vld [vmem:[%s2663] ss:$8 sm:$0xf]
    %s2665 = scalar_lea.vmem %s7, 32
    %v2666 = vld [vmem:[%s2665] ss:$8 sm:$0xf]
    %v2667 = vsel %vm85, %v2659, 0.0
    %v2668 = vsel %vm85, %v2660, 0.0
    %v2669 = vadd.f32 %v2667, %v2668
    %v2670 = vsel %vm85, %v2661, 0.0
    %v2671 = vadd.f32 %v2669, %v2670
    %v2672 = vsel %vm85, %v2662, 0.0
    %v2673 = vadd.f32 %v2671, %v2672
    %2674 = vadd.xlane.f32.xlu0 %v2673
    %v2675 = vpop.xlane.xlu0 %2674
    %v2676 = vrcp.pop 512.0
    %v2677 = vmul.f32 %v2675, %v2676
    %v2678 = vsub.f32 %v2659, %v2677
    %v2679 = vsub.f32 %v2660, %v2677
    %v2680 = vsub.f32 %v2661, %v2677
    %v2681 = vsub.f32 %v2662, %v2677
    %v2682 = vmul.f32 %v2678, %v2678
    %v2683 = vmul.f32 %v2679, %v2679
    %v2684 = vmul.f32 %v2680, %v2680
    %v2685 = vmul.f32 %v2681, %v2681
    %v2686 = vsel %vm85, %v2682, 0.0
    %v2687 = vsel %vm85, %v2683, 0.0
    %v2688 = vadd.f32 %v2686, %v2687
    %v2689 = vsel %vm85, %v2684, 0.0
    %v2690 = vadd.f32 %v2688, %v2689
    %v2691 = vsel %vm85, %v2685, 0.0
    %v2692 = vadd.f32 %v2690, %v2691
    %2693 = vadd.xlane.f32.xlu0 %v2692
    %v2694 = vpop.xlane.xlu0 %2693
    %v2695 = vmul.f32 %v2694, %v2676
    %v2696 = vadd.f32 %v2695, 1e-05
    %v2697 = vrsqrt.pop %v2696
    %v2698 = vmul.f32 %v2678, %v2697
    %v2699 = vmul.f32 %v2679, %v2697
    %v2700 = vmul.f32 %v2680, %v2697
    %v2701 = vmul.f32 %v2681, %v2697
    %v2703 = vlaneseq
    %v2704 = vshrl.u32 %v2703, 7
    %v2705 = vsub.s32 0, %v2704
    %v2706 = vrot.slane %v2664, %v2705
    %v2707 = vlaneseq
    %v2708 = vshrl.u32 %v2707, 7
    %v2709 = vsub.s32 1, %v2708
    %v2710 = vrot.slane %v2664, %v2709
    %v2711 = vlaneseq
    %v2712 = vshrl.u32 %v2711, 7
    %v2713 = vsub.s32 2, %v2712
    %v2714 = vrot.slane %v2664, %v2713
    %v2715 = vlaneseq
    %v2716 = vshrl.u32 %v2715, 7
    %v2717 = vsub.s32 3, %v2716
    %v2718 = vrot.slane %v2664, %v2717
    %v2723 = vmul.f32 %v2698, %v2706
    %v2724 = vmul.f32 %v2699, %v2710
    %v2725 = vmul.f32 %v2700, %v2714
    %v2726 = vmul.f32 %v2701, %v2718
    %v2728 = vlaneseq
    %v2729 = vshrl.u32 %v2728, 7
    %v2730 = vsub.s32 0, %v2729
    %v2731 = vrot.slane %v2666, %v2730
    %v2732 = vlaneseq
    %v2733 = vshrl.u32 %v2732, 7
    %v2734 = vsub.s32 1, %v2733
    %v2735 = vrot.slane %v2666, %v2734
    %v2736 = vlaneseq
    %v2737 = vshrl.u32 %v2736, 7
    %v2738 = vsub.s32 2, %v2737
    %v2739 = vrot.slane %v2666, %v2738
    %v2740 = vlaneseq
    %v2741 = vshrl.u32 %v2740, 7
    %v2742 = vsub.s32 3, %v2741
    %v2743 = vrot.slane %v2666, %v2742
    %v2748 = vadd.f32 %v2723, %v2731
    %v2749 = vadd.f32 %v2724, %v2735
    %v2750 = vadd.f32 %v2725, %v2739
    %v2751 = vadd.f32 %v2726, %v2743
    %v2752 = vmax.f32 %v2748, 0.0
    %v2753 = vmax.f32 %v2749, 0.0
    %v2754 = vmax.f32 %v2750, 0.0
    %v2755 = vmax.f32 %v2751, 0.0
    %v2756 = vpack.c.bf16 %v2752, %v2752
    %v2757 = vpack.c.bf16 %v2753, %v2753
    %v2758 = vpack.c.bf16 %v2754, %v2754
    %v2759 = vpack.c.bf16 %v2755, %v2755
    %v2760 = vld [vmem:[%s6] sm:$0xf]
    %v2761 = vld [vmem:[%s6 + $0x4] sm:$0xf]
    %v2762 = vld [vmem:[%s6 + $0x8] sm:$0xf]
    %v2763 = vld [vmem:[%s6 + $0xc] sm:$0xf]
    %v2764 = vld [vmem:[%s6 + $0x10] sm:$0xf]
    %v2765 = vld [vmem:[%s6 + $0x14] sm:$0xf]
    %v2766 = vld [vmem:[%s6 + $0x18] sm:$0xf]
    %v2767 = vld [vmem:[%s6 + $0x1c] sm:$0xf]
    %v2768 = vld [vmem:[%s6 + $0x20] sm:$0xf]
    %v2769 = vld [vmem:[%s6 + $0x24] sm:$0xf]
    %v2770 = vld [vmem:[%s6 + $0x28] sm:$0xf]
    %v2771 = vld [vmem:[%s6 + $0x2c] sm:$0xf]
    %v2772 = vld [vmem:[%s6 + $0x30] sm:$0xf]
    %v2773 = vld [vmem:[%s6 + $0x34] sm:$0xf]
    %v2774 = vld [vmem:[%s6 + $0x38] sm:$0xf]
    %v2775 = vld [vmem:[%s6 + $0x3c] sm:$0xf]
    %v2776 = vld [vmem:[%s6 + $0x40] sm:$0xf]
    %v2777 = vld [vmem:[%s6 + $0x44] sm:$0xf]
    %v2778 = vld [vmem:[%s6 + $0x48] sm:$0xf]
    %v2779 = vld [vmem:[%s6 + $0x4c] sm:$0xf]
    %v2780 = vld [vmem:[%s6 + $0x50] sm:$0xf]
    %v2781 = vld [vmem:[%s6 + $0x54] sm:$0xf]
    %v2782 = vld [vmem:[%s6 + $0x58] sm:$0xf]
    %v2783 = vld [vmem:[%s6 + $0x5c] sm:$0xf]
    %v2784 = vld [vmem:[%s6 + $0x60] sm:$0xf]
    %v2785 = vld [vmem:[%s6 + $0x64] sm:$0xf]
    %v2786 = vld [vmem:[%s6 + $0x68] sm:$0xf]
    %v2787 = vld [vmem:[%s6 + $0x6c] sm:$0xf]
    %v2788 = vld [vmem:[%s6 + $0x70] sm:$0xf]
    %v2789 = vld [vmem:[%s6 + $0x74] sm:$0xf]
    %v2790 = vld [vmem:[%s6 + $0x78] sm:$0xf]
    %v2791 = vld [vmem:[%s6 + $0x7c] sm:$0xf]
    %v2792 = vld [vmem:[%s6 + $0x80] sm:$0xf]
    %v2793 = vld [vmem:[%s6 + $0x84] sm:$0xf]
    %v2794 = vld [vmem:[%s6 + $0x88] sm:$0xf]
    %v2795 = vld [vmem:[%s6 + $0x8c] sm:$0xf]
    %v2796 = vld [vmem:[%s6 + $0x90] sm:$0xf]
    %v2797 = vld [vmem:[%s6 + $0x94] sm:$0xf]
    %v2798 = vld [vmem:[%s6 + $0x98] sm:$0xf]
    %v2799 = vld [vmem:[%s6 + $0x9c] sm:$0xf]
    %v2800 = vld [vmem:[%s6 + $0xa0] sm:$0xf]
    %v2801 = vld [vmem:[%s6 + $0xa4] sm:$0xf]
    %v2802 = vld [vmem:[%s6 + $0xa8] sm:$0xf]
    %v2803 = vld [vmem:[%s6 + $0xac] sm:$0xf]
    %v2804 = vld [vmem:[%s6 + $0xb0] sm:$0xf]
    %v2805 = vld [vmem:[%s6 + $0xb4] sm:$0xf]
    %v2806 = vld [vmem:[%s6 + $0xb8] sm:$0xf]
    %v2807 = vld [vmem:[%s6 + $0xbc] sm:$0xf]
    %v2808 = vld [vmem:[%s6 + $0xc0] sm:$0xf]
    %v2809 = vld [vmem:[%s6 + $0xc4] sm:$0xf]
    %v2810 = vld [vmem:[%s6 + $0xc8] sm:$0xf]
    %v2811 = vld [vmem:[%s6 + $0xcc] sm:$0xf]
    %v2812 = vld [vmem:[%s6 + $0xd0] sm:$0xf]
    %v2813 = vld [vmem:[%s6 + $0xd4] sm:$0xf]
    %v2814 = vld [vmem:[%s6 + $0xd8] sm:$0xf]
    %v2815 = vld [vmem:[%s6 + $0xdc] sm:$0xf]
    %v2816 = vld [vmem:[%s6 + $0xe0] sm:$0xf]
    %v2817 = vld [vmem:[%s6 + $0xe4] sm:$0xf]
    %v2818 = vld [vmem:[%s6 + $0xe8] sm:$0xf]
    %v2819 = vld [vmem:[%s6 + $0xec] sm:$0xf]
    %v2820 = vld [vmem:[%s6 + $0xf0] sm:$0xf]
    %v2821 = vld [vmem:[%s6 + $0xf4] sm:$0xf]
    %v2822 = vld [vmem:[%s6 + $0xf8] sm:$0xf]
    %v2823 = vld [vmem:[%s6 + $0xfc] sm:$0xf]
    %v2824 = vld [vmem:[%s7 + $0x21] ss:$0 sm:$0xff]
    %v2889 = vunpack.c.l.b16 %v2760
    %v2890 = vunpack.c.l.b16 %v2761
    %v2891 = vunpack.c.l.b16 %v2762
    %v2892 = vunpack.c.l.b16 %v2763
    %v2893 = vunpack.c.l.b16 %v2764
    %v2894 = vunpack.c.l.b16 %v2765
    %v2895 = vunpack.c.l.b16 %v2766
    %v2896 = vunpack.c.l.b16 %v2767
    %v2897 = vunpack.c.l.b16 %v2768
    %v2898 = vunpack.c.l.b16 %v2769
    %v2899 = vunpack.c.l.b16 %v2770
    %v2900 = vunpack.c.l.b16 %v2771
    %v2901 = vunpack.c.l.b16 %v2772
    %v2902 = vunpack.c.l.b16 %v2773
    %v2903 = vunpack.c.l.b16 %v2774
    %v2904 = vunpack.c.l.b16 %v2775
    %v2905 = vunpack.c.l.b16 %v2776
    %v2906 = vunpack.c.l.b16 %v2777
    %v2907 = vunpack.c.l.b16 %v2778
    %v2908 = vunpack.c.l.b16 %v2779
    %v2909 = vunpack.c.l.b16 %v2780
    %v2910 = vunpack.c.l.b16 %v2781
    %v2911 = vunpack.c.l.b16 %v2782
    %v2912 = vunpack.c.l.b16 %v2783
    %v2913 = vunpack.c.l.b16 %v2784
    %v2914 = vunpack.c.l.b16 %v2785
    %v2915 = vunpack.c.l.b16 %v2786
    %v2916 = vunpack.c.l.b16 %v2787
    %v2917 = vunpack.c.l.b16 %v2788
    %v2918 = vunpack.c.l.b16 %v2789
    %v2919 = vunpack.c.l.b16 %v2790
    %v2920 = vunpack.c.l.b16 %v2791
    %v2921 = vunpack.c.l.b16 %v2792
    %v2922 = vunpack.c.l.b16 %v2793
    %v2923 = vunpack.c.l.b16 %v2794
    %v2924 = vunpack.c.l.b16 %v2795
    %v2925 = vunpack.c.l.b16 %v2796
    %v2926 = vunpack.c.l.b16 %v2797
    %v2927 = vunpack.c.l.b16 %v2798
    %v2928 = vunpack.c.l.b16 %v2799
    %v2929 = vunpack.c.l.b16 %v2800
    %v2930 = vunpack.c.l.b16 %v2801
    %v2931 = vunpack.c.l.b16 %v2802
    %v2932 = vunpack.c.l.b16 %v2803
    %v2933 = vunpack.c.l.b16 %v2804
    %v2934 = vunpack.c.l.b16 %v2805
    %v2935 = vunpack.c.l.b16 %v2806
    %v2936 = vunpack.c.l.b16 %v2807
    %v2937 = vunpack.c.l.b16 %v2808
    %v2938 = vunpack.c.l.b16 %v2809
    %v2939 = vunpack.c.l.b16 %v2810
    %v2940 = vunpack.c.l.b16 %v2811
    %v2941 = vunpack.c.l.b16 %v2812
    %v2942 = vunpack.c.l.b16 %v2813
    %v2943 = vunpack.c.l.b16 %v2814
    %v2944 = vunpack.c.l.b16 %v2815
    %v2945 = vunpack.c.l.b16 %v2816
    %v2946 = vunpack.c.l.b16 %v2817
    %v2947 = vunpack.c.l.b16 %v2818
    %v2948 = vunpack.c.l.b16 %v2819
    %v2949 = vunpack.c.l.b16 %v2820
    %v2950 = vunpack.c.l.b16 %v2821
    %v2951 = vunpack.c.l.b16 %v2822
    %v2952 = vunpack.c.l.b16 %v2823
    %v2953 = vpack.c.b16 %v2890, %v2889
    %v2954 = vpack.c.b16 %v2892, %v2891
    %v2955 = vpack.c.b16 %v2894, %v2893
    %v2956 = vpack.c.b16 %v2896, %v2895
    %v2957 = vpack.c.b16 %v2898, %v2897
    %v2958 = vpack.c.b16 %v2900, %v2899
    %v2959 = vpack.c.b16 %v2902, %v2901
    %v2960 = vpack.c.b16 %v2904, %v2903
    %v2961 = vpack.c.b16 %v2906, %v2905
    %v2962 = vpack.c.b16 %v2908, %v2907
    %v2963 = vpack.c.b16 %v2910, %v2909
    %v2964 = vpack.c.b16 %v2912, %v2911
    %v2965 = vpack.c.b16 %v2914, %v2913
    %v2966 = vpack.c.b16 %v2916, %v2915
    %v2967 = vpack.c.b16 %v2918, %v2917
    %v2968 = vpack.c.b16 %v2920, %v2919
    %v2969 = vpack.c.b16 %v2922, %v2921
    %v2970 = vpack.c.b16 %v2924, %v2923
    %v2971 = vpack.c.b16 %v2926, %v2925
    %v2972 = vpack.c.b16 %v2928, %v2927
    %v2973 = vpack.c.b16 %v2930, %v2929
    %v2974 = vpack.c.b16 %v2932, %v2931
    %v2975 = vpack.c.b16 %v2934, %v2933
    %v2976 = vpack.c.b16 %v2936, %v2935
    %v2977 = vpack.c.b16 %v2938, %v2937
    %v2978 = vpack.c.b16 %v2940, %v2939
    %v2979 = vpack.c.b16 %v2942, %v2941
    %v2980 = vpack.c.b16 %v2944, %v2943
    %v2981 = vpack.c.b16 %v2946, %v2945
    %v2982 = vpack.c.b16 %v2948, %v2947
    %v2983 = vpack.c.b16 %v2950, %v2949
    %v2984 = vpack.c.b16 %v2952, %v2951
    %3017 = vmatprep.subr.bf16.mxu0 0
    %3018 = vmatpush1.bf16.msra.mxu0 %v2953
    %3019 = vmatprep.subr.bf16.mxu0 0
    %3020 = vmatpush1.bf16.msra.mxu0 %v2954
    %3021 = vmatprep.subr.bf16.mxu0 0
    %3022 = vmatpush1.bf16.msra.mxu0 %v2955
    %3023 = vmatprep.subr.bf16.mxu0 0
    %3024 = vmatpush1.bf16.msra.mxu0 %v2956
    %3025 = vmatprep.subr.bf16.mxu0 0
    %3026 = vmatpush1.bf16.msra.mxu0 %v2957
    %3027 = vmatprep.subr.bf16.mxu0 0
    %3028 = vmatpush1.bf16.msra.mxu0 %v2958
    %3029 = vmatprep.subr.bf16.mxu0 0
    %3030 = vmatpush1.bf16.msra.mxu0 %v2959
    %3031 = vmatprep.subr.bf16.mxu0 0
    %3032 = vmatpush1.bf16.msra.mxu0 %v2960
    %3033 = vmatprep.subr.bf16.mxu0 0
    %3034 = vmatpush1.bf16.msra.mxu0 %v2961
    %3035 = vmatprep.subr.bf16.mxu0 0
    %3036 = vmatpush1.bf16.msra.mxu0 %v2962
    %3037 = vmatprep.subr.bf16.mxu0 0
    %3038 = vmatpush1.bf16.msra.mxu0 %v2963
    %3039 = vmatprep.subr.bf16.mxu0 0
    %3040 = vmatpush1.bf16.msra.mxu0 %v2964
    %3041 = vmatprep.subr.bf16.mxu0 0
    %3042 = vmatpush1.bf16.msra.mxu0 %v2965
    %3043 = vmatprep.subr.bf16.mxu0 0
    %3044 = vmatpush1.bf16.msra.mxu0 %v2966
    %3045 = vmatprep.subr.bf16.mxu0 0
    %3046 = vmatpush1.bf16.msra.mxu0 %v2967
    %3047 = vmatprep.subr.bf16.mxu0 0
    %3048 = vmatpush1.bf16.msra.mxu0 %v2968
    %3049 = vmatprep.mubr.bf16.mxu0 %v2757
    %3050 = vmatmul.mubr.bf16.gmra.mrb[0].mxu0 %v2756
    %v3051 = vpop.f32.mrb[0].mxu0
    %v3052 = vadd.f32 %v2824, %v3051
    %v3053 = vpop.f32.mrb[0].mxu0
    %v3054 = vpop.f32.mrb[0].mxu0
    %v3055 = vpop.f32.mrb[0].mxu0
    %3056 = vdwg.mxu0
    %3057 = vmatprep.subr.bf16.mxu0 0
    %3058 = vmatpush1.bf16.msra.mxu0 %v2969
    %3059 = vmatprep.subr.bf16.mxu0 0
    %3060 = vmatpush1.bf16.msra.mxu0 %v2970
    %3061 = vmatprep.subr.bf16.mxu0 0
    %3062 = vmatpush1.bf16.msra.mxu0 %v2971
    %3063 = vmatprep.subr.bf16.mxu0 0
    %3064 = vmatpush1.bf16.msra.mxu0 %v2972
    %3065 = vmatprep.subr.bf16.mxu0 0
    %3066 = vmatpush1.bf16.msra.mxu0 %v2973
    %3067 = vmatprep.subr.bf16.mxu0 0
    %3068 = vmatpush1.bf16.msra.mxu0 %v2974
    %3069 = vmatprep.subr.bf16.mxu0 0
    %3070 = vmatpush1.bf16.msra.mxu0 %v2975
    %3071 = vmatprep.subr.bf16.mxu0 0
    %3072 = vmatpush1.bf16.msra.mxu0 %v2976
    %3073 = vmatprep.subr.bf16.mxu0 0
    %3074 = vmatpush1.bf16.msra.mxu0 %v2977
    %3075 = vmatprep.subr.bf16.mxu0 0
    %3076 = vmatpush1.bf16.msra.mxu0 %v2978
    %3077 = vmatprep.subr.bf16.mxu0 0
    %3078 = vmatpush1.bf16.msra.mxu0 %v2979
    %3079 = vmatprep.subr.bf16.mxu0 0
    %3080 = vmatpush1.bf16.msra.mxu0 %v2980
    %3081 = vmatprep.subr.bf16.mxu0 0
    %3082 = vmatpush1.bf16.msra.mxu0 %v2981
    %3083 = vmatprep.subr.bf16.mxu0 0
    %3084 = vmatpush1.bf16.msra.mxu0 %v2982
    %3085 = vmatprep.subr.bf16.mxu0 0
    %3086 = vmatpush1.bf16.msra.mxu0 %v2983
    %3087 = vmatprep.subr.bf16.mxu0 0
    %3088 = vmatpush1.bf16.msra.mxu0 %v2984
    %3089 = vmatprep.mubr.bf16.mxu0 %v2759
    %3090 = vmatmul.mubr.bf16.gmra.mrb[0].mxu0 %v2758
    %v3091 = vpop.f32.mrb[0].mxu0
    %v3092 = vadd.f32 %v3052, %v3091
    %v3093 = vpop.f32.mrb[0].mxu0
    %v3094 = vpop.f32.mrb[0].mxu0
    %v3095 = vpop.f32.mrb[0].mxu0
    %3096 = vdwg.mxu0
    %v3097 = vlaneseq
    %v3098 = vand.u32 %v3097, 127
    %vm3099 = vcmp.lt.s32.totalorder %v3098, 52
    %v3100 = vsel %vm3099, %v3092, 0.0
    %v3101 = vsel %vm85, %v3100, 0.0
    %3102 = vadd.xlane.f32.xlu0 %v3101
    %v3103 = vpop.xlane.xlu0 %3102
    %v3104 = vrcp.pop 52.0
    %v3105 = vmul.f32 %v3103, %v3104
    %v3106 = vsub.f32 %v3092, %v3105
    %v3107 = vsel %vm3099, %v3106, 0.0
    %v3108 = vmul.f32 %v3107, %v3107
    %v3109 = vsel %vm85, %v3108, 0.0
    %3110 = vadd.xlane.f32.xlu0 %v3109
    %v3111 = vpop.xlane.xlu0 %3110
    %v3112 = vmul.f32 %v3111, %v3104
    %v3113 = vadd.f32 %v3112, 1e-05
    %v3114 = vrsqrt.pop %v3113
    %v3115 = vmul.f32 %v3106, %v3114
    %v3116 = vld [vmem:[%s7 + $0x22] ss:$0 sm:$0xff]
    %v3117 = vmul.f32 %v3115, %v3116
    %v3118 = vld [vmem:[%s7 + $0x23] ss:$0 sm:$0xff]
    %v3119 = vadd.f32 %v3117, %v3118
    %v3120 = vtanh.pop %v3119
    %3121 = vst [vmem:[#allocation2] sm:$0x3] %v3120
    // Predicated region
    $region34: #{actor_multimodal_forward.3} parent=1 // pred_check
      _
    $region35: #{actor_multimodal_forward.3} parent=1 // pred_check_branch
      %3123 = sbr.rel (0) target = $region37
    $region36: #{actor_multimodal_forward.3} parent=1 // pred_region
      %s3125 = ssub.s32 32, 32
      %3126 = vsyncadd [#allocation3], %s3125
      %s3128 = sshll.u32 [#allocation2], 4
      %s3129 = int_to_ptr.vmem [resolvable:$true] %s3128
      %3131 = dma.vmem_to_hbm [thread:$0]  %s3129, 32, %s8, [#allocation3]
    $region37: #{actor_multimodal_forward.3} parent=1 // pred_fallthru
      _
    // Predicated region
    $region38: #{actor_multimodal_forward.3} parent=1 // pred_check
      _
    $region39: #{actor_multimodal_forward.3} parent=1 // pred_check_branch
      %3133 = sbr.rel (0) target = $region41
    $region40: #{actor_multimodal_forward.3} parent=1 // pred_region
      %3134 = dma.done [#allocation3], 32
    $region41: #{actor_multimodal_forward.3} parent=1 // pred_fallthru
      _
    %3135 = vsyncpa [#allocation3], 1

</llo_original>
